<compile_context>
chip_gen: v7x
topology: tpu7x:2x2x1
jax: 0.10.0
libtpu: 0.0.40
codegen_flags: <defaults>
</compile_context>

<pallas_src>
import math

import jax
import jax.numpy as jnp
from jax.experimental import pallas as pl
from jax.experimental.pallas import tpu as pltpu

B, S, D = 2, 16, 32           # batch, sequence length, d_model
NUM_HEADS = 4
HEAD_DIM = D // NUM_HEADS
DFF = 64                      # dim_feedforward
NUM_LAYERS = 2
EPS = 1e-5                    # nn.LayerNorm default
N_TOK = B * S                 # tokens per call (kernel works in (N_TOK, D))

# Packed-parameter layout -----------------------------------------------------
# Weight slab  (per layer): (D, 5*D + ... ) columns =
#   [0:2D]   Wq^T*scale | Wk^T      (fused q/k projection)
#   [2D:3D]  Wv^T
#   [3D:4D]  Wo^T  (out_proj)
#   [4D:4D+DFF] W1^T (linear1)
W_SLAB_COLS = 4 * D + DFF                       # 192
# linear2 slab (per layer): W2^T -> (DFF, D)
# vector slab  (per layer): (9, 64) rows:
_R_BQK, _R_BV, _R_BO, _R_B1, _R_B2, _R_G1, _R_BE1, _R_G2, _R_BE2 = range(9)
N_VEC_ROWS = 9
VEC_W = max(2 * D, DFF)                         # 64


# ----------------------------- kernel helpers -------------------------------
def _layer_norm(x, g, b):
    """x: (N, D), g/b: (1, D)."""
    mu = jnp.mean(x, axis=-1, keepdims=True)
    var = jnp.mean((x - mu) ** 2, axis=-1, keepdims=True)
    return (x - mu) * jax.lax.rsqrt(var + EPS) * g + b


def _split_heads(t2d):
    """(B*S, D) -> (H*B, S, HEAD_DIM), head-major then batch."""
    t3 = t2d.reshape(B, S, D)
    parts = [t3[:, :, h * HEAD_DIM:(h + 1) * HEAD_DIM] for h in range(NUM_HEADS)]
    return jnp.concatenate(parts, axis=0)


def _merge_heads(a3):
    """(H*B, S, HEAD_DIM) -> (B*S, D)."""
    parts = [a3[h * B:(h + 1) * B] for h in range(NUM_HEADS)]   # each (B, S, Hd)
    return jnp.concatenate(parts, axis=-1).reshape(N_TOK, D)


# --------------------------- fused encoder kernel ----------------------------
def encoder_kernel(src_ref, pos_ref, w_ref, w2_ref, vec_ref, out_ref):
    x = src_ref[...]                    # (N_TOK, D)
    pos = pos_ref[...]                  # (N_TOK, D)

    # Static layer loop: activations stay resident in VMEM / vregs.
    for l in range(NUM_LAYERS):
        w = w_ref[l]                    # (D, W_SLAB_COLS)
        w2 = w2_ref[l]                  # (DFF, D)
        vec = vec_ref[l]                # (N_VEC_ROWS, VEC_W)

        # ---------------- self-attention ----------------
        qk_in = x + pos                 # with_pos_embed
        # fused q|k projection (scale folded into Wq / bq columns)
        qk = jnp.dot(qk_in, w[:, 0:2 * D],
                     preferred_element_type=jnp.float32) + vec[_R_BQK:_R_BQK + 1, :]
        v = jnp.dot(x, w[:, 2 * D:3 * D],
                    preferred_element_type=jnp.float32) + vec[_R_BV:_R_BV + 1, 0:D]

        q3 = _split_heads(qk[:, 0:D])           # (H*B, S, Hd)
        k3 = _split_heads(qk[:, D:2 * D])
        v3 = _split_heads(v)

        # single batched contraction over all (head, batch) pairs
        s = jnp.einsum('nqd,nkd->nqk', q3, k3,
                       preferred_element_type=jnp.float32)       # (H*B, S, S)
        s = s - jnp.max(s, axis=-1, keepdims=True)
        p = jnp.exp(s)
        p = p * pl.reciprocal(jnp.sum(p, axis=-1, keepdims=True), approx=True)
        a3 = jnp.einsum('nqk,nkd->nqd', p, v3,
                        preferred_element_type=jnp.float32)      # (H*B, S, Hd)

        attn = jnp.dot(_merge_heads(a3), w[:, 3 * D:4 * D],
                       preferred_element_type=jnp.float32) + vec[_R_BO:_R_BO + 1, 0:D]

        # TODO(synk): dropout layers are identity (inference / eval mode).
        x = _layer_norm(x + attn,
                        vec[_R_G1:_R_G1 + 1, 0:D], vec[_R_BE1:_R_BE1 + 1, 0:D])

        # ---------------- feed-forward ----------------
        h = jnp.dot(x, w[:, 4 * D:4 * D + DFF],
                    preferred_element_type=jnp.float32) + vec[_R_B1:_R_B1 + 1, :]
        h = jnp.maximum(h, 0.0)                                  # ReLU
        h = jnp.dot(h, w2, preferred_element_type=jnp.float32) + vec[_R_B2:_R_B2 + 1, 0:D]

        x = _layer_norm(x + h,
                        vec[_R_G2:_R_G2 + 1, 0:D], vec[_R_BE2:_R_BE2 + 1, 0:D])

    out_ref[...] = x


# ------------------------------ pallas wrapper -------------------------------
def _full_spec(shape):
    n = len(shape)
    return pl.BlockSpec(shape, lambda i, _n=n: (0,) * _n)


@jax.jit
def transformer_encoder(src, pos, w_all, w2_all, vec_all):
    """src, pos: (S, B, D) seq-first, matching the PyTorch module."""
    x2 = jnp.transpose(src, (1, 0, 2)).reshape(N_TOK, D)   # token-major (free in HBM)
    p2 = jnp.transpose(pos, (1, 0, 2)).reshape(N_TOK, D)
    operands = (x2, p2, w_all, w2_all, vec_all)
    out2 = pl.pallas_call(
        encoder_kernel,
        out_shape=jax.ShapeDtypeStruct((N_TOK, D), jnp.float32),
        grid=(1,),
        in_specs=[_full_spec(o.shape) for o in operands],
        out_specs=_full_spec((N_TOK, D)),
        compiler_params=pltpu.CompilerParams(
            dimension_semantics=("arbitrary",)),
    )(*operands)
    # self.norm is None in this configuration (post-norm encoder).
    return jnp.transpose(out2.reshape(B, S, D), (1, 0, 2))


# ----------------------------- parameter handling ----------------------------
def init_layer_params(key):
    """PyTorch-layout parameters of one TransformerEncoderLayer."""
    ks = jax.random.split(key, 8)

    def w(k, shape, scale=0.02):
        return scale * jax.random.normal(k, shape, jnp.float32)

    in_proj_w = w(ks[0], (3 * D, D))        # MultiheadAttention in_proj_weight
    in_proj_b = w(ks[1], (3 * D,))          # in_proj_bias
    return dict(
        wq=in_proj_w[0:D], wk=in_proj_w[D:2 * D], wv=in_proj_w[2 * D:3 * D],
        bq=in_proj_b[0:D], bk=in_proj_b[D:2 * D], bv=in_proj_b[2 * D:3 * D],
        wo=w(ks[2], (D, D)), bo=w(ks[3], (D,)),              # out_proj
        w1=w(ks[4], (DFF, D)), b1=w(ks[5], (DFF,)),          # linear1
        w2=w(ks[6], (D, DFF)), b2=w(ks[7], (D,)),            # linear2
        g1=jnp.ones((D,), jnp.float32), be1=jnp.zeros((D,), jnp.float32),
        g2=jnp.ones((D,), jnp.float32), be2=jnp.zeros((D,), jnp.float32),
    )


def pack_params(layer_params):
    """Pack per-layer PyTorch params into 3 stacked slabs for the kernel."""
    scale = 1.0 / math.sqrt(HEAD_DIM)
    w_slabs, w2_slabs, vec_slabs = [], [], []
    for p in layer_params:
        w_slab = jnp.concatenate(
            [(p['wq'] * scale).T, p['wk'].T, p['wv'].T, p['wo'].T, p['w1'].T],
            axis=1)                                          # (D, W_SLAB_COLS)
        vec = jnp.zeros((N_VEC_ROWS, VEC_W), jnp.float32)
        vec = vec.at[_R_BQK, 0:D].set(p['bq'] * scale)       # scale folded into bq
        vec = vec.at[_R_BQK, D:2 * D].set(p['bk'])
        vec = vec.at[_R_BV, 0:D].set(p['bv'])
        vec = vec.at[_R_BO, 0:D].set(p['bo'])
        vec = vec.at[_R_B1, 0:DFF].set(p['b1'])
        vec = vec.at[_R_B2, 0:D].set(p['b2'])
        vec = vec.at[_R_G1, 0:D].set(p['g1'])
        vec = vec.at[_R_BE1, 0:D].set(p['be1'])
        vec = vec.at[_R_G2, 0:D].set(p['g2'])
        vec = vec.at[_R_BE2, 0:D].set(p['be2'])
        w_slabs.append(w_slab)
        w2_slabs.append(p['w2'].T)                           # (DFF, D)
        vec_slabs.append(vec)
    return (jnp.stack(w_slabs, 0),       # (L, D, W_SLAB_COLS)
            jnp.stack(w2_slabs, 0),      # (L, DFF, D)
            jnp.stack(vec_slabs, 0))     # (L, N_VEC_ROWS, VEC_W)


if __name__ == "__main__":
    root = jax.random.PRNGKey(0)
    k_src, k_pos, k_par = jax.random.split(root, 3)
    src = jax.random.normal(k_src, (S, B, D), jnp.float32)
    pos = jax.random.normal(k_pos, (S, B, D), jnp.float32)
    layer_keys = jax.random.split(k_par, NUM_LAYERS)
    layer_params = [init_layer_params(k) for k in layer_keys]
    w_all, w2_all, vec_all = pack_params(layer_params)

    out = transformer_encoder(src, pos, w_all, w2_all, vec_all)
    jax.block_until_ready(out)
    assert out.shape == (S, B, D) and out.dtype == jnp.float32
    print("KERNEL_OK")
</pallas_src>

<mosaic_0001>
module attributes {stable_mosaic.version = 11 : i64} {
  func.func @encoder_kernel(%arg0: i32, %arg1: memref<32x32xf32, #tpu.memory_space<vmem>>, %arg2: memref<32x32xf32, #tpu.memory_space<vmem>>, %arg3: memref<2x32x192xf32, #tpu.memory_space<vmem>>, %arg4: memref<2x64x32xf32, #tpu.memory_space<vmem>>, %arg5: memref<2x9x64xf32, #tpu.memory_space<vmem>>, %arg6: memref<32x32xf32, #tpu.memory_space<vmem>>) attributes {dimension_semantics = [#tpu.dimension_semantics<arbitrary>], iteration_bounds = array<i64: 1>, scalar_prefetch = 0 : i64, scratch_operands = 0 : i64, tpu.core_type = #tpu.core_type<tc>, window_params = [{pipeline_mode = #tpu.pipeline_mode<synchronous>, transform_indices = @transform_0, window_bounds = array<i64: 32, 32>}, {pipeline_mode = #tpu.pipeline_mode<synchronous>, transform_indices = @transform_1, window_bounds = array<i64: 32, 32>}, {pipeline_mode = #tpu.pipeline_mode<synchronous>, transform_indices = @transform_2, window_bounds = array<i64: 2, 32, 192>}, {pipeline_mode = #tpu.pipeline_mode<synchronous>, transform_indices = @transform_3, window_bounds = array<i64: 2, 64, 32>}, {pipeline_mode = #tpu.pipeline_mode<synchronous>, transform_indices = @transform_4, window_bounds = array<i64: 2, 9, 64>}, {pipeline_mode = #tpu.pipeline_mode<synchronous>, transform_indices = @transform_5, window_bounds = array<i64: 32, 32>}]} {
    %c0 = arith.constant 0 : index
    %c0_0 = arith.constant 0 : index
    %0 = vector.load %arg1[%c0, %c0_0] : memref<32x32xf32, #tpu.memory_space<vmem>>, vector<32x32xf32>
    %c0_1 = arith.constant 0 : index
    %c0_2 = arith.constant 0 : index
    %1 = vector.load %arg2[%c0_1, %c0_2] : memref<32x32xf32, #tpu.memory_space<vmem>>, vector<32x32xf32>
    %c0_3 = arith.constant 0 : index
    %c0_4 = arith.constant 0 : index
    %c0_5 = arith.constant 0 : index
    %2 = vector.load %arg3[%c0_3, %c0_4, %c0_5] : memref<2x32x192xf32, #tpu.memory_space<vmem>>, vector<1x32x192xf32>
    %3 = vector.shape_cast %2 : vector<1x32x192xf32> to vector<32x192xf32>
    %c0_6 = arith.constant 0 : index
    %c0_7 = arith.constant 0 : index
    %c0_8 = arith.constant 0 : index
    %4 = vector.load %arg4[%c0_6, %c0_7, %c0_8] : memref<2x64x32xf32, #tpu.memory_space<vmem>>, vector<1x64x32xf32>
    %5 = vector.shape_cast %4 : vector<1x64x32xf32> to vector<64x32xf32>
    %c0_9 = arith.constant 0 : index
    %c0_10 = arith.constant 0 : index
    %c0_11 = arith.constant 0 : index
    %6 = vector.load %arg5[%c0_9, %c0_10, %c0_11] : memref<2x9x64xf32, #tpu.memory_space<vmem>>, vector<1x9x64xf32>
    %7 = vector.shape_cast %6 : vector<1x9x64xf32> to vector<9x64xf32>
    %8 = arith.addf %0, %1 : vector<32x32xf32>
    %9 = vector.extract_strided_slice %3 {offsets = [0, 0], sizes = [32, 64], strides = [1, 1]} : vector<32x192xf32> to vector<32x64xf32>
    %cst = arith.constant dense<0.000000e+00> : vector<32x64xf32>
    %10 = tpu.matmul %8, %9, %cst {dimension_numbers = #tpu.dot_dimension_numbers<[1], [0], [0], [1], [0, 0, 1, 1], [], []>} : vector<32x32xf32>, vector<32x64xf32>, vector<32x64xf32> -> vector<32x64xf32>
    %11 = vector.extract_strided_slice %7 {offsets = [0, 0], sizes = [1, 64], strides = [1, 1]} : vector<9x64xf32> to vector<1x64xf32>
    %12 = vector.broadcast %11 : vector<1x64xf32> to vector<32x64xf32>
    %13 = arith.addf %10, %12 : vector<32x64xf32>
    %14 = vector.extract_strided_slice %3 {offsets = [0, 64], sizes = [32, 32], strides = [1, 1]} : vector<32x192xf32> to vector<32x32xf32>
    %cst_12 = arith.constant dense<0.000000e+00> : vector<32x32xf32>
    %15 = tpu.matmul %0, %14, %cst_12 {dimension_numbers = #tpu.dot_dimension_numbers<[1], [0], [0], [1], [0, 0, 1, 1], [], []>} : vector<32x32xf32>, vector<32x32xf32>, vector<32x32xf32> -> vector<32x32xf32>
    %16 = vector.extract_strided_slice %7 {offsets = [1, 0], sizes = [1, 32], strides = [1, 1]} : vector<9x64xf32> to vector<1x32xf32>
    %17 = vector.broadcast %16 : vector<1x32xf32> to vector<32x32xf32>
    %18 = arith.addf %15, %17 : vector<32x32xf32>
    %19 = vector.extract_strided_slice %13 {offsets = [0, 0], sizes = [32, 32], strides = [1, 1]} : vector<32x64xf32> to vector<32x32xf32>
    %20 = vector.shape_cast %19 : vector<32x32xf32> to vector<2x16x32xf32>
    %21 = vector.extract_strided_slice %20 {offsets = [0, 0, 0], sizes = [2, 16, 8], strides = [1, 1, 1]} : vector<2x16x32xf32> to vector<2x16x8xf32>
    %22 = vector.extract_strided_slice %20 {offsets = [0, 0, 8], sizes = [2, 16, 8], strides = [1, 1, 1]} : vector<2x16x32xf32> to vector<2x16x8xf32>
    %23 = vector.extract_strided_slice %20 {offsets = [0, 0, 16], sizes = [2, 16, 8], strides = [1, 1, 1]} : vector<2x16x32xf32> to vector<2x16x8xf32>
    %24 = vector.extract_strided_slice %20 {offsets = [0, 0, 24], sizes = [2, 16, 8], strides = [1, 1, 1]} : vector<2x16x32xf32> to vector<2x16x8xf32>
    %25 = tpu.concatenate %21, %22, %23, %24 in 0 : vector<2x16x8xf32>, vector<2x16x8xf32>, vector<2x16x8xf32>, vector<2x16x8xf32> -> vector<8x16x8xf32>
    %26 = vector.extract_strided_slice %13 {offsets = [0, 32], sizes = [32, 32], strides = [1, 1]} : vector<32x64xf32> to vector<32x32xf32>
    %27 = vector.shape_cast %26 : vector<32x32xf32> to vector<2x16x32xf32>
    %28 = vector.extract_strided_slice %27 {offsets = [0, 0, 0], sizes = [2, 16, 8], strides = [1, 1, 1]} : vector<2x16x32xf32> to vector<2x16x8xf32>
    %29 = vector.extract_strided_slice %27 {offsets = [0, 0, 8], sizes = [2, 16, 8], strides = [1, 1, 1]} : vector<2x16x32xf32> to vector<2x16x8xf32>
    %30 = vector.extract_strided_slice %27 {offsets = [0, 0, 16], sizes = [2, 16, 8], strides = [1, 1, 1]} : vector<2x16x32xf32> to vector<2x16x8xf32>
    %31 = vector.extract_strided_slice %27 {offsets = [0, 0, 24], sizes = [2, 16, 8], strides = [1, 1, 1]} : vector<2x16x32xf32> to vector<2x16x8xf32>
    %32 = tpu.concatenate %28, %29, %30, %31 in 0 : vector<2x16x8xf32>, vector<2x16x8xf32>, vector<2x16x8xf32>, vector<2x16x8xf32> -> vector<8x16x8xf32>
    %33 = vector.shape_cast %18 : vector<32x32xf32> to vector<2x16x32xf32>
    %34 = vector.extract_strided_slice %33 {offsets = [0, 0, 0], sizes = [2, 16, 8], strides = [1, 1, 1]} : vector<2x16x32xf32> to vector<2x16x8xf32>
    %35 = vector.extract_strided_slice %33 {offsets = [0, 0, 8], sizes = [2, 16, 8], strides = [1, 1, 1]} : vector<2x16x32xf32> to vector<2x16x8xf32>
    %36 = vector.extract_strided_slice %33 {offsets = [0, 0, 16], sizes = [2, 16, 8], strides = [1, 1, 1]} : vector<2x16x32xf32> to vector<2x16x8xf32>
    %37 = vector.extract_strided_slice %33 {offsets = [0, 0, 24], sizes = [2, 16, 8], strides = [1, 1, 1]} : vector<2x16x32xf32> to vector<2x16x8xf32>
    %38 = tpu.concatenate %34, %35, %36, %37 in 0 : vector<2x16x8xf32>, vector<2x16x8xf32>, vector<2x16x8xf32>, vector<2x16x8xf32> -> vector<8x16x8xf32>
    "tpu.trace_start"() <{level = 10 : i32, message = "nqd,nkd->nqk"}> : () -> ()
    %cst_13 = arith.constant dense<0.000000e+00> : vector<8x16x16xf32>
    %39 = tpu.matmul %25, %32, %cst_13 {dimension_numbers = #tpu.dot_dimension_numbers<[2], [2], [1], [1], [0, 0, 0, 1, 1, 1], [0], [0]>} : vector<8x16x8xf32>, vector<8x16x8xf32>, vector<8x16x16xf32> -> vector<8x16x16xf32>
    "tpu.trace_stop"() : () -> ()
    %cst_14 = arith.constant dense<0xFF800000> : vector<8x16xf32>
    %40 = vector.multi_reduction <maximumf>, %39, %cst_14 [2] : vector<8x16x16xf32> to vector<8x16xf32>
    %41 = vector.shape_cast %40 : vector<8x16xf32> to vector<8x16x1xf32>
    %42 = vector.broadcast %41 : vector<8x16x1xf32> to vector<8x16x16xf32>
    %43 = arith.subf %39, %42 : vector<8x16x16xf32>
    %44 = math.exp %43 : vector<8x16x16xf32>
    %cst_15 = arith.constant dense<0.000000e+00> : vector<8x16xf32>
    %45 = vector.multi_reduction <add>, %44, %cst_15 [2] : vector<8x16x16xf32> to vector<8x16xf32>
    %46 = vector.shape_cast %45 : vector<8x16xf32> to vector<8x16x1xf32>
    %47 = tpu.reciprocal %46 {approx = true} : vector<8x16x1xf32> -> vector<8x16x1xf32>
    %48 = vector.broadcast %47 : vector<8x16x1xf32> to vector<8x16x16xf32>
    %49 = arith.mulf %44, %48 : vector<8x16x16xf32>
    "tpu.trace_start"() <{level = 10 : i32, message = "nqk,nkd->nqd"}> : () -> ()
    %cst_16 = arith.constant dense<0.000000e+00> : vector<8x16x8xf32>
    %50 = tpu.matmul %49, %38, %cst_16 {dimension_numbers = #tpu.dot_dimension_numbers<[2], [1], [1], [2], [0, 0, 0, 1, 1, 2], [0], [0]>} : vector<8x16x16xf32>, vector<8x16x8xf32>, vector<8x16x8xf32> -> vector<8x16x8xf32>
    "tpu.trace_stop"() : () -> ()
    %51 = vector.extract_strided_slice %50 {offsets = [0, 0, 0], sizes = [2, 16, 8], strides = [1, 1, 1]} : vector<8x16x8xf32> to vector<2x16x8xf32>
    %52 = vector.extract_strided_slice %50 {offsets = [2, 0, 0], sizes = [2, 16, 8], strides = [1, 1, 1]} : vector<8x16x8xf32> to vector<2x16x8xf32>
    %53 = vector.extract_strided_slice %50 {offsets = [4, 0, 0], sizes = [2, 16, 8], strides = [1, 1, 1]} : vector<8x16x8xf32> to vector<2x16x8xf32>
    %54 = vector.extract_strided_slice %50 {offsets = [6, 0, 0], sizes = [2, 16, 8], strides = [1, 1, 1]} : vector<8x16x8xf32> to vector<2x16x8xf32>
    %55 = tpu.concatenate %51, %52, %53, %54 in 2 : vector<2x16x8xf32>, vector<2x16x8xf32>, vector<2x16x8xf32>, vector<2x16x8xf32> -> vector<2x16x32xf32>
    %56 = vector.shape_cast %55 : vector<2x16x32xf32> to vector<32x32xf32>
    %57 = vector.extract_strided_slice %3 {offsets = [0, 96], sizes = [32, 32], strides = [1, 1]} : vector<32x192xf32> to vector<32x32xf32>
    %cst_17 = arith.constant dense<0.000000e+00> : vector<32x32xf32>
    %58 = tpu.matmul %56, %57, %cst_17 {dimension_numbers = #tpu.dot_dimension_numbers<[1], [0], [0], [1], [0, 0, 1, 1], [], []>} : vector<32x32xf32>, vector<32x32xf32>, vector<32x32xf32> -> vector<32x32xf32>
    %59 = vector.extract_strided_slice %7 {offsets = [2, 0], sizes = [1, 32], strides = [1, 1]} : vector<9x64xf32> to vector<1x32xf32>
    %60 = vector.broadcast %59 : vector<1x32xf32> to vector<32x32xf32>
    %61 = arith.addf %58, %60 : vector<32x32xf32>
    %62 = arith.addf %0, %61 : vector<32x32xf32>
    %63 = vector.extract_strided_slice %7 {offsets = [5, 0], sizes = [1, 32], strides = [1, 1]} : vector<9x64xf32> to vector<1x32xf32>
    %64 = vector.extract_strided_slice %7 {offsets = [6, 0], sizes = [1, 32], strides = [1, 1]} : vector<9x64xf32> to vector<1x32xf32>
    %cst_18 = arith.constant dense<0.000000e+00> : vector<32xf32>
    %65 = vector.multi_reduction <add>, %62, %cst_18 [1] : vector<32x32xf32> to vector<32xf32>
    %66 = vector.shape_cast %65 : vector<32xf32> to vector<32x1xf32>
    %cst_19 = arith.constant 3.200000e+01 : f32
    %67 = vector.broadcast %cst_19 : f32 to vector<32x1xf32>
    %68 = arith.divf %66, %67 : vector<32x1xf32>
    %69 = vector.broadcast %68 : vector<32x1xf32> to vector<32x32xf32>
    %70 = arith.subf %62, %69 : vector<32x32xf32>
    %71 = arith.mulf %70, %70 : vector<32x32xf32>
    %cst_20 = arith.constant dense<0.000000e+00> : vector<32xf32>
    %72 = vector.multi_reduction <add>, %71, %cst_20 [1] : vector<32x32xf32> to vector<32xf32>
    %73 = vector.shape_cast %72 : vector<32xf32> to vector<32x1xf32>
    %cst_21 = arith.constant 3.200000e+01 : f32
    %74 = vector.broadcast %cst_21 : f32 to vector<32x1xf32>
    %75 = arith.divf %73, %74 : vector<32x1xf32>
    %76 = vector.broadcast %68 : vector<32x1xf32> to vector<32x32xf32>
    %77 = arith.subf %62, %76 : vector<32x32xf32>
    %cst_22 = arith.constant 9.99999974E-6 : f32
    %78 = vector.broadcast %cst_22 : f32 to vector<32x1xf32>
    %79 = arith.addf %75, %78 : vector<32x1xf32>
    %80 = math.rsqrt %79 : vector<32x1xf32>
    %81 = vector.broadcast %80 : vector<32x1xf32> to vector<32x32xf32>
    %82 = arith.mulf %77, %81 : vector<32x32xf32>
    %83 = vector.broadcast %63 : vector<1x32xf32> to vector<32x32xf32>
    %84 = arith.mulf %82, %83 : vector<32x32xf32>
    %85 = vector.broadcast %64 : vector<1x32xf32> to vector<32x32xf32>
    %86 = arith.addf %84, %85 : vector<32x32xf32>
    %87 = vector.extract_strided_slice %3 {offsets = [0, 128], sizes = [32, 64], strides = [1, 1]} : vector<32x192xf32> to vector<32x64xf32>
    %cst_23 = arith.constant dense<0.000000e+00> : vector<32x64xf32>
    %88 = tpu.matmul %86, %87, %cst_23 {dimension_numbers = #tpu.dot_dimension_numbers<[1], [0], [0], [1], [0, 0, 1, 1], [], []>} : vector<32x32xf32>, vector<32x64xf32>, vector<32x64xf32> -> vector<32x64xf32>
    %89 = vector.extract_strided_slice %7 {offsets = [3, 0], sizes = [1, 64], strides = [1, 1]} : vector<9x64xf32> to vector<1x64xf32>
    %90 = vector.broadcast %89 : vector<1x64xf32> to vector<32x64xf32>
    %91 = arith.addf %88, %90 : vector<32x64xf32>
    %cst_24 = arith.constant 0.000000e+00 : f32
    %92 = vector.broadcast %cst_24 : f32 to vector<32x64xf32>
    %93 = arith.maximumf %91, %92 : vector<32x64xf32>
    %cst_25 = arith.constant dense<0.000000e+00> : vector<32x32xf32>
    %94 = tpu.matmul %93, %5, %cst_25 {dimension_numbers = #tpu.dot_dimension_numbers<[1], [0], [0], [1], [0, 0, 1, 1], [], []>} : vector<32x64xf32>, vector<64x32xf32>, vector<32x32xf32> -> vector<32x32xf32>
    %95 = vector.extract_strided_slice %7 {offsets = [4, 0], sizes = [1, 32], strides = [1, 1]} : vector<9x64xf32> to vector<1x32xf32>
    %96 = vector.broadcast %95 : vector<1x32xf32> to vector<32x32xf32>
    %97 = arith.addf %94, %96 : vector<32x32xf32>
    %98 = arith.addf %86, %97 : vector<32x32xf32>
    %99 = vector.extract_strided_slice %7 {offsets = [7, 0], sizes = [1, 32], strides = [1, 1]} : vector<9x64xf32> to vector<1x32xf32>
    %100 = vector.extract_strided_slice %7 {offsets = [8, 0], sizes = [1, 32], strides = [1, 1]} : vector<9x64xf32> to vector<1x32xf32>
    %cst_26 = arith.constant dense<0.000000e+00> : vector<32xf32>
    %101 = vector.multi_reduction <add>, %98, %cst_26 [1] : vector<32x32xf32> to vector<32xf32>
    %102 = vector.shape_cast %101 : vector<32xf32> to vector<32x1xf32>
    %cst_27 = arith.constant 3.200000e+01 : f32
    %103 = vector.broadcast %cst_27 : f32 to vector<32x1xf32>
    %104 = arith.divf %102, %103 : vector<32x1xf32>
    %105 = vector.broadcast %104 : vector<32x1xf32> to vector<32x32xf32>
    %106 = arith.subf %98, %105 : vector<32x32xf32>
    %107 = arith.mulf %106, %106 : vector<32x32xf32>
    %cst_28 = arith.constant dense<0.000000e+00> : vector<32xf32>
    %108 = vector.multi_reduction <add>, %107, %cst_28 [1] : vector<32x32xf32> to vector<32xf32>
    %109 = vector.shape_cast %108 : vector<32xf32> to vector<32x1xf32>
    %cst_29 = arith.constant 3.200000e+01 : f32
    %110 = vector.broadcast %cst_29 : f32 to vector<32x1xf32>
    %111 = arith.divf %109, %110 : vector<32x1xf32>
    %112 = vector.broadcast %104 : vector<32x1xf32> to vector<32x32xf32>
    %113 = arith.subf %98, %112 : vector<32x32xf32>
    %cst_30 = arith.constant 9.99999974E-6 : f32
    %114 = vector.broadcast %cst_30 : f32 to vector<32x1xf32>
    %115 = arith.addf %111, %114 : vector<32x1xf32>
    %116 = math.rsqrt %115 : vector<32x1xf32>
    %117 = vector.broadcast %116 : vector<32x1xf32> to vector<32x32xf32>
    %118 = arith.mulf %113, %117 : vector<32x32xf32>
    %119 = vector.broadcast %99 : vector<1x32xf32> to vector<32x32xf32>
    %120 = arith.mulf %118, %119 : vector<32x32xf32>
    %121 = vector.broadcast %100 : vector<1x32xf32> to vector<32x32xf32>
    %122 = arith.addf %120, %121 : vector<32x32xf32>
    %c1 = arith.constant 1 : index
    %c0_31 = arith.constant 0 : index
    %c0_32 = arith.constant 0 : index
    %123 = vector.load %arg3[%c1, %c0_31, %c0_32] : memref<2x32x192xf32, #tpu.memory_space<vmem>>, vector<1x32x192xf32>
    %124 = vector.shape_cast %123 : vector<1x32x192xf32> to vector<32x192xf32>
    %c1_33 = arith.constant 1 : index
    %c0_34 = arith.constant 0 : index
    %c0_35 = arith.constant 0 : index
    %125 = vector.load %arg4[%c1_33, %c0_34, %c0_35] : memref<2x64x32xf32, #tpu.memory_space<vmem>>, vector<1x64x32xf32>
    %126 = vector.shape_cast %125 : vector<1x64x32xf32> to vector<64x32xf32>
    %c1_36 = arith.constant 1 : index
    %c0_37 = arith.constant 0 : index
    %c0_38 = arith.constant 0 : index
    %127 = vector.load %arg5[%c1_36, %c0_37, %c0_38] : memref<2x9x64xf32, #tpu.memory_space<vmem>>, vector<1x9x64xf32>
    %128 = vector.shape_cast %127 : vector<1x9x64xf32> to vector<9x64xf32>
    %129 = arith.addf %122, %1 : vector<32x32xf32>
    %130 = vector.extract_strided_slice %124 {offsets = [0, 0], sizes = [32, 64], strides = [1, 1]} : vector<32x192xf32> to vector<32x64xf32>
    %cst_39 = arith.constant dense<0.000000e+00> : vector<32x64xf32>
    %131 = tpu.matmul %129, %130, %cst_39 {dimension_numbers = #tpu.dot_dimension_numbers<[1], [0], [0], [1], [0, 0, 1, 1], [], []>} : vector<32x32xf32>, vector<32x64xf32>, vector<32x64xf32> -> vector<32x64xf32>
    %132 = vector.extract_strided_slice %128 {offsets = [0, 0], sizes = [1, 64], strides = [1, 1]} : vector<9x64xf32> to vector<1x64xf32>
    %133 = vector.broadcast %132 : vector<1x64xf32> to vector<32x64xf32>
    %134 = arith.addf %131, %133 : vector<32x64xf32>
    %135 = vector.extract_strided_slice %124 {offsets = [0, 64], sizes = [32, 32], strides = [1, 1]} : vector<32x192xf32> to vector<32x32xf32>
    %cst_40 = arith.constant dense<0.000000e+00> : vector<32x32xf32>
    %136 = tpu.matmul %122, %135, %cst_40 {dimension_numbers = #tpu.dot_dimension_numbers<[1], [0], [0], [1], [0, 0, 1, 1], [], []>} : vector<32x32xf32>, vector<32x32xf32>, vector<32x32xf32> -> vector<32x32xf32>
    %137 = vector.extract_strided_slice %128 {offsets = [1, 0], sizes = [1, 32], strides = [1, 1]} : vector<9x64xf32> to vector<1x32xf32>
    %138 = vector.broadcast %137 : vector<1x32xf32> to vector<32x32xf32>
    %139 = arith.addf %136, %138 : vector<32x32xf32>
    %140 = vector.extract_strided_slice %134 {offsets = [0, 0], sizes = [32, 32], strides = [1, 1]} : vector<32x64xf32> to vector<32x32xf32>
    %141 = vector.shape_cast %140 : vector<32x32xf32> to vector<2x16x32xf32>
    %142 = vector.extract_strided_slice %141 {offsets = [0, 0, 0], sizes = [2, 16, 8], strides = [1, 1, 1]} : vector<2x16x32xf32> to vector<2x16x8xf32>
    %143 = vector.extract_strided_slice %141 {offsets = [0, 0, 8], sizes = [2, 16, 8], strides = [1, 1, 1]} : vector<2x16x32xf32> to vector<2x16x8xf32>
    %144 = vector.extract_strided_slice %141 {offsets = [0, 0, 16], sizes = [2, 16, 8], strides = [1, 1, 1]} : vector<2x16x32xf32> to vector<2x16x8xf32>
    %145 = vector.extract_strided_slice %141 {offsets = [0, 0, 24], sizes = [2, 16, 8], strides = [1, 1, 1]} : vector<2x16x32xf32> to vector<2x16x8xf32>
    %146 = tpu.concatenate %142, %143, %144, %145 in 0 : vector<2x16x8xf32>, vector<2x16x8xf32>, vector<2x16x8xf32>, vector<2x16x8xf32> -> vector<8x16x8xf32>
    %147 = vector.extract_strided_slice %134 {offsets = [0, 32], sizes = [32, 32], strides = [1, 1]} : vector<32x64xf32> to vector<32x32xf32>
    %148 = vector.shape_cast %147 : vector<32x32xf32> to vector<2x16x32xf32>
    %149 = vector.extract_strided_slice %148 {offsets = [0, 0, 0], sizes = [2, 16, 8], strides = [1, 1, 1]} : vector<2x16x32xf32> to vector<2x16x8xf32>
    %150 = vector.extract_strided_slice %148 {offsets = [0, 0, 8], sizes = [2, 16, 8], strides = [1, 1, 1]} : vector<2x16x32xf32> to vector<2x16x8xf32>
    %151 = vector.extract_strided_slice %148 {offsets = [0, 0, 16], sizes = [2, 16, 8], strides = [1, 1, 1]} : vector<2x16x32xf32> to vector<2x16x8xf32>
    %152 = vector.extract_strided_slice %148 {offsets = [0, 0, 24], sizes = [2, 16, 8], strides = [1, 1, 1]} : vector<2x16x32xf32> to vector<2x16x8xf32>
    %153 = tpu.concatenate %149, %150, %151, %152 in 0 : vector<2x16x8xf32>, vector<2x16x8xf32>, vector<2x16x8xf32>, vector<2x16x8xf32> -> vector<8x16x8xf32>
    %154 = vector.shape_cast %139 : vector<32x32xf32> to vector<2x16x32xf32>
    %155 = vector.extract_strided_slice %154 {offsets = [0, 0, 0], sizes = [2, 16, 8], strides = [1, 1, 1]} : vector<2x16x32xf32> to vector<2x16x8xf32>
    %156 = vector.extract_strided_slice %154 {offsets = [0, 0, 8], sizes = [2, 16, 8], strides = [1, 1, 1]} : vector<2x16x32xf32> to vector<2x16x8xf32>
    %157 = vector.extract_strided_slice %154 {offsets = [0, 0, 16], sizes = [2, 16, 8], strides = [1, 1, 1]} : vector<2x16x32xf32> to vector<2x16x8xf32>
    %158 = vector.extract_strided_slice %154 {offsets = [0, 0, 24], sizes = [2, 16, 8], strides = [1, 1, 1]} : vector<2x16x32xf32> to vector<2x16x8xf32>
    %159 = tpu.concatenate %155, %156, %157, %158 in 0 : vector<2x16x8xf32>, vector<2x16x8xf32>, vector<2x16x8xf32>, vector<2x16x8xf32> -> vector<8x16x8xf32>
    "tpu.trace_start"() <{level = 10 : i32, message = "nqd,nkd->nqk"}> : () -> ()
    %cst_41 = arith.constant dense<0.000000e+00> : vector<8x16x16xf32>
    %160 = tpu.matmul %146, %153, %cst_41 {dimension_numbers = #tpu.dot_dimension_numbers<[2], [2], [1], [1], [0, 0, 0, 1, 1, 1], [0], [0]>} : vector<8x16x8xf32>, vector<8x16x8xf32>, vector<8x16x16xf32> -> vector<8x16x16xf32>
    "tpu.trace_stop"() : () -> ()
    %cst_42 = arith.constant dense<0xFF800000> : vector<8x16xf32>
    %161 = vector.multi_reduction <maximumf>, %160, %cst_42 [2] : vector<8x16x16xf32> to vector<8x16xf32>
    %162 = vector.shape_cast %161 : vector<8x16xf32> to vector<8x16x1xf32>
    %163 = vector.broadcast %162 : vector<8x16x1xf32> to vector<8x16x16xf32>
    %164 = arith.subf %160, %163 : vector<8x16x16xf32>
    %165 = math.exp %164 : vector<8x16x16xf32>
    %cst_43 = arith.constant dense<0.000000e+00> : vector<8x16xf32>
    %166 = vector.multi_reduction <add>, %165, %cst_43 [2] : vector<8x16x16xf32> to vector<8x16xf32>
    %167 = vector.shape_cast %166 : vector<8x16xf32> to vector<8x16x1xf32>
    %168 = tpu.reciprocal %167 {approx = true} : vector<8x16x1xf32> -> vector<8x16x1xf32>
    %169 = vector.broadcast %168 : vector<8x16x1xf32> to vector<8x16x16xf32>
    %170 = arith.mulf %165, %169 : vector<8x16x16xf32>
    "tpu.trace_start"() <{level = 10 : i32, message = "nqk,nkd->nqd"}> : () -> ()
    %cst_44 = arith.constant dense<0.000000e+00> : vector<8x16x8xf32>
    %171 = tpu.matmul %170, %159, %cst_44 {dimension_numbers = #tpu.dot_dimension_numbers<[2], [1], [1], [2], [0, 0, 0, 1, 1, 2], [0], [0]>} : vector<8x16x16xf32>, vector<8x16x8xf32>, vector<8x16x8xf32> -> vector<8x16x8xf32>
    "tpu.trace_stop"() : () -> ()
    %172 = vector.extract_strided_slice %171 {offsets = [0, 0, 0], sizes = [2, 16, 8], strides = [1, 1, 1]} : vector<8x16x8xf32> to vector<2x16x8xf32>
    %173 = vector.extract_strided_slice %171 {offsets = [2, 0, 0], sizes = [2, 16, 8], strides = [1, 1, 1]} : vector<8x16x8xf32> to vector<2x16x8xf32>
    %174 = vector.extract_strided_slice %171 {offsets = [4, 0, 0], sizes = [2, 16, 8], strides = [1, 1, 1]} : vector<8x16x8xf32> to vector<2x16x8xf32>
    %175 = vector.extract_strided_slice %171 {offsets = [6, 0, 0], sizes = [2, 16, 8], strides = [1, 1, 1]} : vector<8x16x8xf32> to vector<2x16x8xf32>
    %176 = tpu.concatenate %172, %173, %174, %175 in 2 : vector<2x16x8xf32>, vector<2x16x8xf32>, vector<2x16x8xf32>, vector<2x16x8xf32> -> vector<2x16x32xf32>
    %177 = vector.shape_cast %176 : vector<2x16x32xf32> to vector<32x32xf32>
    %178 = vector.extract_strided_slice %124 {offsets = [0, 96], sizes = [32, 32], strides = [1, 1]} : vector<32x192xf32> to vector<32x32xf32>
    %cst_45 = arith.constant dense<0.000000e+00> : vector<32x32xf32>
    %179 = tpu.matmul %177, %178, %cst_45 {dimension_numbers = #tpu.dot_dimension_numbers<[1], [0], [0], [1], [0, 0, 1, 1], [], []>} : vector<32x32xf32>, vector<32x32xf32>, vector<32x32xf32> -> vector<32x32xf32>
    %180 = vector.extract_strided_slice %128 {offsets = [2, 0], sizes = [1, 32], strides = [1, 1]} : vector<9x64xf32> to vector<1x32xf32>
    %181 = vector.broadcast %180 : vector<1x32xf32> to vector<32x32xf32>
    %182 = arith.addf %179, %181 : vector<32x32xf32>
    %183 = arith.addf %122, %182 : vector<32x32xf32>
    %184 = vector.extract_strided_slice %128 {offsets = [5, 0], sizes = [1, 32], strides = [1, 1]} : vector<9x64xf32> to vector<1x32xf32>
    %185 = vector.extract_strided_slice %128 {offsets = [6, 0], sizes = [1, 32], strides = [1, 1]} : vector<9x64xf32> to vector<1x32xf32>
    %cst_46 = arith.constant dense<0.000000e+00> : vector<32xf32>
    %186 = vector.multi_reduction <add>, %183, %cst_46 [1] : vector<32x32xf32> to vector<32xf32>
    %187 = vector.shape_cast %186 : vector<32xf32> to vector<32x1xf32>
    %cst_47 = arith.constant 3.200000e+01 : f32
    %188 = vector.broadcast %cst_47 : f32 to vector<32x1xf32>
    %189 = arith.divf %187, %188 : vector<32x1xf32>
    %190 = vector.broadcast %189 : vector<32x1xf32> to vector<32x32xf32>
    %191 = arith.subf %183, %190 : vector<32x32xf32>
    %192 = arith.mulf %191, %191 : vector<32x32xf32>
    %cst_48 = arith.constant dense<0.000000e+00> : vector<32xf32>
    %193 = vector.multi_reduction <add>, %192, %cst_48 [1] : vector<32x32xf32> to vector<32xf32>
    %194 = vector.shape_cast %193 : vector<32xf32> to vector<32x1xf32>
    %cst_49 = arith.constant 3.200000e+01 : f32
    %195 = vector.broadcast %cst_49 : f32 to vector<32x1xf32>
    %196 = arith.divf %194, %195 : vector<32x1xf32>
    %197 = vector.broadcast %189 : vector<32x1xf32> to vector<32x32xf32>
    %198 = arith.subf %183, %197 : vector<32x32xf32>
    %cst_50 = arith.constant 9.99999974E-6 : f32
    %199 = vector.broadcast %cst_50 : f32 to vector<32x1xf32>
    %200 = arith.addf %196, %199 : vector<32x1xf32>
    %201 = math.rsqrt %200 : vector<32x1xf32>
    %202 = vector.broadcast %201 : vector<32x1xf32> to vector<32x32xf32>
    %203 = arith.mulf %198, %202 : vector<32x32xf32>
    %204 = vector.broadcast %184 : vector<1x32xf32> to vector<32x32xf32>
    %205 = arith.mulf %203, %204 : vector<32x32xf32>
    %206 = vector.broadcast %185 : vector<1x32xf32> to vector<32x32xf32>
    %207 = arith.addf %205, %206 : vector<32x32xf32>
    %208 = vector.extract_strided_slice %124 {offsets = [0, 128], sizes = [32, 64], strides = [1, 1]} : vector<32x192xf32> to vector<32x64xf32>
    %cst_51 = arith.constant dense<0.000000e+00> : vector<32x64xf32>
    %209 = tpu.matmul %207, %208, %cst_51 {dimension_numbers = #tpu.dot_dimension_numbers<[1], [0], [0], [1], [0, 0, 1, 1], [], []>} : vector<32x32xf32>, vector<32x64xf32>, vector<32x64xf32> -> vector<32x64xf32>
    %210 = vector.extract_strided_slice %128 {offsets = [3, 0], sizes = [1, 64], strides = [1, 1]} : vector<9x64xf32> to vector<1x64xf32>
    %211 = vector.broadcast %210 : vector<1x64xf32> to vector<32x64xf32>
    %212 = arith.addf %209, %211 : vector<32x64xf32>
    %cst_52 = arith.constant 0.000000e+00 : f32
    %213 = vector.broadcast %cst_52 : f32 to vector<32x64xf32>
    %214 = arith.maximumf %212, %213 : vector<32x64xf32>
    %cst_53 = arith.constant dense<0.000000e+00> : vector<32x32xf32>
    %215 = tpu.matmul %214, %126, %cst_53 {dimension_numbers = #tpu.dot_dimension_numbers<[1], [0], [0], [1], [0, 0, 1, 1], [], []>} : vector<32x64xf32>, vector<64x32xf32>, vector<32x32xf32> -> vector<32x32xf32>
    %216 = vector.extract_strided_slice %128 {offsets = [4, 0], sizes = [1, 32], strides = [1, 1]} : vector<9x64xf32> to vector<1x32xf32>
    %217 = vector.broadcast %216 : vector<1x32xf32> to vector<32x32xf32>
    %218 = arith.addf %215, %217 : vector<32x32xf32>
    %219 = arith.addf %207, %218 : vector<32x32xf32>
    %220 = vector.extract_strided_slice %128 {offsets = [7, 0], sizes = [1, 32], strides = [1, 1]} : vector<9x64xf32> to vector<1x32xf32>
    %221 = vector.extract_strided_slice %128 {offsets = [8, 0], sizes = [1, 32], strides = [1, 1]} : vector<9x64xf32> to vector<1x32xf32>
    %cst_54 = arith.constant dense<0.000000e+00> : vector<32xf32>
    %222 = vector.multi_reduction <add>, %219, %cst_54 [1] : vector<32x32xf32> to vector<32xf32>
    %223 = vector.shape_cast %222 : vector<32xf32> to vector<32x1xf32>
    %cst_55 = arith.constant 3.200000e+01 : f32
    %224 = vector.broadcast %cst_55 : f32 to vector<32x1xf32>
    %225 = arith.divf %223, %224 : vector<32x1xf32>
    %226 = vector.broadcast %225 : vector<32x1xf32> to vector<32x32xf32>
    %227 = arith.subf %219, %226 : vector<32x32xf32>
    %228 = arith.mulf %227, %227 : vector<32x32xf32>
    %cst_56 = arith.constant dense<0.000000e+00> : vector<32xf32>
    %229 = vector.multi_reduction <add>, %228, %cst_56 [1] : vector<32x32xf32> to vector<32xf32>
    %230 = vector.shape_cast %229 : vector<32xf32> to vector<32x1xf32>
    %cst_57 = arith.constant 3.200000e+01 : f32
    %231 = vector.broadcast %cst_57 : f32 to vector<32x1xf32>
    %232 = arith.divf %230, %231 : vector<32x1xf32>
    %233 = vector.broadcast %225 : vector<32x1xf32> to vector<32x32xf32>
    %234 = arith.subf %219, %233 : vector<32x32xf32>
    %cst_58 = arith.constant 9.99999974E-6 : f32
    %235 = vector.broadcast %cst_58 : f32 to vector<32x1xf32>
    %236 = arith.addf %232, %235 : vector<32x1xf32>
    %237 = math.rsqrt %236 : vector<32x1xf32>
    %238 = vector.broadcast %237 : vector<32x1xf32> to vector<32x32xf32>
    %239 = arith.mulf %234, %238 : vector<32x32xf32>
    %240 = vector.broadcast %220 : vector<1x32xf32> to vector<32x32xf32>
    %241 = arith.mulf %239, %240 : vector<32x32xf32>
    %242 = vector.broadcast %221 : vector<1x32xf32> to vector<32x32xf32>
    %243 = arith.addf %241, %242 : vector<32x32xf32>
    %c0_59 = arith.constant 0 : index
    %c0_60 = arith.constant 0 : index
    %244 = vector.load %arg6[%c0_59, %c0_60] : memref<32x32xf32, #tpu.memory_space<vmem>>, vector<32x32xf32>
    tpu.vector_store %arg6[%c0_59, %c0_60], %243 {strides = array<i32>} : memref<32x32xf32, #tpu.memory_space<vmem>>, vector<32x32xf32>,
    return
  }
  func.func @transform_0(%arg0: i32) -> (i32, i32) {
    %c0_i32 = arith.constant 0 : i32
    %c0_i32_0 = arith.constant 0 : i32
    %c0_i32_1 = arith.constant 0 : i32
    return %c0_i32, %c0_i32_0 : i32, i32
  }
  func.func @transform_1(%arg0: i32) -> (i32, i32) {
    %c0_i32 = arith.constant 0 : i32
    %c0_i32_0 = arith.constant 0 : i32
    %c0_i32_1 = arith.constant 0 : i32
    return %c0_i32, %c0_i32_0 : i32, i32
  }
  func.func @transform_2(%arg0: i32) -> (i32, i32, i32) {
    %c0_i32 = arith.constant 0 : i32
    %c0_i32_0 = arith.constant 0 : i32
    %c0_i32_1 = arith.constant 0 : i32
    %c0_i32_2 = arith.constant 0 : i32
    return %c0_i32, %c0_i32_0, %c0_i32_1 : i32, i32, i32
  }
  func.func @transform_3(%arg0: i32) -> (i32, i32, i32) {
    %c0_i32 = arith.constant 0 : i32
    %c0_i32_0 = arith.constant 0 : i32
    %c0_i32_1 = arith.constant 0 : i32
    %c0_i32_2 = arith.constant 0 : i32
    return %c0_i32, %c0_i32_0, %c0_i32_1 : i32, i32, i32
  }
  func.func @transform_4(%arg0: i32) -> (i32, i32, i32) {
    %c0_i32 = arith.constant 0 : i32
    %c0_i32_0 = arith.constant 0 : i32
    %c0_i32_1 = arith.constant 0 : i32
    %c0_i32_2 = arith.constant 0 : i32
    return %c0_i32, %c0_i32_0, %c0_i32_1 : i32, i32, i32
  }
  func.func @transform_5(%arg0: i32) -> (i32, i32) {
    %c0_i32 = arith.constant 0 : i32
    %c0_i32_0 = arith.constant 0 : i32
    %c0_i32_1 = arith.constant 0 : i32
    return %c0_i32, %c0_i32_0 : i32, i32
  }
}

</mosaic_0001>

<llo_original>
// kernel: transformer_encoder.1
$region0: #{transformer_encoder.1}
  #allocation0 [shape = 'u32[]', space=smem, size = 0x4, offset = 0x4, fixed_abs, tag = 'smem constant byte address 0x4 - core index']
  #allocation1 [shape = 'u32[144,128]{1,0:T(1,128)}', space=vmem, size = 0x12000, scoped, tag = 'internal scratch']
  %s0 = inlined_call_operand.vmem [shape: f32[32,32], index: 0, kind: input, shape index: {}]
  %s1 = inlined_call_operand.vmem [shape: f32[32,32], index: 1, kind: input, shape index: {}]
  %s2 = inlined_call_operand.vmem [shape: f32[2,32,192], index: 2, kind: input, shape index: {}]
  %s3 = inlined_call_operand.vmem [shape: f32[2,64,32], index: 3, kind: input, shape index: {}]
  %s4 = inlined_call_operand.vmem [shape: f32[2,9,64], index: 4, kind: input, shape index: {}]
  %s5 = inlined_call_operand.vmem [shape: f32[32,32], index: 5, kind: output, shape index: {}]
  %s6 = sld [smem:[#allocation0]]
  $region30: #{transformer_encoder.1} parent=0
    _
  %s8 = ssub.s32 1, %s6
  %s9 = scalar_select 0, %s8, %s6
  // Predicated region
  $region2: #{transformer_encoder.1} parent=0 // pred_check
    _
  $region3: #{transformer_encoder.1} parent=0 // pred_check_branch
    %11 = sbr.rel (0) target = $region5
  $region4: #{transformer_encoder.1} parent=0 // pred_region
    _
  $region5: #{transformer_encoder.1} parent=0 // pred_fallthru
    _
  // Predicated region
  $region6: #{transformer_encoder.1} parent=0 // pred_check
    _
  $region7: #{transformer_encoder.1} parent=0 // pred_check_branch
    %13 = sbr.rel (0) target = $region9
  $region8: #{transformer_encoder.1} parent=0 // pred_region
    _
  $region9: #{transformer_encoder.1} parent=0 // pred_fallthru
    _
  // Predicated region
  $region10: #{transformer_encoder.1} parent=0 // pred_check
    _
  $region11: #{transformer_encoder.1} parent=0 // pred_check_branch
    %15 = sbr.rel (0) target = $region13
  $region12: #{transformer_encoder.1} parent=0 // pred_region
    _
  $region13: #{transformer_encoder.1} parent=0 // pred_fallthru
    _
  // Predicated region
  $region14: #{transformer_encoder.1} parent=0 // pred_check
    _
  $region15: #{transformer_encoder.1} parent=0 // pred_check_branch
    %17 = sbr.rel (0) target = $region17
  $region16: #{transformer_encoder.1} parent=0 // pred_region
    _
  $region17: #{transformer_encoder.1} parent=0 // pred_fallthru
    _
  // Predicated region
  $region18: #{transformer_encoder.1} parent=0 // pred_check
    _
  $region19: #{transformer_encoder.1} parent=0 // pred_check_branch
    %19 = sbr.rel (0) target = $region21
  $region20: #{transformer_encoder.1} parent=0 // pred_region
    _
  $region21: #{transformer_encoder.1} parent=0 // pred_fallthru
    _
  %v20 = vld [vmem:[%s0] sm:$0xff]
  %v21 = vld [vmem:[%s0 + $0x8] sm:$0xff]
  %v22 = vld [vmem:[%s0 + $0x10] sm:$0xff]
  %v23 = vld [vmem:[%s0 + $0x18] sm:$0xff]
  %v24 = vld [vmem:[%s1] sm:$0xff]
  %v25 = vld [vmem:[%s1 + $0x8] sm:$0xff]
  %v26 = vld [vmem:[%s1 + $0x10] sm:$0xff]
  %v27 = vld [vmem:[%s1 + $0x18] sm:$0xff]
  %v28 = vld [vmem:[%s2] sm:$0xff]
  %v29 = vld [vmem:[%s2 + $0x8] sm:$0xff]
  %v30 = vld [vmem:[%s2 + $0x10] sm:$0xff]
  %v31 = vld [vmem:[%s2 + $0x18] sm:$0xff]
  %v32 = vld [vmem:[%s2 + $0x20] sm:$0xff]
  %v33 = vld [vmem:[%s2 + $0x28] sm:$0xff]
  %v34 = vld [vmem:[%s2 + $0x30] sm:$0xff]
  %v35 = vld [vmem:[%s2 + $0x38] sm:$0xff]
  %v36 = vld [vmem:[%s3] sm:$0xff]
  %v37 = vld [vmem:[%s3 + $0x8] sm:$0xff]
  %v38 = vld [vmem:[%s3 + $0x10] sm:$0xff]
  %v39 = vld [vmem:[%s3 + $0x18] sm:$0xff]
  %v40 = vld [vmem:[%s3 + $0x20] sm:$0xff]
  %v41 = vld [vmem:[%s3 + $0x28] sm:$0xff]
  %v42 = vld [vmem:[%s3 + $0x30] sm:$0xff]
  %v43 = vld [vmem:[%s3 + $0x38] sm:$0xff]
  %v44 = vld [vmem:[%s4] sm:$0xff]
  %v45 = vld [vmem:[%s4 + $0x8] sm:$0x1]
  %v46 = vadd.f32 %v20, %v24
  %v47 = vadd.f32 %v21, %v25
  %v48 = vadd.f32 %v22, %v26
  %v49 = vadd.f32 %v23, %v27
  %v50 = vlaneseq
  %v51 = vshrl.u32 %v50, 7
  %v52 = vsub.s32 0, %v51
  %v53 = vrot.slane %v44, %v52
  %vm54 = vcmask 261120
  %v56 = vsel %vm54, %v46, 0
  %v59 = vsel %vm54, %v47, 0
  %v62 = vsel %vm54, %v48, 0
  %v65 = vsel %vm54, %v49, 0
  %67 = vmatprep.subr.mxu0 0.0
  %68 = vmatpush1.msra.mxu0 %v28
  %69 = vmatprep.subr.mxu0 0.0
  %70 = vmatpush1.msra.mxu0 %v30
  %71 = vmatprep.subr.mxu0 0.0
  %72 = vmatpush1.msra.mxu0 %v32
  %73 = vmatprep.subr.mxu0 0.0
  %74 = vmatpush1.msra.mxu0 %v34
  %75 = vmatprep.subr.mxu0 0.0
  %76 = vmatpush1.msra.mxu0 0.0
  %77 = vmatprep.subr.mxu0 0.0
  %78 = vmatpush1.msra.mxu0 0.0
  %79 = vmatprep.subr.mxu0 0.0
  %80 = vmatpush1.msra.mxu0 0.0
  %81 = vmatprep.subr.mxu0 0.0
  %82 = vmatpush1.msra.mxu0 0.0
  %83 = vmatprep.subr.mxu0 0.0
  %84 = vmatpush1.msra.mxu0 0.0
  %85 = vmatprep.subr.mxu0 0.0
  %86 = vmatpush1.msra.mxu0 0.0
  %87 = vmatprep.subr.mxu0 0.0
  %88 = vmatpush1.msra.mxu0 0.0
  %89 = vmatprep.subr.mxu0 0.0
  %90 = vmatpush1.msra.mxu0 0.0
  %91 = vmatprep.subr.mxu0 0.0
  %92 = vmatpush1.msra.mxu0 0.0
  %93 = vmatprep.subr.mxu0 0.0
  %94 = vmatpush1.msra.mxu0 0.0
  %95 = vmatprep.subr.mxu0 0.0
  %96 = vmatpush1.msra.mxu0 0.0
  %97 = vmatprep.subr.mxu0 0.0
  %98 = vmatpush1.msra.mxu0 0.0
  %99 = vmatprep.subr.mxu0 0.0
  %100 = vmatpush1.msra.mxu0 0.0
  %101 = vmatprep.subr.mxu0 0.0
  %102 = vmatpush1.msra.mxu0 0.0
  %103 = vmatprep.subr.mxu0 0.0
  %104 = vmatpush1.msra.mxu0 0.0
  %105 = vmatprep.subr.mxu0 0.0
  %106 = vmatpush1.msra.mxu0 0.0
  %107 = vmatprep.subr.mxu0 0.0
  %108 = vmatpush1.msra.mxu0 0.0
  %109 = vmatprep.subr.mxu0 0.0
  %110 = vmatpush1.msra.mxu0 0.0
  %111 = vmatprep.subr.mxu0 0.0
  %112 = vmatpush1.msra.mxu0 0.0
  %113 = vmatprep.subr.mxu0 0.0
  %114 = vmatpush1.msra.mxu0 0.0
  %115 = vmatprep.subr.mxu0 0.0
  %116 = vmatpush1.msra.mxu0 0.0
  %117 = vmatprep.subr.mxu0 0.0
  %118 = vmatpush1.msra.mxu0 0.0
  %119 = vmatprep.subr.mxu0 0.0
  %120 = vmatpush1.msra.mxu0 0.0
  %121 = vmatprep.subr.mxu0 0.0
  %122 = vmatpush1.msra.mxu0 0.0
  %123 = vmatprep.subr.mxu0 0.0
  %124 = vmatpush1.msra.mxu0 0.0
  %125 = vmatprep.subr.mxu0 0.0
  %126 = vmatpush1.msra.mxu0 0.0
  %127 = vmatprep.subr.mxu0 0.0
  %128 = vmatpush1.msra.mxu0 0.0
  %129 = vmatprep.subr.mxu0 0.0
  %130 = vmatpush1.msra.mxu0 0.0
  %131 = vmatprep.mubr.f32.mxu0 0.0
  %132 = vmatmul.mubr.f32.gmra.mrb[0].mxu0 %v56
  %v133 = vpop.f32.mrb[0].mxu0
  %v134 = vadd.f32 %v53, %v133
  %v135 = vpop.f32.mrb[0].mxu0
  %136 = vmatprep.mubr.f32.mxu0 0.0
  %137 = vmatmul.mubr.f32.gmra.mrb[0].mxu0 %v59
  %v138 = vpop.f32.mrb[0].mxu0
  %v139 = vadd.f32 %v53, %v138
  %v140 = vpop.f32.mrb[0].mxu0
  %141 = vmatprep.mubr.f32.mxu0 0.0
  %142 = vmatmul.mubr.f32.gmra.mrb[0].mxu0 %v62
  %v143 = vpop.f32.mrb[0].mxu0
  %v144 = vadd.f32 %v53, %v143
  %v145 = vpop.f32.mrb[0].mxu0
  %146 = vmatprep.mubr.f32.mxu0 0.0
  %147 = vmatmul.mubr.f32.gmra.mrb[0].mxu0 %v65
  %v148 = vpop.f32.mrb[0].mxu0
  %v149 = vadd.f32 %v53, %v148
  %v150 = vpop.f32.mrb[0].mxu0
  %151 = vdwg.mxu0
  %v152 = vlaneseq
  %v153 = vshrl.u32 %v152, 7
  %v154 = vsub.s32 1, %v153
  %v155 = vrot.slane %v44, %v154
  %160 = vrot.lane.b32.xlu0 %v28, 64
  %v161 = vpop.permute.xlu0 %160
  %162 = vrot.lane.b32.xlu0 %v30, 64
  %v163 = vpop.permute.xlu0 %162
  %164 = vrot.lane.b32.xlu0 %v32, 64
  %v165 = vpop.permute.xlu0 %164
  %166 = vrot.lane.b32.xlu0 %v34, 64
  %v167 = vpop.permute.xlu0 %166
  %v173 = vsel %vm54, %v20, 0
  %v176 = vsel %vm54, %v21, 0
  %v179 = vsel %vm54, %v22, 0
  %v182 = vsel %vm54, %v23, 0
  %184 = vmatprep.subr.mxu0 0.0
  %185 = vmatpush1.msra.mxu0 %v161
  %186 = vmatprep.subr.mxu0 0.0
  %187 = vmatpush1.msra.mxu0 %v163
  %188 = vmatprep.subr.mxu0 0.0
  %189 = vmatpush1.msra.mxu0 %v165
  %190 = vmatprep.subr.mxu0 0.0
  %191 = vmatpush1.msra.mxu0 %v167
  %192 = vmatprep.subr.mxu0 0.0
  %193 = vmatpush1.msra.mxu0 0.0
  %194 = vmatprep.subr.mxu0 0.0
  %195 = vmatpush1.msra.mxu0 0.0
  %196 = vmatprep.subr.mxu0 0.0
  %197 = vmatpush1.msra.mxu0 0.0
  %198 = vmatprep.subr.mxu0 0.0
  %199 = vmatpush1.msra.mxu0 0.0
  %200 = vmatprep.subr.mxu0 0.0
  %201 = vmatpush1.msra.mxu0 0.0
  %202 = vmatprep.subr.mxu0 0.0
  %203 = vmatpush1.msra.mxu0 0.0
  %204 = vmatprep.subr.mxu0 0.0
  %205 = vmatpush1.msra.mxu0 0.0
  %206 = vmatprep.subr.mxu0 0.0
  %207 = vmatpush1.msra.mxu0 0.0
  %208 = vmatprep.subr.mxu0 0.0
  %209 = vmatpush1.msra.mxu0 0.0
  %210 = vmatprep.subr.mxu0 0.0
  %211 = vmatpush1.msra.mxu0 0.0
  %212 = vmatprep.subr.mxu0 0.0
  %213 = vmatpush1.msra.mxu0 0.0
  %214 = vmatprep.subr.mxu0 0.0
  %215 = vmatpush1.msra.mxu0 0.0
  %216 = vmatprep.subr.mxu0 0.0
  %217 = vmatpush1.msra.mxu0 0.0
  %218 = vmatprep.subr.mxu0 0.0
  %219 = vmatpush1.msra.mxu0 0.0
  %220 = vmatprep.subr.mxu0 0.0
  %221 = vmatpush1.msra.mxu0 0.0
  %222 = vmatprep.subr.mxu0 0.0
  %223 = vmatpush1.msra.mxu0 0.0
  %224 = vmatprep.subr.mxu0 0.0
  %225 = vmatpush1.msra.mxu0 0.0
  %226 = vmatprep.subr.mxu0 0.0
  %227 = vmatpush1.msra.mxu0 0.0
  %228 = vmatprep.subr.mxu0 0.0
  %229 = vmatpush1.msra.mxu0 0.0
  %230 = vmatprep.subr.mxu0 0.0
  %231 = vmatpush1.msra.mxu0 0.0
  %232 = vmatprep.subr.mxu0 0.0
  %233 = vmatpush1.msra.mxu0 0.0
  %234 = vmatprep.subr.mxu0 0.0
  %235 = vmatpush1.msra.mxu0 0.0
  %236 = vmatprep.subr.mxu0 0.0
  %237 = vmatpush1.msra.mxu0 0.0
  %238 = vmatprep.subr.mxu0 0.0
  %239 = vmatpush1.msra.mxu0 0.0
  %240 = vmatprep.subr.mxu0 0.0
  %241 = vmatpush1.msra.mxu0 0.0
  %242 = vmatprep.subr.mxu0 0.0
  %243 = vmatpush1.msra.mxu0 0.0
  %244 = vmatprep.subr.mxu0 0.0
  %245 = vmatpush1.msra.mxu0 0.0
  %246 = vmatprep.subr.mxu0 0.0
  %247 = vmatpush1.msra.mxu0 0.0
  %248 = vmatprep.mubr.f32.mxu0 0.0
  %249 = vmatmul.mubr.f32.gmra.mrb[0].mxu0 %v173
  %v250 = vpop.f32.mrb[0].mxu0
  %v251 = vadd.f32 %v155, %v250
  %v252 = vpop.f32.mrb[0].mxu0
  %253 = vmatprep.mubr.f32.mxu0 0.0
  %254 = vmatmul.mubr.f32.gmra.mrb[0].mxu0 %v176
  %v255 = vpop.f32.mrb[0].mxu0
  %v256 = vadd.f32 %v155, %v255
  %v257 = vpop.f32.mrb[0].mxu0
  %258 = vmatprep.mubr.f32.mxu0 0.0
  %259 = vmatmul.mubr.f32.gmra.mrb[0].mxu0 %v179
  %v260 = vpop.f32.mrb[0].mxu0
  %v261 = vadd.f32 %v155, %v260
  %v262 = vpop.f32.mrb[0].mxu0
  %263 = vmatprep.mubr.f32.mxu0 0.0
  %264 = vmatmul.mubr.f32.gmra.mrb[0].mxu0 %v182
  %v265 = vpop.f32.mrb[0].mxu0
  %v266 = vadd.f32 %v155, %v265
  %v267 = vpop.f32.mrb[0].mxu0
  %268 = vdwg.mxu0
  %273 = vrot.lane.b32.xlu0 %v134, 120
  %v274 = vpop.permute.xlu0 %273
  %275 = vrot.lane.b32.xlu0 %v139, 120
  %v276 = vpop.permute.xlu0 %275
  %277 = vrot.lane.b32.xlu0 %v144, 120
  %v278 = vpop.permute.xlu0 %277
  %279 = vrot.lane.b32.xlu0 %v149, 120
  %v280 = vpop.permute.xlu0 %279
  %281 = vrot.lane.b32.xlu0 %v134, 112
  %v282 = vpop.permute.xlu0 %281
  %283 = vrot.lane.b32.xlu0 %v139, 112
  %v284 = vpop.permute.xlu0 %283
  %285 = vrot.lane.b32.xlu0 %v144, 112
  %v286 = vpop.permute.xlu0 %285
  %287 = vrot.lane.b32.xlu0 %v149, 112
  %v288 = vpop.permute.xlu0 %287
  %289 = vrot.lane.b32.xlu0 %v134, 104
  %v290 = vpop.permute.xlu0 %289
  %291 = vrot.lane.b32.xlu0 %v139, 104
  %v292 = vpop.permute.xlu0 %291
  %293 = vrot.lane.b32.xlu0 %v144, 104
  %v294 = vpop.permute.xlu0 %293
  %295 = vrot.lane.b32.xlu0 %v149, 104
  %v296 = vpop.permute.xlu0 %295
  %301 = vrot.lane.b32.xlu0 %v251, 120
  %v302 = vpop.permute.xlu0 %301
  %303 = vrot.lane.b32.xlu0 %v256, 120
  %v304 = vpop.permute.xlu0 %303
  %305 = vrot.lane.b32.xlu0 %v261, 120
  %v306 = vpop.permute.xlu0 %305
  %307 = vrot.lane.b32.xlu0 %v266, 120
  %v308 = vpop.permute.xlu0 %307
  %313 = vrot.lane.b32.xlu0 %v251, 112
  %v314 = vpop.permute.xlu0 %313
  %315 = vrot.lane.b32.xlu0 %v256, 112
  %v316 = vpop.permute.xlu0 %315
  %317 = vrot.lane.b32.xlu0 %v261, 112
  %v318 = vpop.permute.xlu0 %317
  %319 = vrot.lane.b32.xlu0 %v266, 112
  %v320 = vpop.permute.xlu0 %319
  %325 = vrot.lane.b32.xlu0 %v251, 104
  %v326 = vpop.permute.xlu0 %325
  %327 = vrot.lane.b32.xlu0 %v256, 104
  %v328 = vpop.permute.xlu0 %327
  %329 = vrot.lane.b32.xlu0 %v261, 104
  %v330 = vpop.permute.xlu0 %329
  %331 = vrot.lane.b32.xlu0 %v266, 104
  %v332 = vpop.permute.xlu0 %331
  %337 = vrot.lane.b32.xlu0 %v134, 96
  %v338 = vpop.permute.xlu0 %337
  %339 = vrot.lane.b32.xlu0 %v139, 96
  %v340 = vpop.permute.xlu0 %339
  %vm341 = vcmask 64512
  %v342 = vsel %vm341, %v134, 0
  %v344 = vsel %vm341, %v139, 0
  %v346 = vsel %vm341, %v338, 0
  %v348 = vsel %vm341, %v340, 0
  %350 = vmatprep.subr.mxu0 0.0
  %351 = vmatpush1.xpose.msra.mxu0 %v346
  %352 = vmatprep.subr.mxu0 0.0
  %353 = vmatpush1.xpose.msra.mxu0 %v348
  %354 = vmatprep.subr.mxu0 0.0
  %355 = vmatpush1.xpose.msra.mxu0 0.0
  %356 = vmatprep.subr.mxu0 0.0
  %357 = vmatpush1.xpose.msra.mxu0 0.0
  %358 = vmatprep.subr.mxu0 0.0
  %359 = vmatpush1.xpose.msra.mxu0 0.0
  %360 = vmatprep.subr.mxu0 0.0
  %361 = vmatpush1.xpose.msra.mxu0 0.0
  %362 = vmatprep.subr.mxu0 0.0
  %363 = vmatpush1.xpose.msra.mxu0 0.0
  %364 = vmatprep.subr.mxu0 0.0
  %365 = vmatpush1.xpose.msra.mxu0 0.0
  %366 = vmatprep.subr.mxu0 0.0
  %367 = vmatpush1.xpose.msra.mxu0 0.0
  %368 = vmatprep.subr.mxu0 0.0
  %369 = vmatpush1.xpose.msra.mxu0 0.0
  %370 = vmatprep.subr.mxu0 0.0
  %371 = vmatpush1.xpose.msra.mxu0 0.0
  %372 = vmatprep.subr.mxu0 0.0
  %373 = vmatpush1.xpose.msra.mxu0 0.0
  %374 = vmatprep.subr.mxu0 0.0
  %375 = vmatpush1.xpose.msra.mxu0 0.0
  %376 = vmatprep.subr.mxu0 0.0
  %377 = vmatpush1.xpose.msra.mxu0 0.0
  %378 = vmatprep.subr.mxu0 0.0
  %379 = vmatpush1.xpose.msra.mxu0 0.0
  %380 = vmatprep.subr.mxu0 0.0
  %381 = vmatpush1.xpose.msra.mxu0 0.0
  %382 = vmatprep.subr.mxu0 0.0
  %383 = vmatpush1.xpose.msra.mxu0 0.0
  %384 = vmatprep.subr.mxu0 0.0
  %385 = vmatpush1.xpose.msra.mxu0 0.0
  %386 = vmatprep.subr.mxu0 0.0
  %387 = vmatpush1.xpose.msra.mxu0 0.0
  %388 = vmatprep.subr.mxu0 0.0
  %389 = vmatpush1.xpose.msra.mxu0 0.0
  %390 = vmatprep.subr.mxu0 0.0
  %391 = vmatpush1.xpose.msra.mxu0 0.0
  %392 = vmatprep.subr.mxu0 0.0
  %393 = vmatpush1.xpose.msra.mxu0 0.0
  %394 = vmatprep.subr.mxu0 0.0
  %395 = vmatpush1.xpose.msra.mxu0 0.0
  %396 = vmatprep.subr.mxu0 0.0
  %397 = vmatpush1.xpose.msra.mxu0 0.0
  %398 = vmatprep.subr.mxu0 0.0
  %399 = vmatpush1.xpose.msra.mxu0 0.0
  %400 = vmatprep.subr.mxu0 0.0
  %401 = vmatpush1.xpose.msra.mxu0 0.0
  %402 = vmatprep.subr.mxu0 0.0
  %403 = vmatpush1.xpose.msra.mxu0 0.0
  %404 = vmatprep.subr.mxu0 0.0
  %405 = vmatpush1.xpose.msra.mxu0 0.0
  %406 = vmatprep.subr.mxu0 0.0
  %407 = vmatpush1.xpose.msra.mxu0 0.0
  %408 = vmatprep.subr.mxu0 0.0
  %409 = vmatpush1.xpose.msra.mxu0 0.0
  %410 = vmatprep.subr.mxu0 0.0
  %411 = vmatpush1.xpose.msra.mxu0 0.0
  %412 = vmatprep.subr.mxu0 0.0
  %413 = vmatpush1.xpose.msra.mxu0 0.0
  %414 = vmatprep.mubr.f32.mxu0 0.0
  %415 = vmatmul.mubr.f32.gmra.mrb[0].mxu0 %v342
  %v416 = vpop.f32.mrb[0].mxu0
  %v417 = vadd.f32 0.0, %v416
  %v418 = vpop.f32.mrb[0].mxu0
  %419 = vmatprep.mubr.f32.mxu0 0.0
  %420 = vmatmul.mubr.f32.gmra.mrb[0].mxu0 %v344
  %v421 = vpop.f32.mrb[0].mxu0
  %v422 = vadd.f32 0.0, %v421
  %v423 = vpop.f32.mrb[0].mxu0
  %424 = vdwg.mxu0
  %425 = vrot.lane.b32.xlu0 %v144, 96
  %v426 = vpop.permute.xlu0 %425
  %427 = vrot.lane.b32.xlu0 %v149, 96
  %v428 = vpop.permute.xlu0 %427
  %v429 = vsel %vm341, %v144, 0
  %v431 = vsel %vm341, %v149, 0
  %v433 = vsel %vm341, %v426, 0
  %v435 = vsel %vm341, %v428, 0
  %437 = vmatprep.subr.mxu0 0.0
  %438 = vmatpush1.xpose.msra.mxu0 %v433
  %439 = vmatprep.subr.mxu0 0.0
  %440 = vmatpush1.xpose.msra.mxu0 %v435
  %441 = vmatprep.subr.mxu0 0.0
  %442 = vmatpush1.xpose.msra.mxu0 0.0
  %443 = vmatprep.subr.mxu0 0.0
  %444 = vmatpush1.xpose.msra.mxu0 0.0
  %445 = vmatprep.subr.mxu0 0.0
  %446 = vmatpush1.xpose.msra.mxu0 0.0
  %447 = vmatprep.subr.mxu0 0.0
  %448 = vmatpush1.xpose.msra.mxu0 0.0
  %449 = vmatprep.subr.mxu0 0.0
  %450 = vmatpush1.xpose.msra.mxu0 0.0
  %451 = vmatprep.subr.mxu0 0.0
  %452 = vmatpush1.xpose.msra.mxu0 0.0
  %453 = vmatprep.subr.mxu0 0.0
  %454 = vmatpush1.xpose.msra.mxu0 0.0
  %455 = vmatprep.subr.mxu0 0.0
  %456 = vmatpush1.xpose.msra.mxu0 0.0
  %457 = vmatprep.subr.mxu0 0.0
  %458 = vmatpush1.xpose.msra.mxu0 0.0
  %459 = vmatprep.subr.mxu0 0.0
  %460 = vmatpush1.xpose.msra.mxu0 0.0
  %461 = vmatprep.subr.mxu0 0.0
  %462 = vmatpush1.xpose.msra.mxu0 0.0
  %463 = vmatprep.subr.mxu0 0.0
  %464 = vmatpush1.xpose.msra.mxu0 0.0
  %465 = vmatprep.subr.mxu0 0.0
  %466 = vmatpush1.xpose.msra.mxu0 0.0
  %467 = vmatprep.subr.mxu0 0.0
  %468 = vmatpush1.xpose.msra.mxu0 0.0
  %469 = vmatprep.subr.mxu0 0.0
  %470 = vmatpush1.xpose.msra.mxu0 0.0
  %471 = vmatprep.subr.mxu0 0.0
  %472 = vmatpush1.xpose.msra.mxu0 0.0
  %473 = vmatprep.subr.mxu0 0.0
  %474 = vmatpush1.xpose.msra.mxu0 0.0
  %475 = vmatprep.subr.mxu0 0.0
  %476 = vmatpush1.xpose.msra.mxu0 0.0
  %477 = vmatprep.subr.mxu0 0.0
  %478 = vmatpush1.xpose.msra.mxu0 0.0
  %479 = vmatprep.subr.mxu0 0.0
  %480 = vmatpush1.xpose.msra.mxu0 0.0
  %481 = vmatprep.subr.mxu0 0.0
  %482 = vmatpush1.xpose.msra.mxu0 0.0
  %483 = vmatprep.subr.mxu0 0.0
  %484 = vmatpush1.xpose.msra.mxu0 0.0
  %485 = vmatprep.subr.mxu0 0.0
  %486 = vmatpush1.xpose.msra.mxu0 0.0
  %487 = vmatprep.subr.mxu0 0.0
  %488 = vmatpush1.xpose.msra.mxu0 0.0
  %489 = vmatprep.subr.mxu0 0.0
  %490 = vmatpush1.xpose.msra.mxu0 0.0
  %491 = vmatprep.subr.mxu0 0.0
  %492 = vmatpush1.xpose.msra.mxu0 0.0
  %493 = vmatprep.subr.mxu0 0.0
  %494 = vmatpush1.xpose.msra.mxu0 0.0
  %495 = vmatprep.subr.mxu0 0.0
  %496 = vmatpush1.xpose.msra.mxu0 0.0
  %497 = vmatprep.subr.mxu0 0.0
  %498 = vmatpush1.xpose.msra.mxu0 0.0
  %499 = vmatprep.subr.mxu0 0.0
  %500 = vmatpush1.xpose.msra.mxu0 0.0
  %501 = vmatprep.mubr.f32.mxu0 0.0
  %502 = vmatmul.mubr.f32.gmra.mrb[0].mxu0 %v429
  %v503 = vpop.f32.mrb[0].mxu0
  %v504 = vadd.f32 0.0, %v503
  %v505 = vpop.f32.mrb[0].mxu0
  %506 = vmatprep.mubr.f32.mxu0 0.0
  %507 = vmatmul.mubr.f32.gmra.mrb[0].mxu0 %v431
  %v508 = vpop.f32.mrb[0].mxu0
  %v509 = vadd.f32 0.0, %v508
  %v510 = vpop.f32.mrb[0].mxu0
  %511 = vdwg.mxu0
  %512 = vrot.lane.b32.xlu0 %v274, 96
  %v513 = vpop.permute.xlu0 %512
  %514 = vrot.lane.b32.xlu0 %v276, 96
  %v515 = vpop.permute.xlu0 %514
  %v516 = vsel %vm341, %v274, 0
  %v518 = vsel %vm341, %v276, 0
  %v520 = vsel %vm341, %v513, 0
  %v522 = vsel %vm341, %v515, 0
  %524 = vmatprep.subr.mxu0 0.0
  %525 = vmatpush1.xpose.msra.mxu0 %v520
  %526 = vmatprep.subr.mxu0 0.0
  %527 = vmatpush1.xpose.msra.mxu0 %v522
  %528 = vmatprep.subr.mxu0 0.0
  %529 = vmatpush1.xpose.msra.mxu0 0.0
  %530 = vmatprep.subr.mxu0 0.0
  %531 = vmatpush1.xpose.msra.mxu0 0.0
  %532 = vmatprep.subr.mxu0 0.0
  %533 = vmatpush1.xpose.msra.mxu0 0.0
  %534 = vmatprep.subr.mxu0 0.0
  %535 = vmatpush1.xpose.msra.mxu0 0.0
  %536 = vmatprep.subr.mxu0 0.0
  %537 = vmatpush1.xpose.msra.mxu0 0.0
  %538 = vmatprep.subr.mxu0 0.0
  %539 = vmatpush1.xpose.msra.mxu0 0.0
  %540 = vmatprep.subr.mxu0 0.0
  %541 = vmatpush1.xpose.msra.mxu0 0.0
  %542 = vmatprep.subr.mxu0 0.0
  %543 = vmatpush1.xpose.msra.mxu0 0.0
  %544 = vmatprep.subr.mxu0 0.0
  %545 = vmatpush1.xpose.msra.mxu0 0.0
  %546 = vmatprep.subr.mxu0 0.0
  %547 = vmatpush1.xpose.msra.mxu0 0.0
  %548 = vmatprep.subr.mxu0 0.0
  %549 = vmatpush1.xpose.msra.mxu0 0.0
  %550 = vmatprep.subr.mxu0 0.0
  %551 = vmatpush1.xpose.msra.mxu0 0.0
  %552 = vmatprep.subr.mxu0 0.0
  %553 = vmatpush1.xpose.msra.mxu0 0.0
  %554 = vmatprep.subr.mxu0 0.0
  %555 = vmatpush1.xpose.msra.mxu0 0.0
  %556 = vmatprep.subr.mxu0 0.0
  %557 = vmatpush1.xpose.msra.mxu0 0.0
  %558 = vmatprep.subr.mxu0 0.0
  %559 = vmatpush1.xpose.msra.mxu0 0.0
  %560 = vmatprep.subr.mxu0 0.0
  %561 = vmatpush1.xpose.msra.mxu0 0.0
  %562 = vmatprep.subr.mxu0 0.0
  %563 = vmatpush1.xpose.msra.mxu0 0.0
  %564 = vmatprep.subr.mxu0 0.0
  %565 = vmatpush1.xpose.msra.mxu0 0.0
  %566 = vmatprep.subr.mxu0 0.0
  %567 = vmatpush1.xpose.msra.mxu0 0.0
  %568 = vmatprep.subr.mxu0 0.0
  %569 = vmatpush1.xpose.msra.mxu0 0.0
  %570 = vmatprep.subr.mxu0 0.0
  %571 = vmatpush1.xpose.msra.mxu0 0.0
  %572 = vmatprep.subr.mxu0 0.0
  %573 = vmatpush1.xpose.msra.mxu0 0.0
  %574 = vmatprep.subr.mxu0 0.0
  %575 = vmatpush1.xpose.msra.mxu0 0.0
  %576 = vmatprep.subr.mxu0 0.0
  %577 = vmatpush1.xpose.msra.mxu0 0.0
  %578 = vmatprep.subr.mxu0 0.0
  %579 = vmatpush1.xpose.msra.mxu0 0.0
  %580 = vmatprep.subr.mxu0 0.0
  %581 = vmatpush1.xpose.msra.mxu0 0.0
  %582 = vmatprep.subr.mxu0 0.0
  %583 = vmatpush1.xpose.msra.mxu0 0.0
  %584 = vmatprep.subr.mxu0 0.0
  %585 = vmatpush1.xpose.msra.mxu0 0.0
  %586 = vmatprep.subr.mxu0 0.0
  %587 = vmatpush1.xpose.msra.mxu0 0.0
  %588 = vmatprep.mubr.f32.mxu0 0.0
  %589 = vmatmul.mubr.f32.gmra.mrb[0].mxu0 %v516
  %v590 = vpop.f32.mrb[0].mxu0
  %v591 = vadd.f32 0.0, %v590
  %v592 = vpop.f32.mrb[0].mxu0
  %593 = vmatprep.mubr.f32.mxu0 0.0
  %594 = vmatmul.mubr.f32.gmra.mrb[0].mxu0 %v518
  %v595 = vpop.f32.mrb[0].mxu0
  %v596 = vadd.f32 0.0, %v595
  %v597 = vpop.f32.mrb[0].mxu0
  %598 = vdwg.mxu0
  %599 = vrot.lane.b32.xlu0 %v278, 96
  %v600 = vpop.permute.xlu0 %599
  %601 = vrot.lane.b32.xlu0 %v280, 96
  %v602 = vpop.permute.xlu0 %601
  %v603 = vsel %vm341, %v278, 0
  %v605 = vsel %vm341, %v280, 0
  %v607 = vsel %vm341, %v600, 0
  %v609 = vsel %vm341, %v602, 0
  %611 = vmatprep.subr.mxu0 0.0
  %612 = vmatpush1.xpose.msra.mxu0 %v607
  %613 = vmatprep.subr.mxu0 0.0
  %614 = vmatpush1.xpose.msra.mxu0 %v609
  %615 = vmatprep.subr.mxu0 0.0
  %616 = vmatpush1.xpose.msra.mxu0 0.0
  %617 = vmatprep.subr.mxu0 0.0
  %618 = vmatpush1.xpose.msra.mxu0 0.0
  %619 = vmatprep.subr.mxu0 0.0
  %620 = vmatpush1.xpose.msra.mxu0 0.0
  %621 = vmatprep.subr.mxu0 0.0
  %622 = vmatpush1.xpose.msra.mxu0 0.0
  %623 = vmatprep.subr.mxu0 0.0
  %624 = vmatpush1.xpose.msra.mxu0 0.0
  %625 = vmatprep.subr.mxu0 0.0
  %626 = vmatpush1.xpose.msra.mxu0 0.0
  %627 = vmatprep.subr.mxu0 0.0
  %628 = vmatpush1.xpose.msra.mxu0 0.0
  %629 = vmatprep.subr.mxu0 0.0
  %630 = vmatpush1.xpose.msra.mxu0 0.0
  %631 = vmatprep.subr.mxu0 0.0
  %632 = vmatpush1.xpose.msra.mxu0 0.0
  %633 = vmatprep.subr.mxu0 0.0
  %634 = vmatpush1.xpose.msra.mxu0 0.0
  %635 = vmatprep.subr.mxu0 0.0
  %636 = vmatpush1.xpose.msra.mxu0 0.0
  %637 = vmatprep.subr.mxu0 0.0
  %638 = vmatpush1.xpose.msra.mxu0 0.0
  %639 = vmatprep.subr.mxu0 0.0
  %640 = vmatpush1.xpose.msra.mxu0 0.0
  %641 = vmatprep.subr.mxu0 0.0
  %642 = vmatpush1.xpose.msra.mxu0 0.0
  %643 = vmatprep.subr.mxu0 0.0
  %644 = vmatpush1.xpose.msra.mxu0 0.0
  %645 = vmatprep.subr.mxu0 0.0
  %646 = vmatpush1.xpose.msra.mxu0 0.0
  %647 = vmatprep.subr.mxu0 0.0
  %648 = vmatpush1.xpose.msra.mxu0 0.0
  %649 = vmatprep.subr.mxu0 0.0
  %650 = vmatpush1.xpose.msra.mxu0 0.0
  %651 = vmatprep.subr.mxu0 0.0
  %652 = vmatpush1.xpose.msra.mxu0 0.0
  %653 = vmatprep.subr.mxu0 0.0
  %654 = vmatpush1.xpose.msra.mxu0 0.0
  %655 = vmatprep.subr.mxu0 0.0
  %656 = vmatpush1.xpose.msra.mxu0 0.0
  %657 = vmatprep.subr.mxu0 0.0
  %658 = vmatpush1.xpose.msra.mxu0 0.0
  %659 = vmatprep.subr.mxu0 0.0
  %660 = vmatpush1.xpose.msra.mxu0 0.0
  %661 = vmatprep.subr.mxu0 0.0
  %662 = vmatpush1.xpose.msra.mxu0 0.0
  %663 = vmatprep.subr.mxu0 0.0
  %664 = vmatpush1.xpose.msra.mxu0 0.0
  %665 = vmatprep.subr.mxu0 0.0
  %666 = vmatpush1.xpose.msra.mxu0 0.0
  %667 = vmatprep.subr.mxu0 0.0
  %668 = vmatpush1.xpose.msra.mxu0 0.0
  %669 = vmatprep.subr.mxu0 0.0
  %670 = vmatpush1.xpose.msra.mxu0 0.0
  %671 = vmatprep.subr.mxu0 0.0
  %672 = vmatpush1.xpose.msra.mxu0 0.0
  %673 = vmatprep.subr.mxu0 0.0
  %674 = vmatpush1.xpose.msra.mxu0 0.0
  %675 = vmatprep.mubr.f32.mxu0 0.0
  %676 = vmatmul.mubr.f32.gmra.mrb[0].mxu0 %v603
  %v677 = vpop.f32.mrb[0].mxu0
  %v678 = vadd.f32 0.0, %v677
  %v679 = vpop.f32.mrb[0].mxu0
  %680 = vmatprep.mubr.f32.mxu0 0.0
  %681 = vmatmul.mubr.f32.gmra.mrb[0].mxu0 %v605
  %v682 = vpop.f32.mrb[0].mxu0
  %v683 = vadd.f32 0.0, %v682
  %v684 = vpop.f32.mrb[0].mxu0
  %685 = vdwg.mxu0
  %686 = vrot.lane.b32.xlu0 %v282, 96
  %v687 = vpop.permute.xlu0 %686
  %688 = vrot.lane.b32.xlu0 %v284, 96
  %v689 = vpop.permute.xlu0 %688
  %v690 = vsel %vm341, %v282, 0
  %v692 = vsel %vm341, %v284, 0
  %v694 = vsel %vm341, %v687, 0
  %v696 = vsel %vm341, %v689, 0
  %698 = vmatprep.subr.mxu0 0.0
  %699 = vmatpush1.xpose.msra.mxu0 %v694
  %700 = vmatprep.subr.mxu0 0.0
  %701 = vmatpush1.xpose.msra.mxu0 %v696
  %702 = vmatprep.subr.mxu0 0.0
  %703 = vmatpush1.xpose.msra.mxu0 0.0
  %704 = vmatprep.subr.mxu0 0.0
  %705 = vmatpush1.xpose.msra.mxu0 0.0
  %706 = vmatprep.subr.mxu0 0.0
  %707 = vmatpush1.xpose.msra.mxu0 0.0
  %708 = vmatprep.subr.mxu0 0.0
  %709 = vmatpush1.xpose.msra.mxu0 0.0
  %710 = vmatprep.subr.mxu0 0.0
  %711 = vmatpush1.xpose.msra.mxu0 0.0
  %712 = vmatprep.subr.mxu0 0.0
  %713 = vmatpush1.xpose.msra.mxu0 0.0
  %714 = vmatprep.subr.mxu0 0.0
  %715 = vmatpush1.xpose.msra.mxu0 0.0
  %716 = vmatprep.subr.mxu0 0.0
  %717 = vmatpush1.xpose.msra.mxu0 0.0
  %718 = vmatprep.subr.mxu0 0.0
  %719 = vmatpush1.xpose.msra.mxu0 0.0
  %720 = vmatprep.subr.mxu0 0.0
  %721 = vmatpush1.xpose.msra.mxu0 0.0
  %722 = vmatprep.subr.mxu0 0.0
  %723 = vmatpush1.xpose.msra.mxu0 0.0
  %724 = vmatprep.subr.mxu0 0.0
  %725 = vmatpush1.xpose.msra.mxu0 0.0
  %726 = vmatprep.subr.mxu0 0.0
  %727 = vmatpush1.xpose.msra.mxu0 0.0
  %728 = vmatprep.subr.mxu0 0.0
  %729 = vmatpush1.xpose.msra.mxu0 0.0
  %730 = vmatprep.subr.mxu0 0.0
  %731 = vmatpush1.xpose.msra.mxu0 0.0
  %732 = vmatprep.subr.mxu0 0.0
  %733 = vmatpush1.xpose.msra.mxu0 0.0
  %734 = vmatprep.subr.mxu0 0.0
  %735 = vmatpush1.xpose.msra.mxu0 0.0
  %736 = vmatprep.subr.mxu0 0.0
  %737 = vmatpush1.xpose.msra.mxu0 0.0
  %738 = vmatprep.subr.mxu0 0.0
  %739 = vmatpush1.xpose.msra.mxu0 0.0
  %740 = vmatprep.subr.mxu0 0.0
  %741 = vmatpush1.xpose.msra.mxu0 0.0
  %742 = vmatprep.subr.mxu0 0.0
  %743 = vmatpush1.xpose.msra.mxu0 0.0
  %744 = vmatprep.subr.mxu0 0.0
  %745 = vmatpush1.xpose.msra.mxu0 0.0
  %746 = vmatprep.subr.mxu0 0.0
  %747 = vmatpush1.xpose.msra.mxu0 0.0
  %748 = vmatprep.subr.mxu0 0.0
  %749 = vmatpush1.xpose.msra.mxu0 0.0
  %750 = vmatprep.subr.mxu0 0.0
  %751 = vmatpush1.xpose.msra.mxu0 0.0
  %752 = vmatprep.subr.mxu0 0.0
  %753 = vmatpush1.xpose.msra.mxu0 0.0
  %754 = vmatprep.subr.mxu0 0.0
  %755 = vmatpush1.xpose.msra.mxu0 0.0
  %756 = vmatprep.subr.mxu0 0.0
  %757 = vmatpush1.xpose.msra.mxu0 0.0
  %758 = vmatprep.subr.mxu0 0.0
  %759 = vmatpush1.xpose.msra.mxu0 0.0
  %760 = vmatprep.subr.mxu0 0.0
  %761 = vmatpush1.xpose.msra.mxu0 0.0
  %762 = vmatprep.mubr.f32.mxu0 0.0
  %763 = vmatmul.mubr.f32.gmra.mrb[0].mxu0 %v690
  %v764 = vpop.f32.mrb[0].mxu0
  %v765 = vadd.f32 0.0, %v764
  %v766 = vpop.f32.mrb[0].mxu0
  %767 = vmatprep.mubr.f32.mxu0 0.0
  %768 = vmatmul.mubr.f32.gmra.mrb[0].mxu0 %v692
  %v769 = vpop.f32.mrb[0].mxu0
  %v770 = vadd.f32 0.0, %v769
  %v771 = vpop.f32.mrb[0].mxu0
  %772 = vdwg.mxu0
  %773 = vrot.lane.b32.xlu0 %v286, 96
  %v774 = vpop.permute.xlu0 %773
  %775 = vrot.lane.b32.xlu0 %v288, 96
  %v776 = vpop.permute.xlu0 %775
  %v777 = vsel %vm341, %v286, 0
  %v779 = vsel %vm341, %v288, 0
  %v781 = vsel %vm341, %v774, 0
  %v783 = vsel %vm341, %v776, 0
  %785 = vmatprep.subr.mxu0 0.0
  %786 = vmatpush1.xpose.msra.mxu0 %v781
  %787 = vmatprep.subr.mxu0 0.0
  %788 = vmatpush1.xpose.msra.mxu0 %v783
  %789 = vmatprep.subr.mxu0 0.0
  %790 = vmatpush1.xpose.msra.mxu0 0.0
  %791 = vmatprep.subr.mxu0 0.0
  %792 = vmatpush1.xpose.msra.mxu0 0.0
  %793 = vmatprep.subr.mxu0 0.0
  %794 = vmatpush1.xpose.msra.mxu0 0.0
  %795 = vmatprep.subr.mxu0 0.0
  %796 = vmatpush1.xpose.msra.mxu0 0.0
  %797 = vmatprep.subr.mxu0 0.0
  %798 = vmatpush1.xpose.msra.mxu0 0.0
  %799 = vmatprep.subr.mxu0 0.0
  %800 = vmatpush1.xpose.msra.mxu0 0.0
  %801 = vmatprep.subr.mxu0 0.0
  %802 = vmatpush1.xpose.msra.mxu0 0.0
  %803 = vmatprep.subr.mxu0 0.0
  %804 = vmatpush1.xpose.msra.mxu0 0.0
  %805 = vmatprep.subr.mxu0 0.0
  %806 = vmatpush1.xpose.msra.mxu0 0.0
  %807 = vmatprep.subr.mxu0 0.0
  %808 = vmatpush1.xpose.msra.mxu0 0.0
  %809 = vmatprep.subr.mxu0 0.0
  %810 = vmatpush1.xpose.msra.mxu0 0.0
  %811 = vmatprep.subr.mxu0 0.0
  %812 = vmatpush1.xpose.msra.mxu0 0.0
  %813 = vmatprep.subr.mxu0 0.0
  %814 = vmatpush1.xpose.msra.mxu0 0.0
  %815 = vmatprep.subr.mxu0 0.0
  %816 = vmatpush1.xpose.msra.mxu0 0.0
  %817 = vmatprep.subr.mxu0 0.0
  %818 = vmatpush1.xpose.msra.mxu0 0.0
  %819 = vmatprep.subr.mxu0 0.0
  %820 = vmatpush1.xpose.msra.mxu0 0.0
  %821 = vmatprep.subr.mxu0 0.0
  %822 = vmatpush1.xpose.msra.mxu0 0.0
  %823 = vmatprep.subr.mxu0 0.0
  %824 = vmatpush1.xpose.msra.mxu0 0.0
  %825 = vmatprep.subr.mxu0 0.0
  %826 = vmatpush1.xpose.msra.mxu0 0.0
  %827 = vmatprep.subr.mxu0 0.0
  %828 = vmatpush1.xpose.msra.mxu0 0.0
  %829 = vmatprep.subr.mxu0 0.0
  %830 = vmatpush1.xpose.msra.mxu0 0.0
  %831 = vmatprep.subr.mxu0 0.0
  %832 = vmatpush1.xpose.msra.mxu0 0.0
  %833 = vmatprep.subr.mxu0 0.0
  %834 = vmatpush1.xpose.msra.mxu0 0.0
  %835 = vmatprep.subr.mxu0 0.0
  %836 = vmatpush1.xpose.msra.mxu0 0.0
  %837 = vmatprep.subr.mxu0 0.0
  %838 = vmatpush1.xpose.msra.mxu0 0.0
  %839 = vmatprep.subr.mxu0 0.0
  %840 = vmatpush1.xpose.msra.mxu0 0.0
  %841 = vmatprep.subr.mxu0 0.0
  %842 = vmatpush1.xpose.msra.mxu0 0.0
  %843 = vmatprep.subr.mxu0 0.0
  %844 = vmatpush1.xpose.msra.mxu0 0.0
  %845 = vmatprep.subr.mxu0 0.0
  %846 = vmatpush1.xpose.msra.mxu0 0.0
  %847 = vmatprep.subr.mxu0 0.0
  %848 = vmatpush1.xpose.msra.mxu0 0.0
  %849 = vmatprep.mubr.f32.mxu0 0.0
  %850 = vmatmul.mubr.f32.gmra.mrb[0].mxu0 %v777
  %v851 = vpop.f32.mrb[0].mxu0
  %v852 = vadd.f32 0.0, %v851
  %v853 = vpop.f32.mrb[0].mxu0
  %854 = vmatprep.mubr.f32.mxu0 0.0
  %855 = vmatmul.mubr.f32.gmra.mrb[0].mxu0 %v779
  %v856 = vpop.f32.mrb[0].mxu0
  %v857 = vadd.f32 0.0, %v856
  %v858 = vpop.f32.mrb[0].mxu0
  %859 = vdwg.mxu0
  %860 = vrot.lane.b32.xlu0 %v290, 96
  %v861 = vpop.permute.xlu0 %860
  %862 = vrot.lane.b32.xlu0 %v292, 96
  %v863 = vpop.permute.xlu0 %862
  %v864 = vsel %vm341, %v290, 0
  %v866 = vsel %vm341, %v292, 0
  %v868 = vsel %vm341, %v861, 0
  %v870 = vsel %vm341, %v863, 0
  %872 = vmatprep.subr.mxu0 0.0
  %873 = vmatpush1.xpose.msra.mxu0 %v868
  %874 = vmatprep.subr.mxu0 0.0
  %875 = vmatpush1.xpose.msra.mxu0 %v870
  %876 = vmatprep.subr.mxu0 0.0
  %877 = vmatpush1.xpose.msra.mxu0 0.0
  %878 = vmatprep.subr.mxu0 0.0
  %879 = vmatpush1.xpose.msra.mxu0 0.0
  %880 = vmatprep.subr.mxu0 0.0
  %881 = vmatpush1.xpose.msra.mxu0 0.0
  %882 = vmatprep.subr.mxu0 0.0
  %883 = vmatpush1.xpose.msra.mxu0 0.0
  %884 = vmatprep.subr.mxu0 0.0
  %885 = vmatpush1.xpose.msra.mxu0 0.0
  %886 = vmatprep.subr.mxu0 0.0
  %887 = vmatpush1.xpose.msra.mxu0 0.0
  %888 = vmatprep.subr.mxu0 0.0
  %889 = vmatpush1.xpose.msra.mxu0 0.0
  %890 = vmatprep.subr.mxu0 0.0
  %891 = vmatpush1.xpose.msra.mxu0 0.0
  %892 = vmatprep.subr.mxu0 0.0
  %893 = vmatpush1.xpose.msra.mxu0 0.0
  %894 = vmatprep.subr.mxu0 0.0
  %895 = vmatpush1.xpose.msra.mxu0 0.0
  %896 = vmatprep.subr.mxu0 0.0
  %897 = vmatpush1.xpose.msra.mxu0 0.0
  %898 = vmatprep.subr.mxu0 0.0
  %899 = vmatpush1.xpose.msra.mxu0 0.0
  %900 = vmatprep.subr.mxu0 0.0
  %901 = vmatpush1.xpose.msra.mxu0 0.0
  %902 = vmatprep.subr.mxu0 0.0
  %903 = vmatpush1.xpose.msra.mxu0 0.0
  %904 = vmatprep.subr.mxu0 0.0
  %905 = vmatpush1.xpose.msra.mxu0 0.0
  %906 = vmatprep.subr.mxu0 0.0
  %907 = vmatpush1.xpose.msra.mxu0 0.0
  %908 = vmatprep.subr.mxu0 0.0
  %909 = vmatpush1.xpose.msra.mxu0 0.0
  %910 = vmatprep.subr.mxu0 0.0
  %911 = vmatpush1.xpose.msra.mxu0 0.0
  %912 = vmatprep.subr.mxu0 0.0
  %913 = vmatpush1.xpose.msra.mxu0 0.0
  %914 = vmatprep.subr.mxu0 0.0
  %915 = vmatpush1.xpose.msra.mxu0 0.0
  %916 = vmatprep.subr.mxu0 0.0
  %917 = vmatpush1.xpose.msra.mxu0 0.0
  %918 = vmatprep.subr.mxu0 0.0
  %919 = vmatpush1.xpose.msra.mxu0 0.0
  %920 = vmatprep.subr.mxu0 0.0
  %921 = vmatpush1.xpose.msra.mxu0 0.0
  %922 = vmatprep.subr.mxu0 0.0
  %923 = vmatpush1.xpose.msra.mxu0 0.0
  %924 = vmatprep.subr.mxu0 0.0
  %925 = vmatpush1.xpose.msra.mxu0 0.0
  %926 = vmatprep.subr.mxu0 0.0
  %927 = vmatpush1.xpose.msra.mxu0 0.0
  %928 = vmatprep.subr.mxu0 0.0
  %929 = vmatpush1.xpose.msra.mxu0 0.0
  %930 = vmatprep.subr.mxu0 0.0
  %931 = vmatpush1.xpose.msra.mxu0 0.0
  %932 = vmatprep.subr.mxu0 0.0
  %933 = vmatpush1.xpose.msra.mxu0 0.0
  %934 = vmatprep.subr.mxu0 0.0
  %935 = vmatpush1.xpose.msra.mxu0 0.0
  %936 = vmatprep.mubr.f32.mxu0 0.0
  %937 = vmatmul.mubr.f32.gmra.mrb[0].mxu0 %v864
  %v938 = vpop.f32.mrb[0].mxu0
  %v939 = vadd.f32 0.0, %v938
  %v940 = vpop.f32.mrb[0].mxu0
  %941 = vmatprep.mubr.f32.mxu0 0.0
  %942 = vmatmul.mubr.f32.gmra.mrb[0].mxu0 %v866
  %v943 = vpop.f32.mrb[0].mxu0
  %v944 = vadd.f32 0.0, %v943
  %v945 = vpop.f32.mrb[0].mxu0
  %946 = vdwg.mxu0
  %947 = vrot.lane.b32.xlu0 %v294, 96
  %v948 = vpop.permute.xlu0 %947
  %949 = vrot.lane.b32.xlu0 %v296, 96
  %v950 = vpop.permute.xlu0 %949
  %v951 = vsel %vm341, %v294, 0
  %v953 = vsel %vm341, %v296, 0
  %v955 = vsel %vm341, %v948, 0
  %v957 = vsel %vm341, %v950, 0
  %959 = vmatprep.subr.mxu0 0.0
  %960 = vmatpush1.xpose.msra.mxu0 %v955
  %961 = vmatprep.subr.mxu0 0.0
  %962 = vmatpush1.xpose.msra.mxu0 %v957
  %963 = vmatprep.subr.mxu0 0.0
  %964 = vmatpush1.xpose.msra.mxu0 0.0
  %965 = vmatprep.subr.mxu0 0.0
  %966 = vmatpush1.xpose.msra.mxu0 0.0
  %967 = vmatprep.subr.mxu0 0.0
  %968 = vmatpush1.xpose.msra.mxu0 0.0
  %969 = vmatprep.subr.mxu0 0.0
  %970 = vmatpush1.xpose.msra.mxu0 0.0
  %971 = vmatprep.subr.mxu0 0.0
  %972 = vmatpush1.xpose.msra.mxu0 0.0
  %973 = vmatprep.subr.mxu0 0.0
  %974 = vmatpush1.xpose.msra.mxu0 0.0
  %975 = vmatprep.subr.mxu0 0.0
  %976 = vmatpush1.xpose.msra.mxu0 0.0
  %977 = vmatprep.subr.mxu0 0.0
  %978 = vmatpush1.xpose.msra.mxu0 0.0
  %979 = vmatprep.subr.mxu0 0.0
  %980 = vmatpush1.xpose.msra.mxu0 0.0
  %981 = vmatprep.subr.mxu0 0.0
  %982 = vmatpush1.xpose.msra.mxu0 0.0
  %983 = vmatprep.subr.mxu0 0.0
  %984 = vmatpush1.xpose.msra.mxu0 0.0
  %985 = vmatprep.subr.mxu0 0.0
  %986 = vmatpush1.xpose.msra.mxu0 0.0
  %987 = vmatprep.subr.mxu0 0.0
  %988 = vmatpush1.xpose.msra.mxu0 0.0
  %989 = vmatprep.subr.mxu0 0.0
  %990 = vmatpush1.xpose.msra.mxu0 0.0
  %991 = vmatprep.subr.mxu0 0.0
  %992 = vmatpush1.xpose.msra.mxu0 0.0
  %993 = vmatprep.subr.mxu0 0.0
  %994 = vmatpush1.xpose.msra.mxu0 0.0
  %995 = vmatprep.subr.mxu0 0.0
  %996 = vmatpush1.xpose.msra.mxu0 0.0
  %997 = vmatprep.subr.mxu0 0.0
  %998 = vmatpush1.xpose.msra.mxu0 0.0
  %999 = vmatprep.subr.mxu0 0.0
  %1000 = vmatpush1.xpose.msra.mxu0 0.0
  %1001 = vmatprep.subr.mxu0 0.0
  %1002 = vmatpush1.xpose.msra.mxu0 0.0
  %1003 = vmatprep.subr.mxu0 0.0
  %1004 = vmatpush1.xpose.msra.mxu0 0.0
  %1005 = vmatprep.subr.mxu0 0.0
  %1006 = vmatpush1.xpose.msra.mxu0 0.0
  %1007 = vmatprep.subr.mxu0 0.0
  %1008 = vmatpush1.xpose.msra.mxu0 0.0
  %1009 = vmatprep.subr.mxu0 0.0
  %1010 = vmatpush1.xpose.msra.mxu0 0.0
  %1011 = vmatprep.subr.mxu0 0.0
  %1012 = vmatpush1.xpose.msra.mxu0 0.0
  %1013 = vmatprep.subr.mxu0 0.0
  %1014 = vmatpush1.xpose.msra.mxu0 0.0
  %1015 = vmatprep.subr.mxu0 0.0
  %1016 = vmatpush1.xpose.msra.mxu0 0.0
  %1017 = vmatprep.subr.mxu0 0.0
  %1018 = vmatpush1.xpose.msra.mxu0 0.0
  %1019 = vmatprep.subr.mxu0 0.0
  %1020 = vmatpush1.xpose.msra.mxu0 0.0
  %1021 = vmatprep.subr.mxu0 0.0
  %1022 = vmatpush1.xpose.msra.mxu0 0.0
  %1023 = vmatprep.mubr.f32.mxu0 0.0
  %1024 = vmatmul.mubr.f32.gmra.mrb[0].mxu0 %v951
  %v1025 = vpop.f32.mrb[0].mxu0
  %v1026 = vadd.f32 0.0, %v1025
  %v1027 = vpop.f32.mrb[0].mxu0
  %1028 = vmatprep.mubr.f32.mxu0 0.0
  %1029 = vmatmul.mubr.f32.gmra.mrb[0].mxu0 %v953
  %v1030 = vpop.f32.mrb[0].mxu0
  %v1031 = vadd.f32 0.0, %v1030
  %v1032 = vpop.f32.mrb[0].mxu0
  %1033 = vdwg.mxu0
  %vm1034 = vcmask 130048
  %v1035 = vsel %vm1034, %v417, -inf
  %1036 = vmax.xlane.f32.xlu0 %v1035
  %v1037 = vpop.xlane.xlu0 %1036
  %v1038 = vsel %vm1034, %v422, -inf
  %1039 = vmax.xlane.f32.xlu0 %v1038
  %v1040 = vpop.xlane.xlu0 %1039
  %v1041 = vsel %vm1034, %v504, -inf
  %1042 = vmax.xlane.f32.xlu0 %v1041
  %v1043 = vpop.xlane.xlu0 %1042
  %v1044 = vsel %vm1034, %v509, -inf
  %1045 = vmax.xlane.f32.xlu0 %v1044
  %v1046 = vpop.xlane.xlu0 %1045
  %v1047 = vsel %vm1034, %v591, -inf
  %1048 = vmax.xlane.f32.xlu0 %v1047
  %v1049 = vpop.xlane.xlu0 %1048
  %v1050 = vsel %vm1034, %v596, -inf
  %1051 = vmax.xlane.f32.xlu0 %v1050
  %v1052 = vpop.xlane.xlu0 %1051
  %v1053 = vsel %vm1034, %v678, -inf
  %1054 = vmax.xlane.f32.xlu0 %v1053
  %v1055 = vpop.xlane.xlu0 %1054
  %v1056 = vsel %vm1034, %v683, -inf
  %1057 = vmax.xlane.f32.xlu0 %v1056
  %v1058 = vpop.xlane.xlu0 %1057
  %v1059 = vsel %vm1034, %v765, -inf
  %1060 = vmax.xlane.f32.xlu0 %v1059
  %v1061 = vpop.xlane.xlu0 %1060
  %v1062 = vsel %vm1034, %v770, -inf
  %1063 = vmax.xlane.f32.xlu0 %v1062
  %v1064 = vpop.xlane.xlu0 %1063
  %v1065 = vsel %vm1034, %v852, -inf
  %1066 = vmax.xlane.f32.xlu0 %v1065
  %v1067 = vpop.xlane.xlu0 %1066
  %v1068 = vsel %vm1034, %v857, -inf
  %1069 = vmax.xlane.f32.xlu0 %v1068
  %v1070 = vpop.xlane.xlu0 %1069
  %v1071 = vsel %vm1034, %v939, -inf
  %1072 = vmax.xlane.f32.xlu0 %v1071
  %v1073 = vpop.xlane.xlu0 %1072
  %v1074 = vsel %vm1034, %v944, -inf
  %1075 = vmax.xlane.f32.xlu0 %v1074
  %v1076 = vpop.xlane.xlu0 %1075
  %v1077 = vsel %vm1034, %v1026, -inf
  %1078 = vmax.xlane.f32.xlu0 %v1077
  %v1079 = vpop.xlane.xlu0 %1078
  %v1080 = vsel %vm1034, %v1031, -inf
  %1081 = vmax.xlane.f32.xlu0 %v1080
  %v1082 = vpop.xlane.xlu0 %1081
  %v1083 = vsub.f32 %v417, %v1037
  %v1084 = vsub.f32 %v422, %v1040
  %v1085 = vsub.f32 %v504, %v1043
  %v1086 = vsub.f32 %v509, %v1046
  %v1087 = vsub.f32 %v591, %v1049
  %v1088 = vsub.f32 %v596, %v1052
  %v1089 = vsub.f32 %v678, %v1055
  %v1090 = vsub.f32 %v683, %v1058
  %v1091 = vsub.f32 %v765, %v1061
  %v1092 = vsub.f32 %v770, %v1064
  %v1093 = vsub.f32 %v852, %v1067
  %v1094 = vsub.f32 %v857, %v1070
  %v1095 = vsub.f32 %v939, %v1073
  %v1096 = vsub.f32 %v944, %v1076
  %v1097 = vsub.f32 %v1026, %v1079
  %v1098 = vsub.f32 %v1031, %v1082
  %v1099 = vmul.f32 %v1083, 1.442695
  %v1100 = vpow.pop %v1099
  %v1101 = vmul.f32 %v1084, 1.442695
  %v1102 = vpow.pop %v1101
  %v1103 = vmul.f32 %v1085, 1.442695
  %v1104 = vpow.pop %v1103
  %v1105 = vmul.f32 %v1086, 1.442695
  %v1106 = vpow.pop %v1105
  %v1107 = vmul.f32 %v1087, 1.442695
  %v1108 = vpow.pop %v1107
  %v1109 = vmul.f32 %v1088, 1.442695
  %v1110 = vpow.pop %v1109
  %v1111 = vmul.f32 %v1089, 1.442695
  %v1112 = vpow.pop %v1111
  %v1113 = vmul.f32 %v1090, 1.442695
  %v1114 = vpow.pop %v1113
  %v1115 = vmul.f32 %v1091, 1.442695
  %v1116 = vpow.pop %v1115
  %v1117 = vmul.f32 %v1092, 1.442695
  %v1118 = vpow.pop %v1117
  %v1119 = vmul.f32 %v1093, 1.442695
  %v1120 = vpow.pop %v1119
  %v1121 = vmul.f32 %v1094, 1.442695
  %v1122 = vpow.pop %v1121
  %v1123 = vmul.f32 %v1095, 1.442695
  %v1124 = vpow.pop %v1123
  %v1125 = vmul.f32 %v1096, 1.442695
  %v1126 = vpow.pop %v1125
  %v1127 = vmul.f32 %v1097, 1.442695
  %v1128 = vpow.pop %v1127
  %v1129 = vmul.f32 %v1098, 1.442695
  %v1130 = vpow.pop %v1129
  %v1131 = vsel %vm1034, %v1100, 0.0
  %1132 = vadd.xlane.f32.xlu0 %v1131
  %v1133 = vpop.xlane.xlu0 %1132
  %v1134 = vsel %vm1034, %v1102, 0.0
  %1135 = vadd.xlane.f32.xlu0 %v1134
  %v1136 = vpop.xlane.xlu0 %1135
  %v1137 = vsel %vm1034, %v1104, 0.0
  %1138 = vadd.xlane.f32.xlu0 %v1137
  %v1139 = vpop.xlane.xlu0 %1138
  %v1140 = vsel %vm1034, %v1106, 0.0
  %1141 = vadd.xlane.f32.xlu0 %v1140
  %v1142 = vpop.xlane.xlu0 %1141
  %v1143 = vsel %vm1034, %v1108, 0.0
  %1144 = vadd.xlane.f32.xlu0 %v1143
  %v1145 = vpop.xlane.xlu0 %1144
  %v1146 = vsel %vm1034, %v1110, 0.0
  %1147 = vadd.xlane.f32.xlu0 %v1146
  %v1148 = vpop.xlane.xlu0 %1147
  %v1149 = vsel %vm1034, %v1112, 0.0
  %1150 = vadd.xlane.f32.xlu0 %v1149
  %v1151 = vpop.xlane.xlu0 %1150
  %v1152 = vsel %vm1034, %v1114, 0.0
  %1153 = vadd.xlane.f32.xlu0 %v1152
  %v1154 = vpop.xlane.xlu0 %1153
  %v1155 = vsel %vm1034, %v1116, 0.0
  %1156 = vadd.xlane.f32.xlu0 %v1155
  %v1157 = vpop.xlane.xlu0 %1156
  %v1158 = vsel %vm1034, %v1118, 0.0
  %1159 = vadd.xlane.f32.xlu0 %v1158
  %v1160 = vpop.xlane.xlu0 %1159
  %v1161 = vsel %vm1034, %v1120, 0.0
  %1162 = vadd.xlane.f32.xlu0 %v1161
  %v1163 = vpop.xlane.xlu0 %1162
  %v1164 = vsel %vm1034, %v1122, 0.0
  %1165 = vadd.xlane.f32.xlu0 %v1164
  %v1166 = vpop.xlane.xlu0 %1165
  %v1167 = vsel %vm1034, %v1124, 0.0
  %1168 = vadd.xlane.f32.xlu0 %v1167
  %v1169 = vpop.xlane.xlu0 %1168
  %v1170 = vsel %vm1034, %v1126, 0.0
  %1171 = vadd.xlane.f32.xlu0 %v1170
  %v1172 = vpop.xlane.xlu0 %1171
  %v1173 = vsel %vm1034, %v1128, 0.0
  %1174 = vadd.xlane.f32.xlu0 %v1173
  %v1175 = vpop.xlane.xlu0 %1174
  %v1176 = vsel %vm1034, %v1130, 0.0
  %1177 = vadd.xlane.f32.xlu0 %v1176
  %v1178 = vpop.xlane.xlu0 %1177
  %v1179 = vrcp.pop %v1133
  %v1180 = vrcp.pop %v1136
  %v1181 = vrcp.pop %v1139
  %v1182 = vrcp.pop %v1142
  %v1183 = vrcp.pop %v1145
  %v1184 = vrcp.pop %v1148
  %v1185 = vrcp.pop %v1151
  %v1186 = vrcp.pop %v1154
  %v1187 = vrcp.pop %v1157
  %v1188 = vrcp.pop %v1160
  %v1189 = vrcp.pop %v1163
  %v1190 = vrcp.pop %v1166
  %v1191 = vrcp.pop %v1169
  %v1192 = vrcp.pop %v1172
  %v1193 = vrcp.pop %v1175
  %v1194 = vrcp.pop %v1178
  %v1195 = vmul.f32 %v1100, %v1179
  %v1196 = vmul.f32 %v1102, %v1180
  %v1197 = vmul.f32 %v1104, %v1181
  %v1198 = vmul.f32 %v1106, %v1182
  %v1199 = vmul.f32 %v1108, %v1183
  %v1200 = vmul.f32 %v1110, %v1184
  %v1201 = vmul.f32 %v1112, %v1185
  %v1202 = vmul.f32 %v1114, %v1186
  %v1203 = vmul.f32 %v1116, %v1187
  %v1204 = vmul.f32 %v1118, %v1188
  %v1205 = vmul.f32 %v1120, %v1189
  %v1206 = vmul.f32 %v1122, %v1190
  %v1207 = vmul.f32 %v1124, %v1191
  %v1208 = vmul.f32 %v1126, %v1192
  %v1209 = vmul.f32 %v1128, %v1193
  %v1210 = vmul.f32 %v1130, %v1194
  %v1212 = vsel %vm1034, %v1195, 0
  %v1215 = vsel %vm1034, %v1196, 0
  %1217 = vmatprep.subr.mxu0 0.0
  %1218 = vmatpush1.msra.mxu0 %v251
  %1219 = vmatprep.subr.mxu0 0.0
  %1220 = vmatpush1.msra.mxu0 %v256
  %1221 = vmatprep.subr.mxu0 0.0
  %1222 = vmatpush1.msra.mxu0 0.0
  %1223 = vmatprep.subr.mxu0 0.0
  %1224 = vmatpush1.msra.mxu0 0.0
  %1225 = vmatprep.subr.mxu0 0.0
  %1226 = vmatpush1.msra.mxu0 0.0
  %1227 = vmatprep.subr.mxu0 0.0
  %1228 = vmatpush1.msra.mxu0 0.0
  %1229 = vmatprep.subr.mxu0 0.0
  %1230 = vmatpush1.msra.mxu0 0.0
  %1231 = vmatprep.subr.mxu0 0.0
  %1232 = vmatpush1.msra.mxu0 0.0
  %1233 = vmatprep.subr.mxu0 0.0
  %1234 = vmatpush1.msra.mxu0 0.0
  %1235 = vmatprep.subr.mxu0 0.0
  %1236 = vmatpush1.msra.mxu0 0.0
  %1237 = vmatprep.subr.mxu0 0.0
  %1238 = vmatpush1.msra.mxu0 0.0
  %1239 = vmatprep.subr.mxu0 0.0
  %1240 = vmatpush1.msra.mxu0 0.0
  %1241 = vmatprep.subr.mxu0 0.0
  %1242 = vmatpush1.msra.mxu0 0.0
  %1243 = vmatprep.subr.mxu0 0.0
  %1244 = vmatpush1.msra.mxu0 0.0
  %1245 = vmatprep.subr.mxu0 0.0
  %1246 = vmatpush1.msra.mxu0 0.0
  %1247 = vmatprep.subr.mxu0 0.0
  %1248 = vmatpush1.msra.mxu0 0.0
  %1249 = vmatprep.subr.mxu0 0.0
  %1250 = vmatpush1.msra.mxu0 0.0
  %1251 = vmatprep.subr.mxu0 0.0
  %1252 = vmatpush1.msra.mxu0 0.0
  %1253 = vmatprep.subr.mxu0 0.0
  %1254 = vmatpush1.msra.mxu0 0.0
  %1255 = vmatprep.subr.mxu0 0.0
  %1256 = vmatpush1.msra.mxu0 0.0
  %1257 = vmatprep.subr.mxu0 0.0
  %1258 = vmatpush1.msra.mxu0 0.0
  %1259 = vmatprep.subr.mxu0 0.0
  %1260 = vmatpush1.msra.mxu0 0.0
  %1261 = vmatprep.subr.mxu0 0.0
  %1262 = vmatpush1.msra.mxu0 0.0
  %1263 = vmatprep.subr.mxu0 0.0
  %1264 = vmatpush1.msra.mxu0 0.0
  %1265 = vmatprep.subr.mxu0 0.0
  %1266 = vmatpush1.msra.mxu0 0.0
  %1267 = vmatprep.subr.mxu0 0.0
  %1268 = vmatpush1.msra.mxu0 0.0
  %1269 = vmatprep.subr.mxu0 0.0
  %1270 = vmatpush1.msra.mxu0 0.0
  %1271 = vmatprep.subr.mxu0 0.0
  %1272 = vmatpush1.msra.mxu0 0.0
  %1273 = vmatprep.subr.mxu0 0.0
  %1274 = vmatpush1.msra.mxu0 0.0
  %1275 = vmatprep.subr.mxu0 0.0
  %1276 = vmatpush1.msra.mxu0 0.0
  %1277 = vmatprep.subr.mxu0 0.0
  %1278 = vmatpush1.msra.mxu0 0.0
  %1279 = vmatprep.subr.mxu0 0.0
  %1280 = vmatpush1.msra.mxu0 0.0
  %1281 = vmatprep.mubr.f32.mxu0 0.0
  %1282 = vmatmul.mubr.f32.gmra.mrb[0].mxu0 %v1212
  %v1283 = vpop.f32.mrb[0].mxu0
  %v1284 = vadd.f32 0.0, %v1283
  %v1285 = vpop.f32.mrb[0].mxu0
  %1286 = vmatprep.mubr.f32.mxu0 0.0
  %1287 = vmatmul.mubr.f32.gmra.mrb[0].mxu0 %v1215
  %v1288 = vpop.f32.mrb[0].mxu0
  %v1289 = vadd.f32 0.0, %v1288
  %v1290 = vpop.f32.mrb[0].mxu0
  %1291 = vdwg.mxu0
  %v1293 = vsel %vm1034, %v1197, 0
  %v1296 = vsel %vm1034, %v1198, 0
  %1298 = vmatprep.subr.mxu0 0.0
  %1299 = vmatpush1.msra.mxu0 %v261
  %1300 = vmatprep.subr.mxu0 0.0
  %1301 = vmatpush1.msra.mxu0 %v266
  %1302 = vmatprep.subr.mxu0 0.0
  %1303 = vmatpush1.msra.mxu0 0.0
  %1304 = vmatprep.subr.mxu0 0.0
  %1305 = vmatpush1.msra.mxu0 0.0
  %1306 = vmatprep.subr.mxu0 0.0
  %1307 = vmatpush1.msra.mxu0 0.0
  %1308 = vmatprep.subr.mxu0 0.0
  %1309 = vmatpush1.msra.mxu0 0.0
  %1310 = vmatprep.subr.mxu0 0.0
  %1311 = vmatpush1.msra.mxu0 0.0
  %1312 = vmatprep.subr.mxu0 0.0
  %1313 = vmatpush1.msra.mxu0 0.0
  %1314 = vmatprep.subr.mxu0 0.0
  %1315 = vmatpush1.msra.mxu0 0.0
  %1316 = vmatprep.subr.mxu0 0.0
  %1317 = vmatpush1.msra.mxu0 0.0
  %1318 = vmatprep.subr.mxu0 0.0
  %1319 = vmatpush1.msra.mxu0 0.0
  %1320 = vmatprep.subr.mxu0 0.0
  %1321 = vmatpush1.msra.mxu0 0.0
  %1322 = vmatprep.subr.mxu0 0.0
  %1323 = vmatpush1.msra.mxu0 0.0
  %1324 = vmatprep.subr.mxu0 0.0
  %1325 = vmatpush1.msra.mxu0 0.0
  %1326 = vmatprep.subr.mxu0 0.0
  %1327 = vmatpush1.msra.mxu0 0.0
  %1328 = vmatprep.subr.mxu0 0.0
  %1329 = vmatpush1.msra.mxu0 0.0
  %1330 = vmatprep.subr.mxu0 0.0
  %1331 = vmatpush1.msra.mxu0 0.0
  %1332 = vmatprep.subr.mxu0 0.0
  %1333 = vmatpush1.msra.mxu0 0.0
  %1334 = vmatprep.subr.mxu0 0.0
  %1335 = vmatpush1.msra.mxu0 0.0
  %1336 = vmatprep.subr.mxu0 0.0
  %1337 = vmatpush1.msra.mxu0 0.0
  %1338 = vmatprep.subr.mxu0 0.0
  %1339 = vmatpush1.msra.mxu0 0.0
  %1340 = vmatprep.subr.mxu0 0.0
  %1341 = vmatpush1.msra.mxu0 0.0
  %1342 = vmatprep.subr.mxu0 0.0
  %1343 = vmatpush1.msra.mxu0 0.0
  %1344 = vmatprep.subr.mxu0 0.0
  %1345 = vmatpush1.msra.mxu0 0.0
  %1346 = vmatprep.subr.mxu0 0.0
  %1347 = vmatpush1.msra.mxu0 0.0
  %1348 = vmatprep.subr.mxu0 0.0
  %1349 = vmatpush1.msra.mxu0 0.0
  %1350 = vmatprep.subr.mxu0 0.0
  %1351 = vmatpush1.msra.mxu0 0.0
  %1352 = vmatprep.subr.mxu0 0.0
  %1353 = vmatpush1.msra.mxu0 0.0
  %1354 = vmatprep.subr.mxu0 0.0
  %1355 = vmatpush1.msra.mxu0 0.0
  %1356 = vmatprep.subr.mxu0 0.0
  %1357 = vmatpush1.msra.mxu0 0.0
  %1358 = vmatprep.subr.mxu0 0.0
  %1359 = vmatpush1.msra.mxu0 0.0
  %1360 = vmatprep.subr.mxu0 0.0
  %1361 = vmatpush1.msra.mxu0 0.0
  %1362 = vmatprep.mubr.f32.mxu0 0.0
  %1363 = vmatmul.mubr.f32.gmra.mrb[0].mxu0 %v1293
  %v1364 = vpop.f32.mrb[0].mxu0
  %v1365 = vadd.f32 0.0, %v1364
  %v1366 = vpop.f32.mrb[0].mxu0
  %1367 = vmatprep.mubr.f32.mxu0 0.0
  %1368 = vmatmul.mubr.f32.gmra.mrb[0].mxu0 %v1296
  %v1369 = vpop.f32.mrb[0].mxu0
  %v1370 = vadd.f32 0.0, %v1369
  %v1371 = vpop.f32.mrb[0].mxu0
  %1372 = vdwg.mxu0
  %v1374 = vsel %vm1034, %v1199, 0
  %v1377 = vsel %vm1034, %v1200, 0
  %1379 = vmatprep.subr.mxu0 0.0
  %1380 = vmatpush1.msra.mxu0 %v302
  %1381 = vmatprep.subr.mxu0 0.0
  %1382 = vmatpush1.msra.mxu0 %v304
  %1383 = vmatprep.subr.mxu0 0.0
  %1384 = vmatpush1.msra.mxu0 0.0
  %1385 = vmatprep.subr.mxu0 0.0
  %1386 = vmatpush1.msra.mxu0 0.0
  %1387 = vmatprep.subr.mxu0 0.0
  %1388 = vmatpush1.msra.mxu0 0.0
  %1389 = vmatprep.subr.mxu0 0.0
  %1390 = vmatpush1.msra.mxu0 0.0
  %1391 = vmatprep.subr.mxu0 0.0
  %1392 = vmatpush1.msra.mxu0 0.0
  %1393 = vmatprep.subr.mxu0 0.0
  %1394 = vmatpush1.msra.mxu0 0.0
  %1395 = vmatprep.subr.mxu0 0.0
  %1396 = vmatpush1.msra.mxu0 0.0
  %1397 = vmatprep.subr.mxu0 0.0
  %1398 = vmatpush1.msra.mxu0 0.0
  %1399 = vmatprep.subr.mxu0 0.0
  %1400 = vmatpush1.msra.mxu0 0.0
  %1401 = vmatprep.subr.mxu0 0.0
  %1402 = vmatpush1.msra.mxu0 0.0
  %1403 = vmatprep.subr.mxu0 0.0
  %1404 = vmatpush1.msra.mxu0 0.0
  %1405 = vmatprep.subr.mxu0 0.0
  %1406 = vmatpush1.msra.mxu0 0.0
  %1407 = vmatprep.subr.mxu0 0.0
  %1408 = vmatpush1.msra.mxu0 0.0
  %1409 = vmatprep.subr.mxu0 0.0
  %1410 = vmatpush1.msra.mxu0 0.0
  %1411 = vmatprep.subr.mxu0 0.0
  %1412 = vmatpush1.msra.mxu0 0.0
  %1413 = vmatprep.subr.mxu0 0.0
  %1414 = vmatpush1.msra.mxu0 0.0
  %1415 = vmatprep.subr.mxu0 0.0
  %1416 = vmatpush1.msra.mxu0 0.0
  %1417 = vmatprep.subr.mxu0 0.0
  %1418 = vmatpush1.msra.mxu0 0.0
  %1419 = vmatprep.subr.mxu0 0.0
  %1420 = vmatpush1.msra.mxu0 0.0
  %1421 = vmatprep.subr.mxu0 0.0
  %1422 = vmatpush1.msra.mxu0 0.0
  %1423 = vmatprep.subr.mxu0 0.0
  %1424 = vmatpush1.msra.mxu0 0.0
  %1425 = vmatprep.subr.mxu0 0.0
  %1426 = vmatpush1.msra.mxu0 0.0
  %1427 = vmatprep.subr.mxu0 0.0
  %1428 = vmatpush1.msra.mxu0 0.0
  %1429 = vmatprep.subr.mxu0 0.0
  %1430 = vmatpush1.msra.mxu0 0.0
  %1431 = vmatprep.subr.mxu0 0.0
  %1432 = vmatpush1.msra.mxu0 0.0
  %1433 = vmatprep.subr.mxu0 0.0
  %1434 = vmatpush1.msra.mxu0 0.0
  %1435 = vmatprep.subr.mxu0 0.0
  %1436 = vmatpush1.msra.mxu0 0.0
  %1437 = vmatprep.subr.mxu0 0.0
  %1438 = vmatpush1.msra.mxu0 0.0
  %1439 = vmatprep.subr.mxu0 0.0
  %1440 = vmatpush1.msra.mxu0 0.0
  %1441 = vmatprep.subr.mxu0 0.0
  %1442 = vmatpush1.msra.mxu0 0.0
  %1443 = vmatprep.mubr.f32.mxu0 0.0
  %1444 = vmatmul.mubr.f32.gmra.mrb[0].mxu0 %v1374
  %v1445 = vpop.f32.mrb[0].mxu0
  %v1446 = vadd.f32 0.0, %v1445
  %v1447 = vpop.f32.mrb[0].mxu0
  %1448 = vmatprep.mubr.f32.mxu0 0.0
  %1449 = vmatmul.mubr.f32.gmra.mrb[0].mxu0 %v1377
  %v1450 = vpop.f32.mrb[0].mxu0
  %v1451 = vadd.f32 0.0, %v1450
  %v1452 = vpop.f32.mrb[0].mxu0
  %1453 = vdwg.mxu0
  %v1455 = vsel %vm1034, %v1201, 0
  %v1458 = vsel %vm1034, %v1202, 0
  %1460 = vmatprep.subr.mxu0 0.0
  %1461 = vmatpush1.msra.mxu0 %v306
  %1462 = vmatprep.subr.mxu0 0.0
  %1463 = vmatpush1.msra.mxu0 %v308
  %1464 = vmatprep.subr.mxu0 0.0
  %1465 = vmatpush1.msra.mxu0 0.0
  %1466 = vmatprep.subr.mxu0 0.0
  %1467 = vmatpush1.msra.mxu0 0.0
  %1468 = vmatprep.subr.mxu0 0.0
  %1469 = vmatpush1.msra.mxu0 0.0
  %1470 = vmatprep.subr.mxu0 0.0
  %1471 = vmatpush1.msra.mxu0 0.0
  %1472 = vmatprep.subr.mxu0 0.0
  %1473 = vmatpush1.msra.mxu0 0.0
  %1474 = vmatprep.subr.mxu0 0.0
  %1475 = vmatpush1.msra.mxu0 0.0
  %1476 = vmatprep.subr.mxu0 0.0
  %1477 = vmatpush1.msra.mxu0 0.0
  %1478 = vmatprep.subr.mxu0 0.0
  %1479 = vmatpush1.msra.mxu0 0.0
  %1480 = vmatprep.subr.mxu0 0.0
  %1481 = vmatpush1.msra.mxu0 0.0
  %1482 = vmatprep.subr.mxu0 0.0
  %1483 = vmatpush1.msra.mxu0 0.0
  %1484 = vmatprep.subr.mxu0 0.0
  %1485 = vmatpush1.msra.mxu0 0.0
  %1486 = vmatprep.subr.mxu0 0.0
  %1487 = vmatpush1.msra.mxu0 0.0
  %1488 = vmatprep.subr.mxu0 0.0
  %1489 = vmatpush1.msra.mxu0 0.0
  %1490 = vmatprep.subr.mxu0 0.0
  %1491 = vmatpush1.msra.mxu0 0.0
  %1492 = vmatprep.subr.mxu0 0.0
  %1493 = vmatpush1.msra.mxu0 0.0
  %1494 = vmatprep.subr.mxu0 0.0
  %1495 = vmatpush1.msra.mxu0 0.0
  %1496 = vmatprep.subr.mxu0 0.0
  %1497 = vmatpush1.msra.mxu0 0.0
  %1498 = vmatprep.subr.mxu0 0.0
  %1499 = vmatpush1.msra.mxu0 0.0
  %1500 = vmatprep.subr.mxu0 0.0
  %1501 = vmatpush1.msra.mxu0 0.0
  %1502 = vmatprep.subr.mxu0 0.0
  %1503 = vmatpush1.msra.mxu0 0.0
  %1504 = vmatprep.subr.mxu0 0.0
  %1505 = vmatpush1.msra.mxu0 0.0
  %1506 = vmatprep.subr.mxu0 0.0
  %1507 = vmatpush1.msra.mxu0 0.0
  %1508 = vmatprep.subr.mxu0 0.0
  %1509 = vmatpush1.msra.mxu0 0.0
  %1510 = vmatprep.subr.mxu0 0.0
  %1511 = vmatpush1.msra.mxu0 0.0
  %1512 = vmatprep.subr.mxu0 0.0
  %1513 = vmatpush1.msra.mxu0 0.0
  %1514 = vmatprep.subr.mxu0 0.0
  %1515 = vmatpush1.msra.mxu0 0.0
  %1516 = vmatprep.subr.mxu0 0.0
  %1517 = vmatpush1.msra.mxu0 0.0
  %1518 = vmatprep.subr.mxu0 0.0
  %1519 = vmatpush1.msra.mxu0 0.0
  %1520 = vmatprep.subr.mxu0 0.0
  %1521 = vmatpush1.msra.mxu0 0.0
  %1522 = vmatprep.subr.mxu0 0.0
  %1523 = vmatpush1.msra.mxu0 0.0
  %1524 = vmatprep.mubr.f32.mxu0 0.0
  %1525 = vmatmul.mubr.f32.gmra.mrb[0].mxu0 %v1455
  %v1526 = vpop.f32.mrb[0].mxu0
  %v1527 = vadd.f32 0.0, %v1526
  %v1528 = vpop.f32.mrb[0].mxu0
  %1529 = vmatprep.mubr.f32.mxu0 0.0
  %1530 = vmatmul.mubr.f32.gmra.mrb[0].mxu0 %v1458
  %v1531 = vpop.f32.mrb[0].mxu0
  %v1532 = vadd.f32 0.0, %v1531
  %v1533 = vpop.f32.mrb[0].mxu0
  %1534 = vdwg.mxu0
  %v1536 = vsel %vm1034, %v1203, 0
  %v1539 = vsel %vm1034, %v1204, 0
  %1541 = vmatprep.subr.mxu0 0.0
  %1542 = vmatpush1.msra.mxu0 %v314
  %1543 = vmatprep.subr.mxu0 0.0
  %1544 = vmatpush1.msra.mxu0 %v316
  %1545 = vmatprep.subr.mxu0 0.0
  %1546 = vmatpush1.msra.mxu0 0.0
  %1547 = vmatprep.subr.mxu0 0.0
  %1548 = vmatpush1.msra.mxu0 0.0
  %1549 = vmatprep.subr.mxu0 0.0
  %1550 = vmatpush1.msra.mxu0 0.0
  %1551 = vmatprep.subr.mxu0 0.0
  %1552 = vmatpush1.msra.mxu0 0.0
  %1553 = vmatprep.subr.mxu0 0.0
  %1554 = vmatpush1.msra.mxu0 0.0
  %1555 = vmatprep.subr.mxu0 0.0
  %1556 = vmatpush1.msra.mxu0 0.0
  %1557 = vmatprep.subr.mxu0 0.0
  %1558 = vmatpush1.msra.mxu0 0.0
  %1559 = vmatprep.subr.mxu0 0.0
  %1560 = vmatpush1.msra.mxu0 0.0
  %1561 = vmatprep.subr.mxu0 0.0
  %1562 = vmatpush1.msra.mxu0 0.0
  %1563 = vmatprep.subr.mxu0 0.0
  %1564 = vmatpush1.msra.mxu0 0.0
  %1565 = vmatprep.subr.mxu0 0.0
  %1566 = vmatpush1.msra.mxu0 0.0
  %1567 = vmatprep.subr.mxu0 0.0
  %1568 = vmatpush1.msra.mxu0 0.0
  %1569 = vmatprep.subr.mxu0 0.0
  %1570 = vmatpush1.msra.mxu0 0.0
  %1571 = vmatprep.subr.mxu0 0.0
  %1572 = vmatpush1.msra.mxu0 0.0
  %1573 = vmatprep.subr.mxu0 0.0
  %1574 = vmatpush1.msra.mxu0 0.0
  %1575 = vmatprep.subr.mxu0 0.0
  %1576 = vmatpush1.msra.mxu0 0.0
  %1577 = vmatprep.subr.mxu0 0.0
  %1578 = vmatpush1.msra.mxu0 0.0
  %1579 = vmatprep.subr.mxu0 0.0
  %1580 = vmatpush1.msra.mxu0 0.0
  %1581 = vmatprep.subr.mxu0 0.0
  %1582 = vmatpush1.msra.mxu0 0.0
  %1583 = vmatprep.subr.mxu0 0.0
  %1584 = vmatpush1.msra.mxu0 0.0
  %1585 = vmatprep.subr.mxu0 0.0
  %1586 = vmatpush1.msra.mxu0 0.0
  %1587 = vmatprep.subr.mxu0 0.0
  %1588 = vmatpush1.msra.mxu0 0.0
  %1589 = vmatprep.subr.mxu0 0.0
  %1590 = vmatpush1.msra.mxu0 0.0
  %1591 = vmatprep.subr.mxu0 0.0
  %1592 = vmatpush1.msra.mxu0 0.0
  %1593 = vmatprep.subr.mxu0 0.0
  %1594 = vmatpush1.msra.mxu0 0.0
  %1595 = vmatprep.subr.mxu0 0.0
  %1596 = vmatpush1.msra.mxu0 0.0
  %1597 = vmatprep.subr.mxu0 0.0
  %1598 = vmatpush1.msra.mxu0 0.0
  %1599 = vmatprep.subr.mxu0 0.0
  %1600 = vmatpush1.msra.mxu0 0.0
  %1601 = vmatprep.subr.mxu0 0.0
  %1602 = vmatpush1.msra.mxu0 0.0
  %1603 = vmatprep.subr.mxu0 0.0
  %1604 = vmatpush1.msra.mxu0 0.0
  %1605 = vmatprep.mubr.f32.mxu0 0.0
  %1606 = vmatmul.mubr.f32.gmra.mrb[0].mxu0 %v1536
  %v1607 = vpop.f32.mrb[0].mxu0
  %v1608 = vadd.f32 0.0, %v1607
  %v1609 = vpop.f32.mrb[0].mxu0
  %1610 = vmatprep.mubr.f32.mxu0 0.0
  %1611 = vmatmul.mubr.f32.gmra.mrb[0].mxu0 %v1539
  %v1612 = vpop.f32.mrb[0].mxu0
  %v1613 = vadd.f32 0.0, %v1612
  %v1614 = vpop.f32.mrb[0].mxu0
  %1615 = vdwg.mxu0
  %v1617 = vsel %vm1034, %v1205, 0
  %v1620 = vsel %vm1034, %v1206, 0
  %1622 = vmatprep.subr.mxu0 0.0
  %1623 = vmatpush1.msra.mxu0 %v318
  %1624 = vmatprep.subr.mxu0 0.0
  %1625 = vmatpush1.msra.mxu0 %v320
  %1626 = vmatprep.subr.mxu0 0.0
  %1627 = vmatpush1.msra.mxu0 0.0
  %1628 = vmatprep.subr.mxu0 0.0
  %1629 = vmatpush1.msra.mxu0 0.0
  %1630 = vmatprep.subr.mxu0 0.0
  %1631 = vmatpush1.msra.mxu0 0.0
  %1632 = vmatprep.subr.mxu0 0.0
  %1633 = vmatpush1.msra.mxu0 0.0
  %1634 = vmatprep.subr.mxu0 0.0
  %1635 = vmatpush1.msra.mxu0 0.0
  %1636 = vmatprep.subr.mxu0 0.0
  %1637 = vmatpush1.msra.mxu0 0.0
  %1638 = vmatprep.subr.mxu0 0.0
  %1639 = vmatpush1.msra.mxu0 0.0
  %1640 = vmatprep.subr.mxu0 0.0
  %1641 = vmatpush1.msra.mxu0 0.0
  %1642 = vmatprep.subr.mxu0 0.0
  %1643 = vmatpush1.msra.mxu0 0.0
  %1644 = vmatprep.subr.mxu0 0.0
  %1645 = vmatpush1.msra.mxu0 0.0
  %1646 = vmatprep.subr.mxu0 0.0
  %1647 = vmatpush1.msra.mxu0 0.0
  %1648 = vmatprep.subr.mxu0 0.0
  %1649 = vmatpush1.msra.mxu0 0.0
  %1650 = vmatprep.subr.mxu0 0.0
  %1651 = vmatpush1.msra.mxu0 0.0
  %1652 = vmatprep.subr.mxu0 0.0
  %1653 = vmatpush1.msra.mxu0 0.0
  %1654 = vmatprep.subr.mxu0 0.0
  %1655 = vmatpush1.msra.mxu0 0.0
  %1656 = vmatprep.subr.mxu0 0.0
  %1657 = vmatpush1.msra.mxu0 0.0
  %1658 = vmatprep.subr.mxu0 0.0
  %1659 = vmatpush1.msra.mxu0 0.0
  %1660 = vmatprep.subr.mxu0 0.0
  %1661 = vmatpush1.msra.mxu0 0.0
  %1662 = vmatprep.subr.mxu0 0.0
  %1663 = vmatpush1.msra.mxu0 0.0
  %1664 = vmatprep.subr.mxu0 0.0
  %1665 = vmatpush1.msra.mxu0 0.0
  %1666 = vmatprep.subr.mxu0 0.0
  %1667 = vmatpush1.msra.mxu0 0.0
  %1668 = vmatprep.subr.mxu0 0.0
  %1669 = vmatpush1.msra.mxu0 0.0
  %1670 = vmatprep.subr.mxu0 0.0
  %1671 = vmatpush1.msra.mxu0 0.0
  %1672 = vmatprep.subr.mxu0 0.0
  %1673 = vmatpush1.msra.mxu0 0.0
  %1674 = vmatprep.subr.mxu0 0.0
  %1675 = vmatpush1.msra.mxu0 0.0
  %1676 = vmatprep.subr.mxu0 0.0
  %1677 = vmatpush1.msra.mxu0 0.0
  %1678 = vmatprep.subr.mxu0 0.0
  %1679 = vmatpush1.msra.mxu0 0.0
  %1680 = vmatprep.subr.mxu0 0.0
  %1681 = vmatpush1.msra.mxu0 0.0
  %1682 = vmatprep.subr.mxu0 0.0
  %1683 = vmatpush1.msra.mxu0 0.0
  %1684 = vmatprep.subr.mxu0 0.0
  %1685 = vmatpush1.msra.mxu0 0.0
  %1686 = vmatprep.mubr.f32.mxu0 0.0
  %1687 = vmatmul.mubr.f32.gmra.mrb[0].mxu0 %v1617
  %v1688 = vpop.f32.mrb[0].mxu0
  %v1689 = vadd.f32 0.0, %v1688
  %v1690 = vpop.f32.mrb[0].mxu0
  %1691 = vmatprep.mubr.f32.mxu0 0.0
  %1692 = vmatmul.mubr.f32.gmra.mrb[0].mxu0 %v1620
  %v1693 = vpop.f32.mrb[0].mxu0
  %v1694 = vadd.f32 0.0, %v1693
  %v1695 = vpop.f32.mrb[0].mxu0
  %1696 = vdwg.mxu0
  %v1698 = vsel %vm1034, %v1207, 0
  %v1701 = vsel %vm1034, %v1208, 0
  %1703 = vmatprep.subr.mxu0 0.0
  %1704 = vmatpush1.msra.mxu0 %v326
  %1705 = vmatprep.subr.mxu0 0.0
  %1706 = vmatpush1.msra.mxu0 %v328
  %1707 = vmatprep.subr.mxu0 0.0
  %1708 = vmatpush1.msra.mxu0 0.0
  %1709 = vmatprep.subr.mxu0 0.0
  %1710 = vmatpush1.msra.mxu0 0.0
  %1711 = vmatprep.subr.mxu0 0.0
  %1712 = vmatpush1.msra.mxu0 0.0
  %1713 = vmatprep.subr.mxu0 0.0
  %1714 = vmatpush1.msra.mxu0 0.0
  %1715 = vmatprep.subr.mxu0 0.0
  %1716 = vmatpush1.msra.mxu0 0.0
  %1717 = vmatprep.subr.mxu0 0.0
  %1718 = vmatpush1.msra.mxu0 0.0
  %1719 = vmatprep.subr.mxu0 0.0
  %1720 = vmatpush1.msra.mxu0 0.0
  %1721 = vmatprep.subr.mxu0 0.0
  %1722 = vmatpush1.msra.mxu0 0.0
  %1723 = vmatprep.subr.mxu0 0.0
  %1724 = vmatpush1.msra.mxu0 0.0
  %1725 = vmatprep.subr.mxu0 0.0
  %1726 = vmatpush1.msra.mxu0 0.0
  %1727 = vmatprep.subr.mxu0 0.0
  %1728 = vmatpush1.msra.mxu0 0.0
  %1729 = vmatprep.subr.mxu0 0.0
  %1730 = vmatpush1.msra.mxu0 0.0
  %1731 = vmatprep.subr.mxu0 0.0
  %1732 = vmatpush1.msra.mxu0 0.0
  %1733 = vmatprep.subr.mxu0 0.0
  %1734 = vmatpush1.msra.mxu0 0.0
  %1735 = vmatprep.subr.mxu0 0.0
  %1736 = vmatpush1.msra.mxu0 0.0
  %1737 = vmatprep.subr.mxu0 0.0
  %1738 = vmatpush1.msra.mxu0 0.0
  %1739 = vmatprep.subr.mxu0 0.0
  %1740 = vmatpush1.msra.mxu0 0.0
  %1741 = vmatprep.subr.mxu0 0.0
  %1742 = vmatpush1.msra.mxu0 0.0
  %1743 = vmatprep.subr.mxu0 0.0
  %1744 = vmatpush1.msra.mxu0 0.0
  %1745 = vmatprep.subr.mxu0 0.0
  %1746 = vmatpush1.msra.mxu0 0.0
  %1747 = vmatprep.subr.mxu0 0.0
  %1748 = vmatpush1.msra.mxu0 0.0
  %1749 = vmatprep.subr.mxu0 0.0
  %1750 = vmatpush1.msra.mxu0 0.0
  %1751 = vmatprep.subr.mxu0 0.0
  %1752 = vmatpush1.msra.mxu0 0.0
  %1753 = vmatprep.subr.mxu0 0.0
  %1754 = vmatpush1.msra.mxu0 0.0
  %1755 = vmatprep.subr.mxu0 0.0
  %1756 = vmatpush1.msra.mxu0 0.0
  %1757 = vmatprep.subr.mxu0 0.0
  %1758 = vmatpush1.msra.mxu0 0.0
  %1759 = vmatprep.subr.mxu0 0.0
  %1760 = vmatpush1.msra.mxu0 0.0
  %1761 = vmatprep.subr.mxu0 0.0
  %1762 = vmatpush1.msra.mxu0 0.0
  %1763 = vmatprep.subr.mxu0 0.0
  %1764 = vmatpush1.msra.mxu0 0.0
  %1765 = vmatprep.subr.mxu0 0.0
  %1766 = vmatpush1.msra.mxu0 0.0
  %1767 = vmatprep.mubr.f32.mxu0 0.0
  %1768 = vmatmul.mubr.f32.gmra.mrb[0].mxu0 %v1698
  %v1769 = vpop.f32.mrb[0].mxu0
  %v1770 = vadd.f32 0.0, %v1769
  %v1771 = vpop.f32.mrb[0].mxu0
  %1772 = vmatprep.mubr.f32.mxu0 0.0
  %1773 = vmatmul.mubr.f32.gmra.mrb[0].mxu0 %v1701
  %v1774 = vpop.f32.mrb[0].mxu0
  %v1775 = vadd.f32 0.0, %v1774
  %v1776 = vpop.f32.mrb[0].mxu0
  %1777 = vdwg.mxu0
  %v1779 = vsel %vm1034, %v1209, 0
  %v1782 = vsel %vm1034, %v1210, 0
  %1784 = vmatprep.subr.mxu0 0.0
  %1785 = vmatpush1.msra.mxu0 %v330
  %1786 = vmatprep.subr.mxu0 0.0
  %1787 = vmatpush1.msra.mxu0 %v332
  %1788 = vmatprep.subr.mxu0 0.0
  %1789 = vmatpush1.msra.mxu0 0.0
  %1790 = vmatprep.subr.mxu0 0.0
  %1791 = vmatpush1.msra.mxu0 0.0
  %1792 = vmatprep.subr.mxu0 0.0
  %1793 = vmatpush1.msra.mxu0 0.0
  %1794 = vmatprep.subr.mxu0 0.0
  %1795 = vmatpush1.msra.mxu0 0.0
  %1796 = vmatprep.subr.mxu0 0.0
  %1797 = vmatpush1.msra.mxu0 0.0
  %1798 = vmatprep.subr.mxu0 0.0
  %1799 = vmatpush1.msra.mxu0 0.0
  %1800 = vmatprep.subr.mxu0 0.0
  %1801 = vmatpush1.msra.mxu0 0.0
  %1802 = vmatprep.subr.mxu0 0.0
  %1803 = vmatpush1.msra.mxu0 0.0
  %1804 = vmatprep.subr.mxu0 0.0
  %1805 = vmatpush1.msra.mxu0 0.0
  %1806 = vmatprep.subr.mxu0 0.0
  %1807 = vmatpush1.msra.mxu0 0.0
  %1808 = vmatprep.subr.mxu0 0.0
  %1809 = vmatpush1.msra.mxu0 0.0
  %1810 = vmatprep.subr.mxu0 0.0
  %1811 = vmatpush1.msra.mxu0 0.0
  %1812 = vmatprep.subr.mxu0 0.0
  %1813 = vmatpush1.msra.mxu0 0.0
  %1814 = vmatprep.subr.mxu0 0.0
  %1815 = vmatpush1.msra.mxu0 0.0
  %1816 = vmatprep.subr.mxu0 0.0
  %1817 = vmatpush1.msra.mxu0 0.0
  %1818 = vmatprep.subr.mxu0 0.0
  %1819 = vmatpush1.msra.mxu0 0.0
  %1820 = vmatprep.subr.mxu0 0.0
  %1821 = vmatpush1.msra.mxu0 0.0
  %1822 = vmatprep.subr.mxu0 0.0
  %1823 = vmatpush1.msra.mxu0 0.0
  %1824 = vmatprep.subr.mxu0 0.0
  %1825 = vmatpush1.msra.mxu0 0.0
  %1826 = vmatprep.subr.mxu0 0.0
  %1827 = vmatpush1.msra.mxu0 0.0
  %1828 = vmatprep.subr.mxu0 0.0
  %1829 = vmatpush1.msra.mxu0 0.0
  %1830 = vmatprep.subr.mxu0 0.0
  %1831 = vmatpush1.msra.mxu0 0.0
  %1832 = vmatprep.subr.mxu0 0.0
  %1833 = vmatpush1.msra.mxu0 0.0
  %1834 = vmatprep.subr.mxu0 0.0
  %1835 = vmatpush1.msra.mxu0 0.0
  %1836 = vmatprep.subr.mxu0 0.0
  %1837 = vmatpush1.msra.mxu0 0.0
  %1838 = vmatprep.subr.mxu0 0.0
  %1839 = vmatpush1.msra.mxu0 0.0
  %1840 = vmatprep.subr.mxu0 0.0
  %1841 = vmatpush1.msra.mxu0 0.0
  %1842 = vmatprep.subr.mxu0 0.0
  %1843 = vmatpush1.msra.mxu0 0.0
  %1844 = vmatprep.subr.mxu0 0.0
  %1845 = vmatpush1.msra.mxu0 0.0
  %1846 = vmatprep.subr.mxu0 0.0
  %1847 = vmatpush1.msra.mxu0 0.0
  %1848 = vmatprep.mubr.f32.mxu0 0.0
  %1849 = vmatmul.mubr.f32.gmra.mrb[0].mxu0 %v1779
  %v1850 = vpop.f32.mrb[0].mxu0
  %v1851 = vadd.f32 0.0, %v1850
  %v1852 = vpop.f32.mrb[0].mxu0
  %1853 = vmatprep.mubr.f32.mxu0 0.0
  %1854 = vmatmul.mubr.f32.gmra.mrb[0].mxu0 %v1782
  %v1855 = vpop.f32.mrb[0].mxu0
  %v1856 = vadd.f32 0.0, %v1855
  %v1857 = vpop.f32.mrb[0].mxu0
  %1858 = vdwg.mxu0
  %1863 = vrot.lane.b32.xlu0 %v1446, 8
  %v1864 = vpop.permute.xlu0 %1863
  %1865 = vrot.lane.b32.xlu0 %v1451, 8
  %v1866 = vpop.permute.xlu0 %1865
  %1867 = vrot.lane.b32.xlu0 %v1527, 8
  %v1868 = vpop.permute.xlu0 %1867
  %1869 = vrot.lane.b32.xlu0 %v1532, 8
  %v1870 = vpop.permute.xlu0 %1869
  %1879 = vrot.lane.b32.xlu0 %v1608, 16
  %v1880 = vpop.permute.xlu0 %1879
  %1881 = vrot.lane.b32.xlu0 %v1613, 16
  %v1882 = vpop.permute.xlu0 %1881
  %1883 = vrot.lane.b32.xlu0 %v1689, 16
  %v1884 = vpop.permute.xlu0 %1883
  %1885 = vrot.lane.b32.xlu0 %v1694, 16
  %v1886 = vpop.permute.xlu0 %1885
  %1895 = vrot.lane.b32.xlu0 %v1770, 24
  %v1896 = vpop.permute.xlu0 %1895
  %1897 = vrot.lane.b32.xlu0 %v1775, 24
  %v1898 = vpop.permute.xlu0 %1897
  %1899 = vrot.lane.b32.xlu0 %v1851, 24
  %v1900 = vpop.permute.xlu0 %1899
  %1901 = vrot.lane.b32.xlu0 %v1856, 24
  %v1902 = vpop.permute.xlu0 %1901
  %v1907 = vsel %vm341, %v1284, %v1864
  %v1908 = vsel %vm341, %v1289, %v1866
  %v1909 = vsel %vm341, %v1365, %v1868
  %v1910 = vsel %vm341, %v1370, %v1870
  %v1911 = vsel %vm1034, %v1907, %v1880
  %v1912 = vsel %vm1034, %v1908, %v1882
  %v1913 = vsel %vm1034, %v1909, %v1884
  %v1914 = vsel %vm1034, %v1910, %v1886
  %vm1915 = vcmask 195584
  %v1916 = vsel %vm1915, %v1911, %v1896
  %v1917 = vsel %vm1915, %v1912, %v1898
  %v1918 = vsel %vm1915, %v1913, %v1900
  %v1919 = vsel %vm1915, %v1914, %v1902
  %v1920 = vlaneseq
  %v1921 = vshrl.u32 %v1920, 7
  %v1922 = vsub.s32 2, %v1921
  %v1923 = vrot.slane %v44, %v1922
  %1924 = vrot.lane.b32.xlu0 %v28, 32
  %v1925 = vpop.permute.xlu0 %1924
  %1926 = vrot.lane.b32.xlu0 %v30, 32
  %v1927 = vpop.permute.xlu0 %1926
  %1928 = vrot.lane.b32.xlu0 %v32, 32
  %v1929 = vpop.permute.xlu0 %1928
  %1930 = vrot.lane.b32.xlu0 %v34, 32
  %v1931 = vpop.permute.xlu0 %1930
  %v1937 = vsel %vm54, %v1916, 0
  %v1940 = vsel %vm54, %v1917, 0
  %v1943 = vsel %vm54, %v1918, 0
  %v1946 = vsel %vm54, %v1919, 0
  %1948 = vmatprep.subr.mxu0 0.0
  %1949 = vmatpush1.msra.mxu0 %v1925
  %1950 = vmatprep.subr.mxu0 0.0
  %1951 = vmatpush1.msra.mxu0 %v1927
  %1952 = vmatprep.subr.mxu0 0.0
  %1953 = vmatpush1.msra.mxu0 %v1929
  %1954 = vmatprep.subr.mxu0 0.0
  %1955 = vmatpush1.msra.mxu0 %v1931
  %1956 = vmatprep.subr.mxu0 0.0
  %1957 = vmatpush1.msra.mxu0 0.0
  %1958 = vmatprep.subr.mxu0 0.0
  %1959 = vmatpush1.msra.mxu0 0.0
  %1960 = vmatprep.subr.mxu0 0.0
  %1961 = vmatpush1.msra.mxu0 0.0
  %1962 = vmatprep.subr.mxu0 0.0
  %1963 = vmatpush1.msra.mxu0 0.0
  %1964 = vmatprep.subr.mxu0 0.0
  %1965 = vmatpush1.msra.mxu0 0.0
  %1966 = vmatprep.subr.mxu0 0.0
  %1967 = vmatpush1.msra.mxu0 0.0
  %1968 = vmatprep.subr.mxu0 0.0
  %1969 = vmatpush1.msra.mxu0 0.0
  %1970 = vmatprep.subr.mxu0 0.0
  %1971 = vmatpush1.msra.mxu0 0.0
  %1972 = vmatprep.subr.mxu0 0.0
  %1973 = vmatpush1.msra.mxu0 0.0
  %1974 = vmatprep.subr.mxu0 0.0
  %1975 = vmatpush1.msra.mxu0 0.0
  %1976 = vmatprep.subr.mxu0 0.0
  %1977 = vmatpush1.msra.mxu0 0.0
  %1978 = vmatprep.subr.mxu0 0.0
  %1979 = vmatpush1.msra.mxu0 0.0
  %1980 = vmatprep.subr.mxu0 0.0
  %1981 = vmatpush1.msra.mxu0 0.0
  %1982 = vmatprep.subr.mxu0 0.0
  %1983 = vmatpush1.msra.mxu0 0.0
  %1984 = vmatprep.subr.mxu0 0.0
  %1985 = vmatpush1.msra.mxu0 0.0
  %1986 = vmatprep.subr.mxu0 0.0
  %1987 = vmatpush1.msra.mxu0 0.0
  %1988 = vmatprep.subr.mxu0 0.0
  %1989 = vmatpush1.msra.mxu0 0.0
  %1990 = vmatprep.subr.mxu0 0.0
  %1991 = vmatpush1.msra.mxu0 0.0
  %1992 = vmatprep.subr.mxu0 0.0
  %1993 = vmatpush1.msra.mxu0 0.0
  %1994 = vmatprep.subr.mxu0 0.0
  %1995 = vmatpush1.msra.mxu0 0.0
  %1996 = vmatprep.subr.mxu0 0.0
  %1997 = vmatpush1.msra.mxu0 0.0
  %1998 = vmatprep.subr.mxu0 0.0
  %1999 = vmatpush1.msra.mxu0 0.0
  %2000 = vmatprep.subr.mxu0 0.0
  %2001 = vmatpush1.msra.mxu0 0.0
  %2002 = vmatprep.subr.mxu0 0.0
  %2003 = vmatpush1.msra.mxu0 0.0
  %2004 = vmatprep.subr.mxu0 0.0
  %2005 = vmatpush1.msra.mxu0 0.0
  %2006 = vmatprep.subr.mxu0 0.0
  %2007 = vmatpush1.msra.mxu0 0.0
  %2008 = vmatprep.subr.mxu0 0.0
  %2009 = vmatpush1.msra.mxu0 0.0
  %2010 = vmatprep.subr.mxu0 0.0
  %2011 = vmatpush1.msra.mxu0 0.0
  %2012 = vmatprep.mubr.f32.mxu0 0.0
  %2013 = vmatmul.mubr.f32.gmra.mrb[0].mxu0 %v1937
  %v2014 = vpop.f32.mrb[0].mxu0
  %v2015 = vadd.f32 %v1923, %v2014
  %v2016 = vpop.f32.mrb[0].mxu0
  %2017 = vmatprep.mubr.f32.mxu0 0.0
  %2018 = vmatmul.mubr.f32.gmra.mrb[0].mxu0 %v1940
  %v2019 = vpop.f32.mrb[0].mxu0
  %v2020 = vadd.f32 %v1923, %v2019
  %v2021 = vpop.f32.mrb[0].mxu0
  %2022 = vmatprep.mubr.f32.mxu0 0.0
  %2023 = vmatmul.mubr.f32.gmra.mrb[0].mxu0 %v1943
  %v2024 = vpop.f32.mrb[0].mxu0
  %v2025 = vadd.f32 %v1923, %v2024
  %v2026 = vpop.f32.mrb[0].mxu0
  %2027 = vmatprep.mubr.f32.mxu0 0.0
  %2028 = vmatmul.mubr.f32.gmra.mrb[0].mxu0 %v1946
  %v2029 = vpop.f32.mrb[0].mxu0
  %v2030 = vadd.f32 %v1923, %v2029
  %v2031 = vpop.f32.mrb[0].mxu0
  %2032 = vdwg.mxu0
  %v2033 = vadd.f32 %v20, %v2015
  %v2034 = vadd.f32 %v21, %v2020
  %v2035 = vadd.f32 %v22, %v2025
  %v2036 = vadd.f32 %v23, %v2030
  %v2037 = vsel %vm54, %v2033, 0.0
  %2038 = vadd.xlane.f32.xlu0 %v2037
  %v2039 = vpop.xlane.xlu0 %2038
  %v2040 = vsel %vm54, %v2034, 0.0
  %2041 = vadd.xlane.f32.xlu0 %v2040
  %v2042 = vpop.xlane.xlu0 %2041
  %v2043 = vsel %vm54, %v2035, 0.0
  %2044 = vadd.xlane.f32.xlu0 %v2043
  %v2045 = vpop.xlane.xlu0 %2044
  %v2046 = vsel %vm54, %v2036, 0.0
  %2047 = vadd.xlane.f32.xlu0 %v2046
  %v2048 = vpop.xlane.xlu0 %2047
  %v2049 = vrcp.pop 32.0
  %v2050 = vmul.f32 %v2039, %v2049
  %v2051 = vmul.f32 %v2042, %v2049
  %v2052 = vmul.f32 %v2045, %v2049
  %v2053 = vmul.f32 %v2048, %v2049
  %v2054 = vsub.f32 %v2033, %v2050
  %v2055 = vsub.f32 %v2034, %v2051
  %v2056 = vsub.f32 %v2035, %v2052
  %v2057 = vsub.f32 %v2036, %v2053
  %v2058 = vmul.f32 %v2054, %v2054
  %v2059 = vmul.f32 %v2055, %v2055
  %v2060 = vmul.f32 %v2056, %v2056
  %v2061 = vmul.f32 %v2057, %v2057
  %v2062 = vsel %vm54, %v2058, 0.0
  %2063 = vadd.xlane.f32.xlu0 %v2062
  %v2064 = vpop.xlane.xlu0 %2063
  %v2065 = vsel %vm54, %v2059, 0.0
  %2066 = vadd.xlane.f32.xlu0 %v2065
  %v2067 = vpop.xlane.xlu0 %2066
  %v2068 = vsel %vm54, %v2060, 0.0
  %2069 = vadd.xlane.f32.xlu0 %v2068
  %v2070 = vpop.xlane.xlu0 %2069
  %v2071 = vsel %vm54, %v2061, 0.0
  %2072 = vadd.xlane.f32.xlu0 %v2071
  %v2073 = vpop.xlane.xlu0 %2072
  %v2074 = vmul.f32 %v2064, %v2049
  %v2075 = vmul.f32 %v2067, %v2049
  %v2076 = vmul.f32 %v2070, %v2049
  %v2077 = vmul.f32 %v2073, %v2049
  %v2078 = vadd.f32 %v2074, 1e-05
  %v2079 = vadd.f32 %v2075, 1e-05
  %v2080 = vadd.f32 %v2076, 1e-05
  %v2081 = vadd.f32 %v2077, 1e-05
  %v2082 = vrsqrt.pop %v2078
  %v2083 = vrsqrt.pop %v2079
  %v2084 = vrsqrt.pop %v2080
  %v2085 = vrsqrt.pop %v2081
  %v2086 = vmul.f32 %v2054, %v2082
  %v2087 = vmul.f32 %v2055, %v2083
  %v2088 = vmul.f32 %v2056, %v2084
  %v2089 = vmul.f32 %v2057, %v2085
  %v2090 = vlaneseq
  %v2091 = vshrl.u32 %v2090, 7
  %v2092 = vsub.s32 5, %v2091
  %v2093 = vrot.slane %v44, %v2092
  %v2094 = vmul.f32 %v2086, %v2093
  %v2095 = vmul.f32 %v2087, %v2093
  %v2096 = vmul.f32 %v2088, %v2093
  %v2097 = vmul.f32 %v2089, %v2093
  %v2098 = vlaneseq
  %v2099 = vshrl.u32 %v2098, 7
  %v2100 = vsub.s32 6, %v2099
  %v2101 = vrot.slane %v44, %v2100
  %v2102 = vadd.f32 %v2094, %v2101
  %v2103 = vadd.f32 %v2095, %v2101
  %v2104 = vadd.f32 %v2096, %v2101
  %v2105 = vadd.f32 %v2097, %v2101
  %v2106 = vlaneseq
  %v2107 = vshrl.u32 %v2106, 7
  %v2108 = vsub.s32 3, %v2107
  %v2109 = vrot.slane %v44, %v2108
  %v2111 = vsel %vm54, %v2102, 0
  %v2114 = vsel %vm54, %v2103, 0
  %v2117 = vsel %vm54, %v2104, 0
  %v2120 = vsel %vm54, %v2105, 0
  %2122 = vmatprep.subr.mxu0 0.0
  %2123 = vmatpush1.msra.mxu0 %v29
  %2124 = vmatprep.subr.mxu0 0.0
  %2125 = vmatpush1.msra.mxu0 %v31
  %2126 = vmatprep.subr.mxu0 0.0
  %2127 = vmatpush1.msra.mxu0 %v33
  %2128 = vmatprep.subr.mxu0 0.0
  %2129 = vmatpush1.msra.mxu0 %v35
  %2130 = vmatprep.subr.mxu0 0.0
  %2131 = vmatpush1.msra.mxu0 0.0
  %2132 = vmatprep.subr.mxu0 0.0
  %2133 = vmatpush1.msra.mxu0 0.0
  %2134 = vmatprep.subr.mxu0 0.0
  %2135 = vmatpush1.msra.mxu0 0.0
  %2136 = vmatprep.subr.mxu0 0.0
  %2137 = vmatpush1.msra.mxu0 0.0
  %2138 = vmatprep.subr.mxu0 0.0
  %2139 = vmatpush1.msra.mxu0 0.0
  %2140 = vmatprep.subr.mxu0 0.0
  %2141 = vmatpush1.msra.mxu0 0.0
  %2142 = vmatprep.subr.mxu0 0.0
  %2143 = vmatpush1.msra.mxu0 0.0
  %2144 = vmatprep.subr.mxu0 0.0
  %2145 = vmatpush1.msra.mxu0 0.0
  %2146 = vmatprep.subr.mxu0 0.0
  %2147 = vmatpush1.msra.mxu0 0.0
  %2148 = vmatprep.subr.mxu0 0.0
  %2149 = vmatpush1.msra.mxu0 0.0
  %2150 = vmatprep.subr.mxu0 0.0
  %2151 = vmatpush1.msra.mxu0 0.0
  %2152 = vmatprep.subr.mxu0 0.0
  %2153 = vmatpush1.msra.mxu0 0.0
  %2154 = vmatprep.subr.mxu0 0.0
  %2155 = vmatpush1.msra.mxu0 0.0
  %2156 = vmatprep.subr.mxu0 0.0
  %2157 = vmatpush1.msra.mxu0 0.0
  %2158 = vmatprep.subr.mxu0 0.0
  %2159 = vmatpush1.msra.mxu0 0.0
  %2160 = vmatprep.subr.mxu0 0.0
  %2161 = vmatpush1.msra.mxu0 0.0
  %2162 = vmatprep.subr.mxu0 0.0
  %2163 = vmatpush1.msra.mxu0 0.0
  %2164 = vmatprep.subr.mxu0 0.0
  %2165 = vmatpush1.msra.mxu0 0.0
  %2166 = vmatprep.subr.mxu0 0.0
  %2167 = vmatpush1.msra.mxu0 0.0
  %2168 = vmatprep.subr.mxu0 0.0
  %2169 = vmatpush1.msra.mxu0 0.0
  %2170 = vmatprep.subr.mxu0 0.0
  %2171 = vmatpush1.msra.mxu0 0.0
  %2172 = vmatprep.subr.mxu0 0.0
  %2173 = vmatpush1.msra.mxu0 0.0
  %2174 = vmatprep.subr.mxu0 0.0
  %2175 = vmatpush1.msra.mxu0 0.0
  %2176 = vmatprep.subr.mxu0 0.0
  %2177 = vmatpush1.msra.mxu0 0.0
  %2178 = vmatprep.subr.mxu0 0.0
  %2179 = vmatpush1.msra.mxu0 0.0
  %2180 = vmatprep.subr.mxu0 0.0
  %2181 = vmatpush1.msra.mxu0 0.0
  %2182 = vmatprep.subr.mxu0 0.0
  %2183 = vmatpush1.msra.mxu0 0.0
  %2184 = vmatprep.subr.mxu0 0.0
  %2185 = vmatpush1.msra.mxu0 0.0
  %2186 = vmatprep.mubr.f32.mxu0 0.0
  %2187 = vmatmul.mubr.f32.gmra.mrb[0].mxu0 %v2111
  %v2188 = vpop.f32.mrb[0].mxu0
  %v2189 = vadd.f32 %v2109, %v2188
  %v2190 = vpop.f32.mrb[0].mxu0
  %2191 = vmatprep.mubr.f32.mxu0 0.0
  %2192 = vmatmul.mubr.f32.gmra.mrb[0].mxu0 %v2114
  %v2193 = vpop.f32.mrb[0].mxu0
  %v2194 = vadd.f32 %v2109, %v2193
  %v2195 = vpop.f32.mrb[0].mxu0
  %2196 = vmatprep.mubr.f32.mxu0 0.0
  %2197 = vmatmul.mubr.f32.gmra.mrb[0].mxu0 %v2117
  %v2198 = vpop.f32.mrb[0].mxu0
  %v2199 = vadd.f32 %v2109, %v2198
  %v2200 = vpop.f32.mrb[0].mxu0
  %2201 = vmatprep.mubr.f32.mxu0 0.0
  %2202 = vmatmul.mubr.f32.gmra.mrb[0].mxu0 %v2120
  %v2203 = vpop.f32.mrb[0].mxu0
  %v2204 = vadd.f32 %v2109, %v2203
  %v2205 = vpop.f32.mrb[0].mxu0
  %2206 = vdwg.mxu0
  %v2207 = vmax.f32 %v2189, 0.0
  %v2208 = vmax.f32 %v2194, 0.0
  %v2209 = vmax.f32 %v2199, 0.0
  %v2210 = vmax.f32 %v2204, 0.0
  %v2211 = vlaneseq
  %v2212 = vshrl.u32 %v2211, 7
  %v2213 = vsub.s32 4, %v2212
  %v2214 = vrot.slane %v44, %v2213
  %vm2215 = vcmask 523264
  %v2217 = vsel %vm2215, %v2207, 0
  %v2220 = vsel %vm2215, %v2208, 0
  %v2223 = vsel %vm2215, %v2209, 0
  %v2226 = vsel %vm2215, %v2210, 0
  %2228 = vmatprep.subr.mxu0 0.0
  %2229 = vmatpush1.msra.mxu0 %v36
  %2230 = vmatprep.subr.mxu0 0.0
  %2231 = vmatpush1.msra.mxu0 %v37
  %2232 = vmatprep.subr.mxu0 0.0
  %2233 = vmatpush1.msra.mxu0 %v38
  %2234 = vmatprep.subr.mxu0 0.0
  %2235 = vmatpush1.msra.mxu0 %v39
  %2236 = vmatprep.subr.mxu0 0.0
  %2237 = vmatpush1.msra.mxu0 %v40
  %2238 = vmatprep.subr.mxu0 0.0
  %2239 = vmatpush1.msra.mxu0 %v41
  %2240 = vmatprep.subr.mxu0 0.0
  %2241 = vmatpush1.msra.mxu0 %v42
  %2242 = vmatprep.subr.mxu0 0.0
  %2243 = vmatpush1.msra.mxu0 %v43
  %2244 = vmatprep.subr.mxu0 0.0
  %2245 = vmatpush1.msra.mxu0 0.0
  %2246 = vmatprep.subr.mxu0 0.0
  %2247 = vmatpush1.msra.mxu0 0.0
  %2248 = vmatprep.subr.mxu0 0.0
  %2249 = vmatpush1.msra.mxu0 0.0
  %2250 = vmatprep.subr.mxu0 0.0
  %2251 = vmatpush1.msra.mxu0 0.0
  %2252 = vmatprep.subr.mxu0 0.0
  %2253 = vmatpush1.msra.mxu0 0.0
  %2254 = vmatprep.subr.mxu0 0.0
  %2255 = vmatpush1.msra.mxu0 0.0
  %2256 = vmatprep.subr.mxu0 0.0
  %2257 = vmatpush1.msra.mxu0 0.0
  %2258 = vmatprep.subr.mxu0 0.0
  %2259 = vmatpush1.msra.mxu0 0.0
  %2260 = vmatprep.subr.mxu0 0.0
  %2261 = vmatpush1.msra.mxu0 0.0
  %2262 = vmatprep.subr.mxu0 0.0
  %2263 = vmatpush1.msra.mxu0 0.0
  %2264 = vmatprep.subr.mxu0 0.0
  %2265 = vmatpush1.msra.mxu0 0.0
  %2266 = vmatprep.subr.mxu0 0.0
  %2267 = vmatpush1.msra.mxu0 0.0
  %2268 = vmatprep.subr.mxu0 0.0
  %2269 = vmatpush1.msra.mxu0 0.0
  %2270 = vmatprep.subr.mxu0 0.0
  %2271 = vmatpush1.msra.mxu0 0.0
  %2272 = vmatprep.subr.mxu0 0.0
  %2273 = vmatpush1.msra.mxu0 0.0
  %2274 = vmatprep.subr.mxu0 0.0
  %2275 = vmatpush1.msra.mxu0 0.0
  %2276 = vmatprep.subr.mxu0 0.0
  %2277 = vmatpush1.msra.mxu0 0.0
  %2278 = vmatprep.subr.mxu0 0.0
  %2279 = vmatpush1.msra.mxu0 0.0
  %2280 = vmatprep.subr.mxu0 0.0
  %2281 = vmatpush1.msra.mxu0 0.0
  %2282 = vmatprep.subr.mxu0 0.0
  %2283 = vmatpush1.msra.mxu0 0.0
  %2284 = vmatprep.subr.mxu0 0.0
  %2285 = vmatpush1.msra.mxu0 0.0
  %2286 = vmatprep.subr.mxu0 0.0
  %2287 = vmatpush1.msra.mxu0 0.0
  %2288 = vmatprep.subr.mxu0 0.0
  %2289 = vmatpush1.msra.mxu0 0.0
  %2290 = vmatprep.subr.mxu0 0.0
  %2291 = vmatpush1.msra.mxu0 0.0
  %2292 = vmatprep.mubr.f32.mxu0 0.0
  %2293 = vmatmul.mubr.f32.gmra.mrb[0].mxu0 %v2217
  %v2294 = vpop.f32.mrb[0].mxu0
  %v2295 = vadd.f32 %v2214, %v2294
  %v2296 = vpop.f32.mrb[0].mxu0
  %2297 = vmatprep.mubr.f32.mxu0 0.0
  %2298 = vmatmul.mubr.f32.gmra.mrb[0].mxu0 %v2220
  %v2299 = vpop.f32.mrb[0].mxu0
  %v2300 = vadd.f32 %v2214, %v2299
  %v2301 = vpop.f32.mrb[0].mxu0
  %2302 = vmatprep.mubr.f32.mxu0 0.0
  %2303 = vmatmul.mubr.f32.gmra.mrb[0].mxu0 %v2223
  %v2304 = vpop.f32.mrb[0].mxu0
  %v2305 = vadd.f32 %v2214, %v2304
  %v2306 = vpop.f32.mrb[0].mxu0
  %2307 = vmatprep.mubr.f32.mxu0 0.0
  %2308 = vmatmul.mubr.f32.gmra.mrb[0].mxu0 %v2226
  %v2309 = vpop.f32.mrb[0].mxu0
  %v2310 = vadd.f32 %v2214, %v2309
  %v2311 = vpop.f32.mrb[0].mxu0
  %2312 = vdwg.mxu0
  %v2313 = vadd.f32 %v2102, %v2295
  %v2314 = vadd.f32 %v2103, %v2300
  %v2315 = vadd.f32 %v2104, %v2305
  %v2316 = vadd.f32 %v2105, %v2310
  %v2317 = vsel %vm54, %v2313, 0.0
  %2318 = vadd.xlane.f32.xlu0 %v2317
  %v2319 = vpop.xlane.xlu0 %2318
  %v2320 = vsel %vm54, %v2314, 0.0
  %2321 = vadd.xlane.f32.xlu0 %v2320
  %v2322 = vpop.xlane.xlu0 %2321
  %v2323 = vsel %vm54, %v2315, 0.0
  %2324 = vadd.xlane.f32.xlu0 %v2323
  %v2325 = vpop.xlane.xlu0 %2324
  %v2326 = vsel %vm54, %v2316, 0.0
  %2327 = vadd.xlane.f32.xlu0 %v2326
  %v2328 = vpop.xlane.xlu0 %2327
  %v2329 = vmul.f32 %v2319, %v2049
  %v2330 = vmul.f32 %v2322, %v2049
  %v2331 = vmul.f32 %v2325, %v2049
  %v2332 = vmul.f32 %v2328, %v2049
  %v2333 = vsub.f32 %v2313, %v2329
  %v2334 = vsub.f32 %v2314, %v2330
  %v2335 = vsub.f32 %v2315, %v2331
  %v2336 = vsub.f32 %v2316, %v2332
  %v2337 = vmul.f32 %v2333, %v2333
  %v2338 = vmul.f32 %v2334, %v2334
  %v2339 = vmul.f32 %v2335, %v2335
  %v2340 = vmul.f32 %v2336, %v2336
  %v2341 = vsel %vm54, %v2337, 0.0
  %2342 = vadd.xlane.f32.xlu0 %v2341
  %v2343 = vpop.xlane.xlu0 %2342
  %v2344 = vsel %vm54, %v2338, 0.0
  %2345 = vadd.xlane.f32.xlu0 %v2344
  %v2346 = vpop.xlane.xlu0 %2345
  %v2347 = vsel %vm54, %v2339, 0.0
  %2348 = vadd.xlane.f32.xlu0 %v2347
  %v2349 = vpop.xlane.xlu0 %2348
  %v2350 = vsel %vm54, %v2340, 0.0
  %2351 = vadd.xlane.f32.xlu0 %v2350
  %v2352 = vpop.xlane.xlu0 %2351
  %v2353 = vmul.f32 %v2343, %v2049
  %v2354 = vmul.f32 %v2346, %v2049
  %v2355 = vmul.f32 %v2349, %v2049
  %v2356 = vmul.f32 %v2352, %v2049
  %v2357 = vadd.f32 %v2353, 1e-05
  %v2358 = vadd.f32 %v2354, 1e-05
  %v2359 = vadd.f32 %v2355, 1e-05
  %v2360 = vadd.f32 %v2356, 1e-05
  %v2361 = vrsqrt.pop %v2357
  %v2362 = vrsqrt.pop %v2358
  %v2363 = vrsqrt.pop %v2359
  %v2364 = vrsqrt.pop %v2360
  %v2365 = vmul.f32 %v2333, %v2361
  %v2366 = vmul.f32 %v2334, %v2362
  %v2367 = vmul.f32 %v2335, %v2363
  %v2368 = vmul.f32 %v2336, %v2364
  %v2369 = vlaneseq
  %v2370 = vshrl.u32 %v2369, 7
  %v2371 = vsub.s32 7, %v2370
  %v2372 = vrot.slane %v44, %v2371
  %v2373 = vmul.f32 %v2365, %v2372
  %v2374 = vmul.f32 %v2366, %v2372
  %v2375 = vmul.f32 %v2367, %v2372
  %v2376 = vmul.f32 %v2368, %v2372
  %v2377 = vlaneseq
  %v2378 = vshrl.u32 %v2377, 7
  %v2379 = vsub.s32 0, %v2378
  %v2380 = vrot.slane %v45, %v2379
  %v2381 = vadd.f32 %v2373, %v2380
  %v2382 = vadd.f32 %v2374, %v2380
  %v2383 = vadd.f32 %v2375, %v2380
  %v2384 = vadd.f32 %v2376, %v2380
  %s2385 = scalar_lea.vmem %s2, 64
  %v2386 = vld [vmem:[%s2385] sm:$0xff]
  %v2387 = vld [vmem:[%s2385 + $0x8] sm:$0xff]
  %v2388 = vld [vmem:[%s2385 + $0x10] sm:$0xff]
  %v2389 = vld [vmem:[%s2385 + $0x18] sm:$0xff]
  %v2390 = vld [vmem:[%s2385 + $0x20] sm:$0xff]
  %v2391 = vld [vmem:[%s2385 + $0x28] sm:$0xff]
  %v2392 = vld [vmem:[%s2385 + $0x30] sm:$0xff]
  %v2393 = vld [vmem:[%s2385 + $0x38] sm:$0xff]
  %s2394 = scalar_lea.vmem %s3, 64
  %v2395 = vld [vmem:[%s2394] sm:$0xff]
  %v2396 = vld [vmem:[%s2394 + $0x8] sm:$0xff]
  %v2397 = vld [vmem:[%s2394 + $0x10] sm:$0xff]
  %v2398 = vld [vmem:[%s2394 + $0x18] sm:$0xff]
  %v2399 = vld [vmem:[%s2394 + $0x20] sm:$0xff]
  %v2400 = vld [vmem:[%s2394 + $0x28] sm:$0xff]
  %v2401 = vld [vmem:[%s2394 + $0x30] sm:$0xff]
  %v2402 = vld [vmem:[%s2394 + $0x38] sm:$0xff]
  %s2403 = scalar_lea.vmem %s4, 16
  %v2404 = vld [vmem:[%s2403] sm:$0xff]
  %v2405 = vld [vmem:[%s2403 + $0x8] sm:$0x1]
  %v2406 = vadd.f32 %v2381, %v24
  %v2407 = vadd.f32 %v2382, %v25
  %v2408 = vadd.f32 %v2383, %v26
  %v2409 = vadd.f32 %v2384, %v27
  %v2410 = vlaneseq
  %v2411 = vshrl.u32 %v2410, 7
  %v2412 = vsub.s32 0, %v2411
  %v2413 = vrot.slane %v2404, %v2412
  %v2415 = vsel %vm54, %v2406, 0
  %v2418 = vsel %vm54, %v2407, 0
  %v2421 = vsel %vm54, %v2408, 0
  %v2424 = vsel %vm54, %v2409, 0
  %2426 = vmatprep.subr.mxu0 0.0
  %2427 = vmatpush1.msra.mxu0 %v2386
  %2428 = vmatprep.subr.mxu0 0.0
  %2429 = vmatpush1.msra.mxu0 %v2388
  %2430 = vmatprep.subr.mxu0 0.0
  %2431 = vmatpush1.msra.mxu0 %v2390
  %2432 = vmatprep.subr.mxu0 0.0
  %2433 = vmatpush1.msra.mxu0 %v2392
  %2434 = vmatprep.subr.mxu0 0.0
  %2435 = vmatpush1.msra.mxu0 0.0
  %2436 = vmatprep.subr.mxu0 0.0
  %2437 = vmatpush1.msra.mxu0 0.0
  %2438 = vmatprep.subr.mxu0 0.0
  %2439 = vmatpush1.msra.mxu0 0.0
  %2440 = vmatprep.subr.mxu0 0.0
  %2441 = vmatpush1.msra.mxu0 0.0
  %2442 = vmatprep.subr.mxu0 0.0
  %2443 = vmatpush1.msra.mxu0 0.0
  %2444 = vmatprep.subr.mxu0 0.0
  %2445 = vmatpush1.msra.mxu0 0.0
  %2446 = vmatprep.subr.mxu0 0.0
  %2447 = vmatpush1.msra.mxu0 0.0
  %2448 = vmatprep.subr.mxu0 0.0
  %2449 = vmatpush1.msra.mxu0 0.0
  %2450 = vmatprep.subr.mxu0 0.0
  %2451 = vmatpush1.msra.mxu0 0.0
  %2452 = vmatprep.subr.mxu0 0.0
  %2453 = vmatpush1.msra.mxu0 0.0
  %2454 = vmatprep.subr.mxu0 0.0
  %2455 = vmatpush1.msra.mxu0 0.0
  %2456 = vmatprep.subr.mxu0 0.0
  %2457 = vmatpush1.msra.mxu0 0.0
  %2458 = vmatprep.subr.mxu0 0.0
  %2459 = vmatpush1.msra.mxu0 0.0
  %2460 = vmatprep.subr.mxu0 0.0
  %2461 = vmatpush1.msra.mxu0 0.0
  %2462 = vmatprep.subr.mxu0 0.0
  %2463 = vmatpush1.msra.mxu0 0.0
  %2464 = vmatprep.subr.mxu0 0.0
  %2465 = vmatpush1.msra.mxu0 0.0
  %2466 = vmatprep.subr.mxu0 0.0
  %2467 = vmatpush1.msra.mxu0 0.0
  %2468 = vmatprep.subr.mxu0 0.0
  %2469 = vmatpush1.msra.mxu0 0.0
  %2470 = vmatprep.subr.mxu0 0.0
  %2471 = vmatpush1.msra.mxu0 0.0
  %2472 = vmatprep.subr.mxu0 0.0
  %2473 = vmatpush1.msra.mxu0 0.0
  %2474 = vmatprep.subr.mxu0 0.0
  %2475 = vmatpush1.msra.mxu0 0.0
  %2476 = vmatprep.subr.mxu0 0.0
  %2477 = vmatpush1.msra.mxu0 0.0
  %2478 = vmatprep.subr.mxu0 0.0
  %2479 = vmatpush1.msra.mxu0 0.0
  %2480 = vmatprep.subr.mxu0 0.0
  %2481 = vmatpush1.msra.mxu0 0.0
  %2482 = vmatprep.subr.mxu0 0.0
  %2483 = vmatpush1.msra.mxu0 0.0
  %2484 = vmatprep.subr.mxu0 0.0
  %2485 = vmatpush1.msra.mxu0 0.0
  %2486 = vmatprep.subr.mxu0 0.0
  %2487 = vmatpush1.msra.mxu0 0.0
  %2488 = vmatprep.subr.mxu0 0.0
  %2489 = vmatpush1.msra.mxu0 0.0
  %2490 = vmatprep.mubr.f32.mxu0 0.0
  %2491 = vmatmul.mubr.f32.gmra.mrb[0].mxu0 %v2415
  %v2492 = vpop.f32.mrb[0].mxu0
  %v2493 = vadd.f32 %v2413, %v2492
  %v2494 = vpop.f32.mrb[0].mxu0
  %2495 = vmatprep.mubr.f32.mxu0 0.0
  %2496 = vmatmul.mubr.f32.gmra.mrb[0].mxu0 %v2418
  %v2497 = vpop.f32.mrb[0].mxu0
  %v2498 = vadd.f32 %v2413, %v2497
  %v2499 = vpop.f32.mrb[0].mxu0
  %2500 = vmatprep.mubr.f32.mxu0 0.0
  %2501 = vmatmul.mubr.f32.gmra.mrb[0].mxu0 %v2421
  %v2502 = vpop.f32.mrb[0].mxu0
  %v2503 = vadd.f32 %v2413, %v2502
  %v2504 = vpop.f32.mrb[0].mxu0
  %2505 = vmatprep.mubr.f32.mxu0 0.0
  %2506 = vmatmul.mubr.f32.gmra.mrb[0].mxu0 %v2424
  %v2507 = vpop.f32.mrb[0].mxu0
  %v2508 = vadd.f32 %v2413, %v2507
  %v2509 = vpop.f32.mrb[0].mxu0
  %2510 = vdwg.mxu0
  %v2511 = vlaneseq
  %v2512 = vshrl.u32 %v2511, 7
  %v2513 = vsub.s32 1, %v2512
  %v2514 = vrot.slane %v2404, %v2513
  %2519 = vrot.lane.b32.xlu0 %v2386, 64
  %v2520 = vpop.permute.xlu0 %2519
  %2521 = vrot.lane.b32.xlu0 %v2388, 64
  %v2522 = vpop.permute.xlu0 %2521
  %2523 = vrot.lane.b32.xlu0 %v2390, 64
  %v2524 = vpop.permute.xlu0 %2523
  %2525 = vrot.lane.b32.xlu0 %v2392, 64
  %v2526 = vpop.permute.xlu0 %2525
  %v2532 = vsel %vm54, %v2381, 0
  %v2535 = vsel %vm54, %v2382, 0
  %v2538 = vsel %vm54, %v2383, 0
  %v2541 = vsel %vm54, %v2384, 0
  %2543 = vmatprep.subr.mxu0 0.0
  %2544 = vmatpush1.msra.mxu0 %v2520
  %2545 = vmatprep.subr.mxu0 0.0
  %2546 = vmatpush1.msra.mxu0 %v2522
  %2547 = vmatprep.subr.mxu0 0.0
  %2548 = vmatpush1.msra.mxu0 %v2524
  %2549 = vmatprep.subr.mxu0 0.0
  %2550 = vmatpush1.msra.mxu0 %v2526
  %2551 = vmatprep.subr.mxu0 0.0
  %2552 = vmatpush1.msra.mxu0 0.0
  %2553 = vmatprep.subr.mxu0 0.0
  %2554 = vmatpush1.msra.mxu0 0.0
  %2555 = vmatprep.subr.mxu0 0.0
  %2556 = vmatpush1.msra.mxu0 0.0
  %2557 = vmatprep.subr.mxu0 0.0
  %2558 = vmatpush1.msra.mxu0 0.0
  %2559 = vmatprep.subr.mxu0 0.0
  %2560 = vmatpush1.msra.mxu0 0.0
  %2561 = vmatprep.subr.mxu0 0.0
  %2562 = vmatpush1.msra.mxu0 0.0
  %2563 = vmatprep.subr.mxu0 0.0
  %2564 = vmatpush1.msra.mxu0 0.0
  %2565 = vmatprep.subr.mxu0 0.0
  %2566 = vmatpush1.msra.mxu0 0.0
  %2567 = vmatprep.subr.mxu0 0.0
  %2568 = vmatpush1.msra.mxu0 0.0
  %2569 = vmatprep.subr.mxu0 0.0
  %2570 = vmatpush1.msra.mxu0 0.0
  %2571 = vmatprep.subr.mxu0 0.0
  %2572 = vmatpush1.msra.mxu0 0.0
  %2573 = vmatprep.subr.mxu0 0.0
  %2574 = vmatpush1.msra.mxu0 0.0
  %2575 = vmatprep.subr.mxu0 0.0
  %2576 = vmatpush1.msra.mxu0 0.0
  %2577 = vmatprep.subr.mxu0 0.0
  %2578 = vmatpush1.msra.mxu0 0.0
  %2579 = vmatprep.subr.mxu0 0.0
  %2580 = vmatpush1.msra.mxu0 0.0
  %2581 = vmatprep.subr.mxu0 0.0
  %2582 = vmatpush1.msra.mxu0 0.0
  %2583 = vmatprep.subr.mxu0 0.0
  %2584 = vmatpush1.msra.mxu0 0.0
  %2585 = vmatprep.subr.mxu0 0.0
  %2586 = vmatpush1.msra.mxu0 0.0
  %2587 = vmatprep.subr.mxu0 0.0
  %2588 = vmatpush1.msra.mxu0 0.0
  %2589 = vmatprep.subr.mxu0 0.0
  %2590 = vmatpush1.msra.mxu0 0.0
  %2591 = vmatprep.subr.mxu0 0.0
  %2592 = vmatpush1.msra.mxu0 0.0
  %2593 = vmatprep.subr.mxu0 0.0
  %2594 = vmatpush1.msra.mxu0 0.0
  %2595 = vmatprep.subr.mxu0 0.0
  %2596 = vmatpush1.msra.mxu0 0.0
  %2597 = vmatprep.subr.mxu0 0.0
  %2598 = vmatpush1.msra.mxu0 0.0
  %2599 = vmatprep.subr.mxu0 0.0
  %2600 = vmatpush1.msra.mxu0 0.0
  %2601 = vmatprep.subr.mxu0 0.0
  %2602 = vmatpush1.msra.mxu0 0.0
  %2603 = vmatprep.subr.mxu0 0.0
  %2604 = vmatpush1.msra.mxu0 0.0
  %2605 = vmatprep.subr.mxu0 0.0
  %2606 = vmatpush1.msra.mxu0 0.0
  %2607 = vmatprep.mubr.f32.mxu0 0.0
  %2608 = vmatmul.mubr.f32.gmra.mrb[0].mxu0 %v2532
  %v2609 = vpop.f32.mrb[0].mxu0
  %v2610 = vadd.f32 %v2514, %v2609
  %v2611 = vpop.f32.mrb[0].mxu0
  %2612 = vmatprep.mubr.f32.mxu0 0.0
  %2613 = vmatmul.mubr.f32.gmra.mrb[0].mxu0 %v2535
  %v2614 = vpop.f32.mrb[0].mxu0
  %v2615 = vadd.f32 %v2514, %v2614
  %v2616 = vpop.f32.mrb[0].mxu0
  %2617 = vmatprep.mubr.f32.mxu0 0.0
  %2618 = vmatmul.mubr.f32.gmra.mrb[0].mxu0 %v2538
  %v2619 = vpop.f32.mrb[0].mxu0
  %v2620 = vadd.f32 %v2514, %v2619
  %v2621 = vpop.f32.mrb[0].mxu0
  %2622 = vmatprep.mubr.f32.mxu0 0.0
  %2623 = vmatmul.mubr.f32.gmra.mrb[0].mxu0 %v2541
  %v2624 = vpop.f32.mrb[0].mxu0
  %v2625 = vadd.f32 %v2514, %v2624
  %v2626 = vpop.f32.mrb[0].mxu0
  %2627 = vdwg.mxu0
  %2632 = vrot.lane.b32.xlu0 %v2493, 120
  %v2633 = vpop.permute.xlu0 %2632
  %2634 = vrot.lane.b32.xlu0 %v2498, 120
  %v2635 = vpop.permute.xlu0 %2634
  %2636 = vrot.lane.b32.xlu0 %v2503, 120
  %v2637 = vpop.permute.xlu0 %2636
  %2638 = vrot.lane.b32.xlu0 %v2508, 120
  %v2639 = vpop.permute.xlu0 %2638
  %2640 = vrot.lane.b32.xlu0 %v2493, 112
  %v2641 = vpop.permute.xlu0 %2640
  %2642 = vrot.lane.b32.xlu0 %v2498, 112
  %v2643 = vpop.permute.xlu0 %2642
  %2644 = vrot.lane.b32.xlu0 %v2503, 112
  %v2645 = vpop.permute.xlu0 %2644
  %2646 = vrot.lane.b32.xlu0 %v2508, 112
  %v2647 = vpop.permute.xlu0 %2646
  %2648 = vrot.lane.b32.xlu0 %v2493, 104
  %v2649 = vpop.permute.xlu0 %2648
  %2650 = vrot.lane.b32.xlu0 %v2498, 104
  %v2651 = vpop.permute.xlu0 %2650
  %2652 = vrot.lane.b32.xlu0 %v2503, 104
  %v2653 = vpop.permute.xlu0 %2652
  %2654 = vrot.lane.b32.xlu0 %v2508, 104
  %v2655 = vpop.permute.xlu0 %2654
  %2660 = vrot.lane.b32.xlu0 %v2610, 120
  %v2661 = vpop.permute.xlu0 %2660
  %2662 = vrot.lane.b32.xlu0 %v2615, 120
  %v2663 = vpop.permute.xlu0 %2662
  %2664 = vrot.lane.b32.xlu0 %v2620, 120
  %v2665 = vpop.permute.xlu0 %2664
  %2666 = vrot.lane.b32.xlu0 %v2625, 120
  %v2667 = vpop.permute.xlu0 %2666
  %2672 = vrot.lane.b32.xlu0 %v2610, 112
  %v2673 = vpop.permute.xlu0 %2672
  %2674 = vrot.lane.b32.xlu0 %v2615, 112
  %v2675 = vpop.permute.xlu0 %2674
  %2676 = vrot.lane.b32.xlu0 %v2620, 112
  %v2677 = vpop.permute.xlu0 %2676
  %2678 = vrot.lane.b32.xlu0 %v2625, 112
  %v2679 = vpop.permute.xlu0 %2678
  %2684 = vrot.lane.b32.xlu0 %v2610, 104
  %v2685 = vpop.permute.xlu0 %2684
  %2686 = vrot.lane.b32.xlu0 %v2615, 104
  %v2687 = vpop.permute.xlu0 %2686
  %2688 = vrot.lane.b32.xlu0 %v2620, 104
  %v2689 = vpop.permute.xlu0 %2688
  %2690 = vrot.lane.b32.xlu0 %v2625, 104
  %v2691 = vpop.permute.xlu0 %2690
  %2696 = vrot.lane.b32.xlu0 %v2493, 96
  %v2697 = vpop.permute.xlu0 %2696
  %2698 = vrot.lane.b32.xlu0 %v2498, 96
  %v2699 = vpop.permute.xlu0 %2698
  %v2700 = vsel %vm341, %v2493, 0
  %v2702 = vsel %vm341, %v2498, 0
  %v2704 = vsel %vm341, %v2697, 0
  %v2706 = vsel %vm341, %v2699, 0
  %2708 = vmatprep.subr.mxu0 0.0
  %2709 = vmatpush1.xpose.msra.mxu0 %v2704
  %2710 = vmatprep.subr.mxu0 0.0
  %2711 = vmatpush1.xpose.msra.mxu0 %v2706
  %2712 = vmatprep.subr.mxu0 0.0
  %2713 = vmatpush1.xpose.msra.mxu0 0.0
  %2714 = vmatprep.subr.mxu0 0.0
  %2715 = vmatpush1.xpose.msra.mxu0 0.0
  %2716 = vmatprep.subr.mxu0 0.0
  %2717 = vmatpush1.xpose.msra.mxu0 0.0
  %2718 = vmatprep.subr.mxu0 0.0
  %2719 = vmatpush1.xpose.msra.mxu0 0.0
  %2720 = vmatprep.subr.mxu0 0.0
  %2721 = vmatpush1.xpose.msra.mxu0 0.0
  %2722 = vmatprep.subr.mxu0 0.0
  %2723 = vmatpush1.xpose.msra.mxu0 0.0
  %2724 = vmatprep.subr.mxu0 0.0
  %2725 = vmatpush1.xpose.msra.mxu0 0.0
  %2726 = vmatprep.subr.mxu0 0.0
  %2727 = vmatpush1.xpose.msra.mxu0 0.0
  %2728 = vmatprep.subr.mxu0 0.0
  %2729 = vmatpush1.xpose.msra.mxu0 0.0
  %2730 = vmatprep.subr.mxu0 0.0
  %2731 = vmatpush1.xpose.msra.mxu0 0.0
  %2732 = vmatprep.subr.mxu0 0.0
  %2733 = vmatpush1.xpose.msra.mxu0 0.0
  %2734 = vmatprep.subr.mxu0 0.0
  %2735 = vmatpush1.xpose.msra.mxu0 0.0
  %2736 = vmatprep.subr.mxu0 0.0
  %2737 = vmatpush1.xpose.msra.mxu0 0.0
  %2738 = vmatprep.subr.mxu0 0.0
  %2739 = vmatpush1.xpose.msra.mxu0 0.0
  %2740 = vmatprep.subr.mxu0 0.0
  %2741 = vmatpush1.xpose.msra.mxu0 0.0
  %2742 = vmatprep.subr.mxu0 0.0
  %2743 = vmatpush1.xpose.msra.mxu0 0.0
  %2744 = vmatprep.subr.mxu0 0.0
  %2745 = vmatpush1.xpose.msra.mxu0 0.0
  %2746 = vmatprep.subr.mxu0 0.0
  %2747 = vmatpush1.xpose.msra.mxu0 0.0
  %2748 = vmatprep.subr.mxu0 0.0
  %2749 = vmatpush1.xpose.msra.mxu0 0.0
  %2750 = vmatprep.subr.mxu0 0.0
  %2751 = vmatpush1.xpose.msra.mxu0 0.0
  %2752 = vmatprep.subr.mxu0 0.0
  %2753 = vmatpush1.xpose.msra.mxu0 0.0
  %2754 = vmatprep.subr.mxu0 0.0
  %2755 = vmatpush1.xpose.msra.mxu0 0.0
  %2756 = vmatprep.subr.mxu0 0.0
  %2757 = vmatpush1.xpose.msra.mxu0 0.0
  %2758 = vmatprep.subr.mxu0 0.0
  %2759 = vmatpush1.xpose.msra.mxu0 0.0
  %2760 = vmatprep.subr.mxu0 0.0
  %2761 = vmatpush1.xpose.msra.mxu0 0.0
  %2762 = vmatprep.subr.mxu0 0.0
  %2763 = vmatpush1.xpose.msra.mxu0 0.0
  %2764 = vmatprep.subr.mxu0 0.0
  %2765 = vmatpush1.xpose.msra.mxu0 0.0
  %2766 = vmatprep.subr.mxu0 0.0
  %2767 = vmatpush1.xpose.msra.mxu0 0.0
  %2768 = vmatprep.subr.mxu0 0.0
  %2769 = vmatpush1.xpose.msra.mxu0 0.0
  %2770 = vmatprep.subr.mxu0 0.0
  %2771 = vmatpush1.xpose.msra.mxu0 0.0
  %2772 = vmatprep.mubr.f32.mxu0 0.0
  %2773 = vmatmul.mubr.f32.gmra.mrb[0].mxu0 %v2700
  %v2774 = vpop.f32.mrb[0].mxu0
  %v2775 = vadd.f32 0.0, %v2774
  %v2776 = vpop.f32.mrb[0].mxu0
  %2777 = vmatprep.mubr.f32.mxu0 0.0
  %2778 = vmatmul.mubr.f32.gmra.mrb[0].mxu0 %v2702
  %v2779 = vpop.f32.mrb[0].mxu0
  %v2780 = vadd.f32 0.0, %v2779
  %v2781 = vpop.f32.mrb[0].mxu0
  %2782 = vdwg.mxu0
  %2783 = vrot.lane.b32.xlu0 %v2503, 96
  %v2784 = vpop.permute.xlu0 %2783
  %2785 = vrot.lane.b32.xlu0 %v2508, 96
  %v2786 = vpop.permute.xlu0 %2785
  %v2787 = vsel %vm341, %v2503, 0
  %v2789 = vsel %vm341, %v2508, 0
  %v2791 = vsel %vm341, %v2784, 0
  %v2793 = vsel %vm341, %v2786, 0
  %2795 = vmatprep.subr.mxu0 0.0
  %2796 = vmatpush1.xpose.msra.mxu0 %v2791
  %2797 = vmatprep.subr.mxu0 0.0
  %2798 = vmatpush1.xpose.msra.mxu0 %v2793
  %2799 = vmatprep.subr.mxu0 0.0
  %2800 = vmatpush1.xpose.msra.mxu0 0.0
  %2801 = vmatprep.subr.mxu0 0.0
  %2802 = vmatpush1.xpose.msra.mxu0 0.0
  %2803 = vmatprep.subr.mxu0 0.0
  %2804 = vmatpush1.xpose.msra.mxu0 0.0
  %2805 = vmatprep.subr.mxu0 0.0
  %2806 = vmatpush1.xpose.msra.mxu0 0.0
  %2807 = vmatprep.subr.mxu0 0.0
  %2808 = vmatpush1.xpose.msra.mxu0 0.0
  %2809 = vmatprep.subr.mxu0 0.0
  %2810 = vmatpush1.xpose.msra.mxu0 0.0
  %2811 = vmatprep.subr.mxu0 0.0
  %2812 = vmatpush1.xpose.msra.mxu0 0.0
  %2813 = vmatprep.subr.mxu0 0.0
  %2814 = vmatpush1.xpose.msra.mxu0 0.0
  %2815 = vmatprep.subr.mxu0 0.0
  %2816 = vmatpush1.xpose.msra.mxu0 0.0
  %2817 = vmatprep.subr.mxu0 0.0
  %2818 = vmatpush1.xpose.msra.mxu0 0.0
  %2819 = vmatprep.subr.mxu0 0.0
  %2820 = vmatpush1.xpose.msra.mxu0 0.0
  %2821 = vmatprep.subr.mxu0 0.0
  %2822 = vmatpush1.xpose.msra.mxu0 0.0
  %2823 = vmatprep.subr.mxu0 0.0
  %2824 = vmatpush1.xpose.msra.mxu0 0.0
  %2825 = vmatprep.subr.mxu0 0.0
  %2826 = vmatpush1.xpose.msra.mxu0 0.0
  %2827 = vmatprep.subr.mxu0 0.0
  %2828 = vmatpush1.xpose.msra.mxu0 0.0
  %2829 = vmatprep.subr.mxu0 0.0
  %2830 = vmatpush1.xpose.msra.mxu0 0.0
  %2831 = vmatprep.subr.mxu0 0.0
  %2832 = vmatpush1.xpose.msra.mxu0 0.0
  %2833 = vmatprep.subr.mxu0 0.0
  %2834 = vmatpush1.xpose.msra.mxu0 0.0
  %2835 = vmatprep.subr.mxu0 0.0
  %2836 = vmatpush1.xpose.msra.mxu0 0.0
  %2837 = vmatprep.subr.mxu0 0.0
  %2838 = vmatpush1.xpose.msra.mxu0 0.0
  %2839 = vmatprep.subr.mxu0 0.0
  %2840 = vmatpush1.xpose.msra.mxu0 0.0
  %2841 = vmatprep.subr.mxu0 0.0
  %2842 = vmatpush1.xpose.msra.mxu0 0.0
  %2843 = vmatprep.subr.mxu0 0.0
  %2844 = vmatpush1.xpose.msra.mxu0 0.0
  %2845 = vmatprep.subr.mxu0 0.0
  %2846 = vmatpush1.xpose.msra.mxu0 0.0
  %2847 = vmatprep.subr.mxu0 0.0
  %2848 = vmatpush1.xpose.msra.mxu0 0.0
  %2849 = vmatprep.subr.mxu0 0.0
  %2850 = vmatpush1.xpose.msra.mxu0 0.0
  %2851 = vmatprep.subr.mxu0 0.0
  %2852 = vmatpush1.xpose.msra.mxu0 0.0
  %2853 = vmatprep.subr.mxu0 0.0
  %2854 = vmatpush1.xpose.msra.mxu0 0.0
  %2855 = vmatprep.subr.mxu0 0.0
  %2856 = vmatpush1.xpose.msra.mxu0 0.0
  %2857 = vmatprep.subr.mxu0 0.0
  %2858 = vmatpush1.xpose.msra.mxu0 0.0
  %2859 = vmatprep.mubr.f32.mxu0 0.0
  %2860 = vmatmul.mubr.f32.gmra.mrb[0].mxu0 %v2787
  %v2861 = vpop.f32.mrb[0].mxu0
  %v2862 = vadd.f32 0.0, %v2861
  %v2863 = vpop.f32.mrb[0].mxu0
  %2864 = vmatprep.mubr.f32.mxu0 0.0
  %2865 = vmatmul.mubr.f32.gmra.mrb[0].mxu0 %v2789
  %v2866 = vpop.f32.mrb[0].mxu0
  %v2867 = vadd.f32 0.0, %v2866
  %v2868 = vpop.f32.mrb[0].mxu0
  %2869 = vdwg.mxu0
  %2870 = vrot.lane.b32.xlu0 %v2633, 96
  %v2871 = vpop.permute.xlu0 %2870
  %2872 = vrot.lane.b32.xlu0 %v2635, 96
  %v2873 = vpop.permute.xlu0 %2872
  %v2874 = vsel %vm341, %v2633, 0
  %v2876 = vsel %vm341, %v2635, 0
  %v2878 = vsel %vm341, %v2871, 0
  %v2880 = vsel %vm341, %v2873, 0
  %2882 = vmatprep.subr.mxu0 0.0
  %2883 = vmatpush1.xpose.msra.mxu0 %v2878
  %2884 = vmatprep.subr.mxu0 0.0
  %2885 = vmatpush1.xpose.msra.mxu0 %v2880
  %2886 = vmatprep.subr.mxu0 0.0
  %2887 = vmatpush1.xpose.msra.mxu0 0.0
  %2888 = vmatprep.subr.mxu0 0.0
  %2889 = vmatpush1.xpose.msra.mxu0 0.0
  %2890 = vmatprep.subr.mxu0 0.0
  %2891 = vmatpush1.xpose.msra.mxu0 0.0
  %2892 = vmatprep.subr.mxu0 0.0
  %2893 = vmatpush1.xpose.msra.mxu0 0.0
  %2894 = vmatprep.subr.mxu0 0.0
  %2895 = vmatpush1.xpose.msra.mxu0 0.0
  %2896 = vmatprep.subr.mxu0 0.0
  %2897 = vmatpush1.xpose.msra.mxu0 0.0
  %2898 = vmatprep.subr.mxu0 0.0
  %2899 = vmatpush1.xpose.msra.mxu0 0.0
  %2900 = vmatprep.subr.mxu0 0.0
  %2901 = vmatpush1.xpose.msra.mxu0 0.0
  %2902 = vmatprep.subr.mxu0 0.0
  %2903 = vmatpush1.xpose.msra.mxu0 0.0
  %2904 = vmatprep.subr.mxu0 0.0
  %2905 = vmatpush1.xpose.msra.mxu0 0.0
  %2906 = vmatprep.subr.mxu0 0.0
  %2907 = vmatpush1.xpose.msra.mxu0 0.0
  %2908 = vmatprep.subr.mxu0 0.0
  %2909 = vmatpush1.xpose.msra.mxu0 0.0
  %2910 = vmatprep.subr.mxu0 0.0
  %2911 = vmatpush1.xpose.msra.mxu0 0.0
  %2912 = vmatprep.subr.mxu0 0.0
  %2913 = vmatpush1.xpose.msra.mxu0 0.0
  %2914 = vmatprep.subr.mxu0 0.0
  %2915 = vmatpush1.xpose.msra.mxu0 0.0
  %2916 = vmatprep.subr.mxu0 0.0
  %2917 = vmatpush1.xpose.msra.mxu0 0.0
  %2918 = vmatprep.subr.mxu0 0.0
  %2919 = vmatpush1.xpose.msra.mxu0 0.0
  %2920 = vmatprep.subr.mxu0 0.0
  %2921 = vmatpush1.xpose.msra.mxu0 0.0
  %2922 = vmatprep.subr.mxu0 0.0
  %2923 = vmatpush1.xpose.msra.mxu0 0.0
  %2924 = vmatprep.subr.mxu0 0.0
  %2925 = vmatpush1.xpose.msra.mxu0 0.0
  %2926 = vmatprep.subr.mxu0 0.0
  %2927 = vmatpush1.xpose.msra.mxu0 0.0
  %2928 = vmatprep.subr.mxu0 0.0
  %2929 = vmatpush1.xpose.msra.mxu0 0.0
  %2930 = vmatprep.subr.mxu0 0.0
  %2931 = vmatpush1.xpose.msra.mxu0 0.0
  %2932 = vmatprep.subr.mxu0 0.0
  %2933 = vmatpush1.xpose.msra.mxu0 0.0
  %2934 = vmatprep.subr.mxu0 0.0
  %2935 = vmatpush1.xpose.msra.mxu0 0.0
  %2936 = vmatprep.subr.mxu0 0.0
  %2937 = vmatpush1.xpose.msra.mxu0 0.0
  %2938 = vmatprep.subr.mxu0 0.0
  %2939 = vmatpush1.xpose.msra.mxu0 0.0
  %2940 = vmatprep.subr.mxu0 0.0
  %2941 = vmatpush1.xpose.msra.mxu0 0.0
  %2942 = vmatprep.subr.mxu0 0.0
  %2943 = vmatpush1.xpose.msra.mxu0 0.0
  %2944 = vmatprep.subr.mxu0 0.0
  %2945 = vmatpush1.xpose.msra.mxu0 0.0
  %2946 = vmatprep.mubr.f32.mxu0 0.0
  %2947 = vmatmul.mubr.f32.gmra.mrb[0].mxu0 %v2874
  %v2948 = vpop.f32.mrb[0].mxu0
  %v2949 = vadd.f32 0.0, %v2948
  %v2950 = vpop.f32.mrb[0].mxu0
  %2951 = vmatprep.mubr.f32.mxu0 0.0
  %2952 = vmatmul.mubr.f32.gmra.mrb[0].mxu0 %v2876
  %v2953 = vpop.f32.mrb[0].mxu0
  %v2954 = vadd.f32 0.0, %v2953
  %v2955 = vpop.f32.mrb[0].mxu0
  %2956 = vdwg.mxu0
  %2957 = vrot.lane.b32.xlu0 %v2637, 96
  %v2958 = vpop.permute.xlu0 %2957
  %2959 = vrot.lane.b32.xlu0 %v2639, 96
  %v2960 = vpop.permute.xlu0 %2959
  %v2961 = vsel %vm341, %v2637, 0
  %v2963 = vsel %vm341, %v2639, 0
  %v2965 = vsel %vm341, %v2958, 0
  %v2967 = vsel %vm341, %v2960, 0
  %2969 = vmatprep.subr.mxu0 0.0
  %2970 = vmatpush1.xpose.msra.mxu0 %v2965
  %2971 = vmatprep.subr.mxu0 0.0
  %2972 = vmatpush1.xpose.msra.mxu0 %v2967
  %2973 = vmatprep.subr.mxu0 0.0
  %2974 = vmatpush1.xpose.msra.mxu0 0.0
  %2975 = vmatprep.subr.mxu0 0.0
  %2976 = vmatpush1.xpose.msra.mxu0 0.0
  %2977 = vmatprep.subr.mxu0 0.0
  %2978 = vmatpush1.xpose.msra.mxu0 0.0
  %2979 = vmatprep.subr.mxu0 0.0
  %2980 = vmatpush1.xpose.msra.mxu0 0.0
  %2981 = vmatprep.subr.mxu0 0.0
  %2982 = vmatpush1.xpose.msra.mxu0 0.0
  %2983 = vmatprep.subr.mxu0 0.0
  %2984 = vmatpush1.xpose.msra.mxu0 0.0
  %2985 = vmatprep.subr.mxu0 0.0
  %2986 = vmatpush1.xpose.msra.mxu0 0.0
  %2987 = vmatprep.subr.mxu0 0.0
  %2988 = vmatpush1.xpose.msra.mxu0 0.0
  %2989 = vmatprep.subr.mxu0 0.0
  %2990 = vmatpush1.xpose.msra.mxu0 0.0
  %2991 = vmatprep.subr.mxu0 0.0
  %2992 = vmatpush1.xpose.msra.mxu0 0.0
  %2993 = vmatprep.subr.mxu0 0.0
  %2994 = vmatpush1.xpose.msra.mxu0 0.0
  %2995 = vmatprep.subr.mxu0 0.0
  %2996 = vmatpush1.xpose.msra.mxu0 0.0
  %2997 = vmatprep.subr.mxu0 0.0
  %2998 = vmatpush1.xpose.msra.mxu0 0.0
  %2999 = vmatprep.subr.mxu0 0.0
  %3000 = vmatpush1.xpose.msra.mxu0 0.0
  %3001 = vmatprep.subr.mxu0 0.0
  %3002 = vmatpush1.xpose.msra.mxu0 0.0
  %3003 = vmatprep.subr.mxu0 0.0
  %3004 = vmatpush1.xpose.msra.mxu0 0.0
  %3005 = vmatprep.subr.mxu0 0.0
  %3006 = vmatpush1.xpose.msra.mxu0 0.0
  %3007 = vmatprep.subr.mxu0 0.0
  %3008 = vmatpush1.xpose.msra.mxu0 0.0
  %3009 = vmatprep.subr.mxu0 0.0
  %3010 = vmatpush1.xpose.msra.mxu0 0.0
  %3011 = vmatprep.subr.mxu0 0.0
  %3012 = vmatpush1.xpose.msra.mxu0 0.0
  %3013 = vmatprep.subr.mxu0 0.0
  %3014 = vmatpush1.xpose.msra.mxu0 0.0
  %3015 = vmatprep.subr.mxu0 0.0
  %3016 = vmatpush1.xpose.msra.mxu0 0.0
  %3017 = vmatprep.subr.mxu0 0.0
  %3018 = vmatpush1.xpose.msra.mxu0 0.0
  %3019 = vmatprep.subr.mxu0 0.0
  %3020 = vmatpush1.xpose.msra.mxu0 0.0
  %3021 = vmatprep.subr.mxu0 0.0
  %3022 = vmatpush1.xpose.msra.mxu0 0.0
  %3023 = vmatprep.subr.mxu0 0.0
  %3024 = vmatpush1.xpose.msra.mxu0 0.0
  %3025 = vmatprep.subr.mxu0 0.0
  %3026 = vmatpush1.xpose.msra.mxu0 0.0
  %3027 = vmatprep.subr.mxu0 0.0
  %3028 = vmatpush1.xpose.msra.mxu0 0.0
  %3029 = vmatprep.subr.mxu0 0.0
  %3030 = vmatpush1.xpose.msra.mxu0 0.0
  %3031 = vmatprep.subr.mxu0 0.0
  %3032 = vmatpush1.xpose.msra.mxu0 0.0
  %3033 = vmatprep.mubr.f32.mxu0 0.0
  %3034 = vmatmul.mubr.f32.gmra.mrb[0].mxu0 %v2961
  %v3035 = vpop.f32.mrb[0].mxu0
  %v3036 = vadd.f32 0.0, %v3035
  %v3037 = vpop.f32.mrb[0].mxu0
  %3038 = vmatprep.mubr.f32.mxu0 0.0
  %3039 = vmatmul.mubr.f32.gmra.mrb[0].mxu0 %v2963
  %v3040 = vpop.f32.mrb[0].mxu0
  %v3041 = vadd.f32 0.0, %v3040
  %v3042 = vpop.f32.mrb[0].mxu0
  %3043 = vdwg.mxu0
  %3044 = vrot.lane.b32.xlu0 %v2641, 96
  %v3045 = vpop.permute.xlu0 %3044
  %3046 = vrot.lane.b32.xlu0 %v2643, 96
  %v3047 = vpop.permute.xlu0 %3046
  %v3048 = vsel %vm341, %v2641, 0
  %v3050 = vsel %vm341, %v2643, 0
  %v3052 = vsel %vm341, %v3045, 0
  %v3054 = vsel %vm341, %v3047, 0
  %3056 = vmatprep.subr.mxu0 0.0
  %3057 = vmatpush1.xpose.msra.mxu0 %v3052
  %3058 = vmatprep.subr.mxu0 0.0
  %3059 = vmatpush1.xpose.msra.mxu0 %v3054
  %3060 = vmatprep.subr.mxu0 0.0
  %3061 = vmatpush1.xpose.msra.mxu0 0.0
  %3062 = vmatprep.subr.mxu0 0.0
  %3063 = vmatpush1.xpose.msra.mxu0 0.0
  %3064 = vmatprep.subr.mxu0 0.0
  %3065 = vmatpush1.xpose.msra.mxu0 0.0
  %3066 = vmatprep.subr.mxu0 0.0
  %3067 = vmatpush1.xpose.msra.mxu0 0.0
  %3068 = vmatprep.subr.mxu0 0.0
  %3069 = vmatpush1.xpose.msra.mxu0 0.0
  %3070 = vmatprep.subr.mxu0 0.0
  %3071 = vmatpush1.xpose.msra.mxu0 0.0
  %3072 = vmatprep.subr.mxu0 0.0
  %3073 = vmatpush1.xpose.msra.mxu0 0.0
  %3074 = vmatprep.subr.mxu0 0.0
  %3075 = vmatpush1.xpose.msra.mxu0 0.0
  %3076 = vmatprep.subr.mxu0 0.0
  %3077 = vmatpush1.xpose.msra.mxu0 0.0
  %3078 = vmatprep.subr.mxu0 0.0
  %3079 = vmatpush1.xpose.msra.mxu0 0.0
  %3080 = vmatprep.subr.mxu0 0.0
  %3081 = vmatpush1.xpose.msra.mxu0 0.0
  %3082 = vmatprep.subr.mxu0 0.0
  %3083 = vmatpush1.xpose.msra.mxu0 0.0
  %3084 = vmatprep.subr.mxu0 0.0
  %3085 = vmatpush1.xpose.msra.mxu0 0.0
  %3086 = vmatprep.subr.mxu0 0.0
  %3087 = vmatpush1.xpose.msra.mxu0 0.0
  %3088 = vmatprep.subr.mxu0 0.0
  %3089 = vmatpush1.xpose.msra.mxu0 0.0
  %3090 = vmatprep.subr.mxu0 0.0
  %3091 = vmatpush1.xpose.msra.mxu0 0.0
  %3092 = vmatprep.subr.mxu0 0.0
  %3093 = vmatpush1.xpose.msra.mxu0 0.0
  %3094 = vmatprep.subr.mxu0 0.0
  %3095 = vmatpush1.xpose.msra.mxu0 0.0
  %3096 = vmatprep.subr.mxu0 0.0
  %3097 = vmatpush1.xpose.msra.mxu0 0.0
  %3098 = vmatprep.subr.mxu0 0.0
  %3099 = vmatpush1.xpose.msra.mxu0 0.0
  %3100 = vmatprep.subr.mxu0 0.0
  %3101 = vmatpush1.xpose.msra.mxu0 0.0
  %3102 = vmatprep.subr.mxu0 0.0
  %3103 = vmatpush1.xpose.msra.mxu0 0.0
  %3104 = vmatprep.subr.mxu0 0.0
  %3105 = vmatpush1.xpose.msra.mxu0 0.0
  %3106 = vmatprep.subr.mxu0 0.0
  %3107 = vmatpush1.xpose.msra.mxu0 0.0
  %3108 = vmatprep.subr.mxu0 0.0
  %3109 = vmatpush1.xpose.msra.mxu0 0.0
  %3110 = vmatprep.subr.mxu0 0.0
  %3111 = vmatpush1.xpose.msra.mxu0 0.0
  %3112 = vmatprep.subr.mxu0 0.0
  %3113 = vmatpush1.xpose.msra.mxu0 0.0
  %3114 = vmatprep.subr.mxu0 0.0
  %3115 = vmatpush1.xpose.msra.mxu0 0.0
  %3116 = vmatprep.subr.mxu0 0.0
  %3117 = vmatpush1.xpose.msra.mxu0 0.0
  %3118 = vmatprep.subr.mxu0 0.0
  %3119 = vmatpush1.xpose.msra.mxu0 0.0
  %3120 = vmatprep.mubr.f32.mxu0 0.0
  %3121 = vmatmul.mubr.f32.gmra.mrb[0].mxu0 %v3048
  %v3122 = vpop.f32.mrb[0].mxu0
  %v3123 = vadd.f32 0.0, %v3122
  %v3124 = vpop.f32.mrb[0].mxu0
  %3125 = vmatprep.mubr.f32.mxu0 0.0
  %3126 = vmatmul.mubr.f32.gmra.mrb[0].mxu0 %v3050
  %v3127 = vpop.f32.mrb[0].mxu0
  %v3128 = vadd.f32 0.0, %v3127
  %v3129 = vpop.f32.mrb[0].mxu0
  %3130 = vdwg.mxu0
  %3131 = vrot.lane.b32.xlu0 %v2645, 96
  %v3132 = vpop.permute.xlu0 %3131
  %3133 = vrot.lane.b32.xlu0 %v2647, 96
  %v3134 = vpop.permute.xlu0 %3133
  %v3135 = vsel %vm341, %v2645, 0
  %v3137 = vsel %vm341, %v2647, 0
  %v3139 = vsel %vm341, %v3132, 0
  %v3141 = vsel %vm341, %v3134, 0
  %3143 = vmatprep.subr.mxu0 0.0
  %3144 = vmatpush1.xpose.msra.mxu0 %v3139
  %3145 = vmatprep.subr.mxu0 0.0
  %3146 = vmatpush1.xpose.msra.mxu0 %v3141
  %3147 = vmatprep.subr.mxu0 0.0
  %3148 = vmatpush1.xpose.msra.mxu0 0.0
  %3149 = vmatprep.subr.mxu0 0.0
  %3150 = vmatpush1.xpose.msra.mxu0 0.0
  %3151 = vmatprep.subr.mxu0 0.0
  %3152 = vmatpush1.xpose.msra.mxu0 0.0
  %3153 = vmatprep.subr.mxu0 0.0
  %3154 = vmatpush1.xpose.msra.mxu0 0.0
  %3155 = vmatprep.subr.mxu0 0.0
  %3156 = vmatpush1.xpose.msra.mxu0 0.0
  %3157 = vmatprep.subr.mxu0 0.0
  %3158 = vmatpush1.xpose.msra.mxu0 0.0
  %3159 = vmatprep.subr.mxu0 0.0
  %3160 = vmatpush1.xpose.msra.mxu0 0.0
  %3161 = vmatprep.subr.mxu0 0.0
  %3162 = vmatpush1.xpose.msra.mxu0 0.0
  %3163 = vmatprep.subr.mxu0 0.0
  %3164 = vmatpush1.xpose.msra.mxu0 0.0
  %3165 = vmatprep.subr.mxu0 0.0
  %3166 = vmatpush1.xpose.msra.mxu0 0.0
  %3167 = vmatprep.subr.mxu0 0.0
  %3168 = vmatpush1.xpose.msra.mxu0 0.0
  %3169 = vmatprep.subr.mxu0 0.0
  %3170 = vmatpush1.xpose.msra.mxu0 0.0
  %3171 = vmatprep.subr.mxu0 0.0
  %3172 = vmatpush1.xpose.msra.mxu0 0.0
  %3173 = vmatprep.subr.mxu0 0.0
  %3174 = vmatpush1.xpose.msra.mxu0 0.0
  %3175 = vmatprep.subr.mxu0 0.0
  %3176 = vmatpush1.xpose.msra.mxu0 0.0
  %3177 = vmatprep.subr.mxu0 0.0
  %3178 = vmatpush1.xpose.msra.mxu0 0.0
  %3179 = vmatprep.subr.mxu0 0.0
  %3180 = vmatpush1.xpose.msra.mxu0 0.0
  %3181 = vmatprep.subr.mxu0 0.0
  %3182 = vmatpush1.xpose.msra.mxu0 0.0
  %3183 = vmatprep.subr.mxu0 0.0
  %3184 = vmatpush1.xpose.msra.mxu0 0.0
  %3185 = vmatprep.subr.mxu0 0.0
  %3186 = vmatpush1.xpose.msra.mxu0 0.0
  %3187 = vmatprep.subr.mxu0 0.0
  %3188 = vmatpush1.xpose.msra.mxu0 0.0
  %3189 = vmatprep.subr.mxu0 0.0
  %3190 = vmatpush1.xpose.msra.mxu0 0.0
  %3191 = vmatprep.subr.mxu0 0.0
  %3192 = vmatpush1.xpose.msra.mxu0 0.0
  %3193 = vmatprep.subr.mxu0 0.0
  %3194 = vmatpush1.xpose.msra.mxu0 0.0
  %3195 = vmatprep.subr.mxu0 0.0
  %3196 = vmatpush1.xpose.msra.mxu0 0.0
  %3197 = vmatprep.subr.mxu0 0.0
  %3198 = vmatpush1.xpose.msra.mxu0 0.0
  %3199 = vmatprep.subr.mxu0 0.0
  %3200 = vmatpush1.xpose.msra.mxu0 0.0
  %3201 = vmatprep.subr.mxu0 0.0
  %3202 = vmatpush1.xpose.msra.mxu0 0.0
  %3203 = vmatprep.subr.mxu0 0.0
  %3204 = vmatpush1.xpose.msra.mxu0 0.0
  %3205 = vmatprep.subr.mxu0 0.0
  %3206 = vmatpush1.xpose.msra.mxu0 0.0
  %3207 = vmatprep.mubr.f32.mxu0 0.0
  %3208 = vmatmul.mubr.f32.gmra.mrb[0].mxu0 %v3135
  %v3209 = vpop.f32.mrb[0].mxu0
  %v3210 = vadd.f32 0.0, %v3209
  %v3211 = vpop.f32.mrb[0].mxu0
  %3212 = vmatprep.mubr.f32.mxu0 0.0
  %3213 = vmatmul.mubr.f32.gmra.mrb[0].mxu0 %v3137
  %v3214 = vpop.f32.mrb[0].mxu0
  %v3215 = vadd.f32 0.0, %v3214
  %v3216 = vpop.f32.mrb[0].mxu0
  %3217 = vdwg.mxu0
  %3218 = vrot.lane.b32.xlu0 %v2649, 96
  %v3219 = vpop.permute.xlu0 %3218
  %3220 = vrot.lane.b32.xlu0 %v2651, 96
  %v3221 = vpop.permute.xlu0 %3220
  %v3222 = vsel %vm341, %v2649, 0
  %v3224 = vsel %vm341, %v2651, 0
  %v3226 = vsel %vm341, %v3219, 0
  %v3228 = vsel %vm341, %v3221, 0
  %3230 = vmatprep.subr.mxu0 0.0
  %3231 = vmatpush1.xpose.msra.mxu0 %v3226
  %3232 = vmatprep.subr.mxu0 0.0
  %3233 = vmatpush1.xpose.msra.mxu0 %v3228
  %3234 = vmatprep.subr.mxu0 0.0
  %3235 = vmatpush1.xpose.msra.mxu0 0.0
  %3236 = vmatprep.subr.mxu0 0.0
  %3237 = vmatpush1.xpose.msra.mxu0 0.0
  %3238 = vmatprep.subr.mxu0 0.0
  %3239 = vmatpush1.xpose.msra.mxu0 0.0
  %3240 = vmatprep.subr.mxu0 0.0
  %3241 = vmatpush1.xpose.msra.mxu0 0.0
  %3242 = vmatprep.subr.mxu0 0.0
  %3243 = vmatpush1.xpose.msra.mxu0 0.0
  %3244 = vmatprep.subr.mxu0 0.0
  %3245 = vmatpush1.xpose.msra.mxu0 0.0
  %3246 = vmatprep.subr.mxu0 0.0
  %3247 = vmatpush1.xpose.msra.mxu0 0.0
  %3248 = vmatprep.subr.mxu0 0.0
  %3249 = vmatpush1.xpose.msra.mxu0 0.0
  %3250 = vmatprep.subr.mxu0 0.0
  %3251 = vmatpush1.xpose.msra.mxu0 0.0
  %3252 = vmatprep.subr.mxu0 0.0
  %3253 = vmatpush1.xpose.msra.mxu0 0.0
  %3254 = vmatprep.subr.mxu0 0.0
  %3255 = vmatpush1.xpose.msra.mxu0 0.0
  %3256 = vmatprep.subr.mxu0 0.0
  %3257 = vmatpush1.xpose.msra.mxu0 0.0
  %3258 = vmatprep.subr.mxu0 0.0
  %3259 = vmatpush1.xpose.msra.mxu0 0.0
  %3260 = vmatprep.subr.mxu0 0.0
  %3261 = vmatpush1.xpose.msra.mxu0 0.0
  %3262 = vmatprep.subr.mxu0 0.0
  %3263 = vmatpush1.xpose.msra.mxu0 0.0
  %3264 = vmatprep.subr.mxu0 0.0
  %3265 = vmatpush1.xpose.msra.mxu0 0.0
  %3266 = vmatprep.subr.mxu0 0.0
  %3267 = vmatpush1.xpose.msra.mxu0 0.0
  %3268 = vmatprep.subr.mxu0 0.0
  %3269 = vmatpush1.xpose.msra.mxu0 0.0
  %3270 = vmatprep.subr.mxu0 0.0
  %3271 = vmatpush1.xpose.msra.mxu0 0.0
  %3272 = vmatprep.subr.mxu0 0.0
  %3273 = vmatpush1.xpose.msra.mxu0 0.0
  %3274 = vmatprep.subr.mxu0 0.0
  %3275 = vmatpush1.xpose.msra.mxu0 0.0
  %3276 = vmatprep.subr.mxu0 0.0
  %3277 = vmatpush1.xpose.msra.mxu0 0.0
  %3278 = vmatprep.subr.mxu0 0.0
  %3279 = vmatpush1.xpose.msra.mxu0 0.0
  %3280 = vmatprep.subr.mxu0 0.0
  %3281 = vmatpush1.xpose.msra.mxu0 0.0
  %3282 = vmatprep.subr.mxu0 0.0
  %3283 = vmatpush1.xpose.msra.mxu0 0.0
  %3284 = vmatprep.subr.mxu0 0.0
  %3285 = vmatpush1.xpose.msra.mxu0 0.0
  %3286 = vmatprep.subr.mxu0 0.0
  %3287 = vmatpush1.xpose.msra.mxu0 0.0
  %3288 = vmatprep.subr.mxu0 0.0
  %3289 = vmatpush1.xpose.msra.mxu0 0.0
  %3290 = vmatprep.subr.mxu0 0.0
  %3291 = vmatpush1.xpose.msra.mxu0 0.0
  %3292 = vmatprep.subr.mxu0 0.0
  %3293 = vmatpush1.xpose.msra.mxu0 0.0
  %3294 = vmatprep.mubr.f32.mxu0 0.0
  %3295 = vmatmul.mubr.f32.gmra.mrb[0].mxu0 %v3222
  %v3296 = vpop.f32.mrb[0].mxu0
  %v3297 = vadd.f32 0.0, %v3296
  %v3298 = vpop.f32.mrb[0].mxu0
  %3299 = vmatprep.mubr.f32.mxu0 0.0
  %3300 = vmatmul.mubr.f32.gmra.mrb[0].mxu0 %v3224
  %v3301 = vpop.f32.mrb[0].mxu0
  %v3302 = vadd.f32 0.0, %v3301
  %v3303 = vpop.f32.mrb[0].mxu0
  %3304 = vdwg.mxu0
  %3305 = vrot.lane.b32.xlu0 %v2653, 96
  %v3306 = vpop.permute.xlu0 %3305
  %3307 = vrot.lane.b32.xlu0 %v2655, 96
  %v3308 = vpop.permute.xlu0 %3307
  %v3309 = vsel %vm341, %v2653, 0
  %v3311 = vsel %vm341, %v2655, 0
  %v3313 = vsel %vm341, %v3306, 0
  %v3315 = vsel %vm341, %v3308, 0
  %3317 = vmatprep.subr.mxu0 0.0
  %3318 = vmatpush1.xpose.msra.mxu0 %v3313
  %3319 = vmatprep.subr.mxu0 0.0
  %3320 = vmatpush1.xpose.msra.mxu0 %v3315
  %3321 = vmatprep.subr.mxu0 0.0
  %3322 = vmatpush1.xpose.msra.mxu0 0.0
  %3323 = vmatprep.subr.mxu0 0.0
  %3324 = vmatpush1.xpose.msra.mxu0 0.0
  %3325 = vmatprep.subr.mxu0 0.0
  %3326 = vmatpush1.xpose.msra.mxu0 0.0
  %3327 = vmatprep.subr.mxu0 0.0
  %3328 = vmatpush1.xpose.msra.mxu0 0.0
  %3329 = vmatprep.subr.mxu0 0.0
  %3330 = vmatpush1.xpose.msra.mxu0 0.0
  %3331 = vmatprep.subr.mxu0 0.0
  %3332 = vmatpush1.xpose.msra.mxu0 0.0
  %3333 = vmatprep.subr.mxu0 0.0
  %3334 = vmatpush1.xpose.msra.mxu0 0.0
  %3335 = vmatprep.subr.mxu0 0.0
  %3336 = vmatpush1.xpose.msra.mxu0 0.0
  %3337 = vmatprep.subr.mxu0 0.0
  %3338 = vmatpush1.xpose.msra.mxu0 0.0
  %3339 = vmatprep.subr.mxu0 0.0
  %3340 = vmatpush1.xpose.msra.mxu0 0.0
  %3341 = vmatprep.subr.mxu0 0.0
  %3342 = vmatpush1.xpose.msra.mxu0 0.0
  %3343 = vmatprep.subr.mxu0 0.0
  %3344 = vmatpush1.xpose.msra.mxu0 0.0
  %3345 = vmatprep.subr.mxu0 0.0
  %3346 = vmatpush1.xpose.msra.mxu0 0.0
  %3347 = vmatprep.subr.mxu0 0.0
  %3348 = vmatpush1.xpose.msra.mxu0 0.0
  %3349 = vmatprep.subr.mxu0 0.0
  %3350 = vmatpush1.xpose.msra.mxu0 0.0
  %3351 = vmatprep.subr.mxu0 0.0
  %3352 = vmatpush1.xpose.msra.mxu0 0.0
  %3353 = vmatprep.subr.mxu0 0.0
  %3354 = vmatpush1.xpose.msra.mxu0 0.0
  %3355 = vmatprep.subr.mxu0 0.0
  %3356 = vmatpush1.xpose.msra.mxu0 0.0
  %3357 = vmatprep.subr.mxu0 0.0
  %3358 = vmatpush1.xpose.msra.mxu0 0.0
  %3359 = vmatprep.subr.mxu0 0.0
  %3360 = vmatpush1.xpose.msra.mxu0 0.0
  %3361 = vmatprep.subr.mxu0 0.0
  %3362 = vmatpush1.xpose.msra.mxu0 0.0
  %3363 = vmatprep.subr.mxu0 0.0
  %3364 = vmatpush1.xpose.msra.mxu0 0.0
  %3365 = vmatprep.subr.mxu0 0.0
  %3366 = vmatpush1.xpose.msra.mxu0 0.0
  %3367 = vmatprep.subr.mxu0 0.0
  %3368 = vmatpush1.xpose.msra.mxu0 0.0
  %3369 = vmatprep.subr.mxu0 0.0
  %3370 = vmatpush1.xpose.msra.mxu0 0.0
  %3371 = vmatprep.subr.mxu0 0.0
  %3372 = vmatpush1.xpose.msra.mxu0 0.0
  %3373 = vmatprep.subr.mxu0 0.0
  %3374 = vmatpush1.xpose.msra.mxu0 0.0
  %3375 = vmatprep.subr.mxu0 0.0
  %3376 = vmatpush1.xpose.msra.mxu0 0.0
  %3377 = vmatprep.subr.mxu0 0.0
  %3378 = vmatpush1.xpose.msra.mxu0 0.0
  %3379 = vmatprep.subr.mxu0 0.0
  %3380 = vmatpush1.xpose.msra.mxu0 0.0
  %3381 = vmatprep.mubr.f32.mxu0 0.0
  %3382 = vmatmul.mubr.f32.gmra.mrb[0].mxu0 %v3309
  %v3383 = vpop.f32.mrb[0].mxu0
  %v3384 = vadd.f32 0.0, %v3383
  %v3385 = vpop.f32.mrb[0].mxu0
  %3386 = vmatprep.mubr.f32.mxu0 0.0
  %3387 = vmatmul.mubr.f32.gmra.mrb[0].mxu0 %v3311
  %v3388 = vpop.f32.mrb[0].mxu0
  %v3389 = vadd.f32 0.0, %v3388
  %v3390 = vpop.f32.mrb[0].mxu0
  %3391 = vdwg.mxu0
  %v3392 = vsel %vm1034, %v2775, -inf
  %3393 = vmax.xlane.f32.xlu0 %v3392
  %v3394 = vpop.xlane.xlu0 %3393
  %v3395 = vsel %vm1034, %v2780, -inf
  %3396 = vmax.xlane.f32.xlu0 %v3395
  %v3397 = vpop.xlane.xlu0 %3396
  %v3398 = vsel %vm1034, %v2862, -inf
  %3399 = vmax.xlane.f32.xlu0 %v3398
  %v3400 = vpop.xlane.xlu0 %3399
  %v3401 = vsel %vm1034, %v2867, -inf
  %3402 = vmax.xlane.f32.xlu0 %v3401
  %v3403 = vpop.xlane.xlu0 %3402
  %v3404 = vsel %vm1034, %v2949, -inf
  %3405 = vmax.xlane.f32.xlu0 %v3404
  %v3406 = vpop.xlane.xlu0 %3405
  %v3407 = vsel %vm1034, %v2954, -inf
  %3408 = vmax.xlane.f32.xlu0 %v3407
  %v3409 = vpop.xlane.xlu0 %3408
  %v3410 = vsel %vm1034, %v3036, -inf
  %3411 = vmax.xlane.f32.xlu0 %v3410
  %v3412 = vpop.xlane.xlu0 %3411
  %v3413 = vsel %vm1034, %v3041, -inf
  %3414 = vmax.xlane.f32.xlu0 %v3413
  %v3415 = vpop.xlane.xlu0 %3414
  %v3416 = vsel %vm1034, %v3123, -inf
  %3417 = vmax.xlane.f32.xlu0 %v3416
  %v3418 = vpop.xlane.xlu0 %3417
  %v3419 = vsel %vm1034, %v3128, -inf
  %3420 = vmax.xlane.f32.xlu0 %v3419
  %v3421 = vpop.xlane.xlu0 %3420
  %v3422 = vsel %vm1034, %v3210, -inf
  %3423 = vmax.xlane.f32.xlu0 %v3422
  %v3424 = vpop.xlane.xlu0 %3423
  %v3425 = vsel %vm1034, %v3215, -inf
  %3426 = vmax.xlane.f32.xlu0 %v3425
  %v3427 = vpop.xlane.xlu0 %3426
  %v3428 = vsel %vm1034, %v3297, -inf
  %3429 = vmax.xlane.f32.xlu0 %v3428
  %v3430 = vpop.xlane.xlu0 %3429
  %v3431 = vsel %vm1034, %v3302, -inf
  %3432 = vmax.xlane.f32.xlu0 %v3431
  %v3433 = vpop.xlane.xlu0 %3432
  %v3434 = vsel %vm1034, %v3384, -inf
  %3435 = vmax.xlane.f32.xlu0 %v3434
  %v3436 = vpop.xlane.xlu0 %3435
  %v3437 = vsel %vm1034, %v3389, -inf
  %3438 = vmax.xlane.f32.xlu0 %v3437
  %v3439 = vpop.xlane.xlu0 %3438
  %v3440 = vsub.f32 %v2775, %v3394
  %v3441 = vsub.f32 %v2780, %v3397
  %v3442 = vsub.f32 %v2862, %v3400
  %v3443 = vsub.f32 %v2867, %v3403
  %v3444 = vsub.f32 %v2949, %v3406
  %v3445 = vsub.f32 %v2954, %v3409
  %v3446 = vsub.f32 %v3036, %v3412
  %v3447 = vsub.f32 %v3041, %v3415
  %v3448 = vsub.f32 %v3123, %v3418
  %v3449 = vsub.f32 %v3128, %v3421
  %v3450 = vsub.f32 %v3210, %v3424
  %v3451 = vsub.f32 %v3215, %v3427
  %v3452 = vsub.f32 %v3297, %v3430
  %v3453 = vsub.f32 %v3302, %v3433
  %v3454 = vsub.f32 %v3384, %v3436
  %v3455 = vsub.f32 %v3389, %v3439
  %v3456 = vmul.f32 %v3440, 1.442695
  %v3457 = vpow.pop %v3456
  %v3458 = vmul.f32 %v3441, 1.442695
  %v3459 = vpow.pop %v3458
  %v3460 = vmul.f32 %v3442, 1.442695
  %v3461 = vpow.pop %v3460
  %v3462 = vmul.f32 %v3443, 1.442695
  %v3463 = vpow.pop %v3462
  %v3464 = vmul.f32 %v3444, 1.442695
  %v3465 = vpow.pop %v3464
  %v3466 = vmul.f32 %v3445, 1.442695
  %v3467 = vpow.pop %v3466
  %v3468 = vmul.f32 %v3446, 1.442695
  %v3469 = vpow.pop %v3468
  %v3470 = vmul.f32 %v3447, 1.442695
  %v3471 = vpow.pop %v3470
  %v3472 = vmul.f32 %v3448, 1.442695
  %v3473 = vpow.pop %v3472
  %v3474 = vmul.f32 %v3449, 1.442695
  %v3475 = vpow.pop %v3474
  %v3476 = vmul.f32 %v3450, 1.442695
  %v3477 = vpow.pop %v3476
  %v3478 = vmul.f32 %v3451, 1.442695
  %v3479 = vpow.pop %v3478
  %v3480 = vmul.f32 %v3452, 1.442695
  %v3481 = vpow.pop %v3480
  %v3482 = vmul.f32 %v3453, 1.442695
  %v3483 = vpow.pop %v3482
  %v3484 = vmul.f32 %v3454, 1.442695
  %v3485 = vpow.pop %v3484
  %v3486 = vmul.f32 %v3455, 1.442695
  %v3487 = vpow.pop %v3486
  %v3488 = vsel %vm1034, %v3457, 0.0
  %3489 = vadd.xlane.f32.xlu0 %v3488
  %v3490 = vpop.xlane.xlu0 %3489
  %v3491 = vsel %vm1034, %v3459, 0.0
  %3492 = vadd.xlane.f32.xlu0 %v3491
  %v3493 = vpop.xlane.xlu0 %3492
  %v3494 = vsel %vm1034, %v3461, 0.0
  %3495 = vadd.xlane.f32.xlu0 %v3494
  %v3496 = vpop.xlane.xlu0 %3495
  %v3497 = vsel %vm1034, %v3463, 0.0
  %3498 = vadd.xlane.f32.xlu0 %v3497
  %v3499 = vpop.xlane.xlu0 %3498
  %v3500 = vsel %vm1034, %v3465, 0.0
  %3501 = vadd.xlane.f32.xlu0 %v3500
  %v3502 = vpop.xlane.xlu0 %3501
  %v3503 = vsel %vm1034, %v3467, 0.0
  %3504 = vadd.xlane.f32.xlu0 %v3503
  %v3505 = vpop.xlane.xlu0 %3504
  %v3506 = vsel %vm1034, %v3469, 0.0
  %3507 = vadd.xlane.f32.xlu0 %v3506
  %v3508 = vpop.xlane.xlu0 %3507
  %v3509 = vsel %vm1034, %v3471, 0.0
  %3510 = vadd.xlane.f32.xlu0 %v3509
  %v3511 = vpop.xlane.xlu0 %3510
  %v3512 = vsel %vm1034, %v3473, 0.0
  %3513 = vadd.xlane.f32.xlu0 %v3512
  %v3514 = vpop.xlane.xlu0 %3513
  %v3515 = vsel %vm1034, %v3475, 0.0
  %3516 = vadd.xlane.f32.xlu0 %v3515
  %v3517 = vpop.xlane.xlu0 %3516
  %v3518 = vsel %vm1034, %v3477, 0.0
  %3519 = vadd.xlane.f32.xlu0 %v3518
  %v3520 = vpop.xlane.xlu0 %3519
  %v3521 = vsel %vm1034, %v3479, 0.0
  %3522 = vadd.xlane.f32.xlu0 %v3521
  %v3523 = vpop.xlane.xlu0 %3522
  %v3524 = vsel %vm1034, %v3481, 0.0
  %3525 = vadd.xlane.f32.xlu0 %v3524
  %v3526 = vpop.xlane.xlu0 %3525
  %v3527 = vsel %vm1034, %v3483, 0.0
  %3528 = vadd.xlane.f32.xlu0 %v3527
  %v3529 = vpop.xlane.xlu0 %3528
  %v3530 = vsel %vm1034, %v3485, 0.0
  %3531 = vadd.xlane.f32.xlu0 %v3530
  %v3532 = vpop.xlane.xlu0 %3531
  %v3533 = vsel %vm1034, %v3487, 0.0
  %3534 = vadd.xlane.f32.xlu0 %v3533
  %v3535 = vpop.xlane.xlu0 %3534
  %v3536 = vrcp.pop %v3490
  %v3537 = vrcp.pop %v3493
  %v3538 = vrcp.pop %v3496
  %v3539 = vrcp.pop %v3499
  %v3540 = vrcp.pop %v3502
  %v3541 = vrcp.pop %v3505
  %v3542 = vrcp.pop %v3508
  %v3543 = vrcp.pop %v3511
  %v3544 = vrcp.pop %v3514
  %v3545 = vrcp.pop %v3517
  %v3546 = vrcp.pop %v3520
  %v3547 = vrcp.pop %v3523
  %v3548 = vrcp.pop %v3526
  %v3549 = vrcp.pop %v3529
  %v3550 = vrcp.pop %v3532
  %v3551 = vrcp.pop %v3535
  %v3552 = vmul.f32 %v3457, %v3536
  %v3553 = vmul.f32 %v3459, %v3537
  %v3554 = vmul.f32 %v3461, %v3538
  %v3555 = vmul.f32 %v3463, %v3539
  %v3556 = vmul.f32 %v3465, %v3540
  %v3557 = vmul.f32 %v3467, %v3541
  %v3558 = vmul.f32 %v3469, %v3542
  %v3559 = vmul.f32 %v3471, %v3543
  %v3560 = vmul.f32 %v3473, %v3544
  %v3561 = vmul.f32 %v3475, %v3545
  %v3562 = vmul.f32 %v3477, %v3546
  %v3563 = vmul.f32 %v3479, %v3547
  %v3564 = vmul.f32 %v3481, %v3548
  %v3565 = vmul.f32 %v3483, %v3549
  %v3566 = vmul.f32 %v3485, %v3550
  %v3567 = vmul.f32 %v3487, %v3551
  %v3569 = vsel %vm1034, %v3552, 0
  %v3572 = vsel %vm1034, %v3553, 0
  %3574 = vmatprep.subr.mxu0 0.0
  %3575 = vmatpush1.msra.mxu0 %v2610
  %3576 = vmatprep.subr.mxu0 0.0
  %3577 = vmatpush1.msra.mxu0 %v2615
  %3578 = vmatprep.subr.mxu0 0.0
  %3579 = vmatpush1.msra.mxu0 0.0
  %3580 = vmatprep.subr.mxu0 0.0
  %3581 = vmatpush1.msra.mxu0 0.0
  %3582 = vmatprep.subr.mxu0 0.0
  %3583 = vmatpush1.msra.mxu0 0.0
  %3584 = vmatprep.subr.mxu0 0.0
  %3585 = vmatpush1.msra.mxu0 0.0
  %3586 = vmatprep.subr.mxu0 0.0
  %3587 = vmatpush1.msra.mxu0 0.0
  %3588 = vmatprep.subr.mxu0 0.0
  %3589 = vmatpush1.msra.mxu0 0.0
  %3590 = vmatprep.subr.mxu0 0.0
  %3591 = vmatpush1.msra.mxu0 0.0
  %3592 = vmatprep.subr.mxu0 0.0
  %3593 = vmatpush1.msra.mxu0 0.0
  %3594 = vmatprep.subr.mxu0 0.0
  %3595 = vmatpush1.msra.mxu0 0.0
  %3596 = vmatprep.subr.mxu0 0.0
  %3597 = vmatpush1.msra.mxu0 0.0
  %3598 = vmatprep.subr.mxu0 0.0
  %3599 = vmatpush1.msra.mxu0 0.0
  %3600 = vmatprep.subr.mxu0 0.0
  %3601 = vmatpush1.msra.mxu0 0.0
  %3602 = vmatprep.subr.mxu0 0.0
  %3603 = vmatpush1.msra.mxu0 0.0
  %3604 = vmatprep.subr.mxu0 0.0
  %3605 = vmatpush1.msra.mxu0 0.0
  %3606 = vmatprep.subr.mxu0 0.0
  %3607 = vmatpush1.msra.mxu0 0.0
  %3608 = vmatprep.subr.mxu0 0.0
  %3609 = vmatpush1.msra.mxu0 0.0
  %3610 = vmatprep.subr.mxu0 0.0
  %3611 = vmatpush1.msra.mxu0 0.0
  %3612 = vmatprep.subr.mxu0 0.0
  %3613 = vmatpush1.msra.mxu0 0.0
  %3614 = vmatprep.subr.mxu0 0.0
  %3615 = vmatpush1.msra.mxu0 0.0
  %3616 = vmatprep.subr.mxu0 0.0
  %3617 = vmatpush1.msra.mxu0 0.0
  %3618 = vmatprep.subr.mxu0 0.0
  %3619 = vmatpush1.msra.mxu0 0.0
  %3620 = vmatprep.subr.mxu0 0.0
  %3621 = vmatpush1.msra.mxu0 0.0
  %3622 = vmatprep.subr.mxu0 0.0
  %3623 = vmatpush1.msra.mxu0 0.0
  %3624 = vmatprep.subr.mxu0 0.0
  %3625 = vmatpush1.msra.mxu0 0.0
  %3626 = vmatprep.subr.mxu0 0.0
  %3627 = vmatpush1.msra.mxu0 0.0
  %3628 = vmatprep.subr.mxu0 0.0
  %3629 = vmatpush1.msra.mxu0 0.0
  %3630 = vmatprep.subr.mxu0 0.0
  %3631 = vmatpush1.msra.mxu0 0.0
  %3632 = vmatprep.subr.mxu0 0.0
  %3633 = vmatpush1.msra.mxu0 0.0
  %3634 = vmatprep.subr.mxu0 0.0
  %3635 = vmatpush1.msra.mxu0 0.0
  %3636 = vmatprep.subr.mxu0 0.0
  %3637 = vmatpush1.msra.mxu0 0.0
  %3638 = vmatprep.mubr.f32.mxu0 0.0
  %3639 = vmatmul.mubr.f32.gmra.mrb[0].mxu0 %v3569
  %v3640 = vpop.f32.mrb[0].mxu0
  %v3641 = vadd.f32 0.0, %v3640
  %v3642 = vpop.f32.mrb[0].mxu0
  %3643 = vmatprep.mubr.f32.mxu0 0.0
  %3644 = vmatmul.mubr.f32.gmra.mrb[0].mxu0 %v3572
  %v3645 = vpop.f32.mrb[0].mxu0
  %v3646 = vadd.f32 0.0, %v3645
  %v3647 = vpop.f32.mrb[0].mxu0
  %3648 = vdwg.mxu0
  %v3650 = vsel %vm1034, %v3554, 0
  %v3653 = vsel %vm1034, %v3555, 0
  %3655 = vmatprep.subr.mxu0 0.0
  %3656 = vmatpush1.msra.mxu0 %v2620
  %3657 = vmatprep.subr.mxu0 0.0
  %3658 = vmatpush1.msra.mxu0 %v2625
  %3659 = vmatprep.subr.mxu0 0.0
  %3660 = vmatpush1.msra.mxu0 0.0
  %3661 = vmatprep.subr.mxu0 0.0
  %3662 = vmatpush1.msra.mxu0 0.0
  %3663 = vmatprep.subr.mxu0 0.0
  %3664 = vmatpush1.msra.mxu0 0.0
  %3665 = vmatprep.subr.mxu0 0.0
  %3666 = vmatpush1.msra.mxu0 0.0
  %3667 = vmatprep.subr.mxu0 0.0
  %3668 = vmatpush1.msra.mxu0 0.0
  %3669 = vmatprep.subr.mxu0 0.0
  %3670 = vmatpush1.msra.mxu0 0.0
  %3671 = vmatprep.subr.mxu0 0.0
  %3672 = vmatpush1.msra.mxu0 0.0
  %3673 = vmatprep.subr.mxu0 0.0
  %3674 = vmatpush1.msra.mxu0 0.0
  %3675 = vmatprep.subr.mxu0 0.0
  %3676 = vmatpush1.msra.mxu0 0.0
  %3677 = vmatprep.subr.mxu0 0.0
  %3678 = vmatpush1.msra.mxu0 0.0
  %3679 = vmatprep.subr.mxu0 0.0
  %3680 = vmatpush1.msra.mxu0 0.0
  %3681 = vmatprep.subr.mxu0 0.0
  %3682 = vmatpush1.msra.mxu0 0.0
  %3683 = vmatprep.subr.mxu0 0.0
  %3684 = vmatpush1.msra.mxu0 0.0
  %3685 = vmatprep.subr.mxu0 0.0
  %3686 = vmatpush1.msra.mxu0 0.0
  %3687 = vmatprep.subr.mxu0 0.0
  %3688 = vmatpush1.msra.mxu0 0.0
  %3689 = vmatprep.subr.mxu0 0.0
  %3690 = vmatpush1.msra.mxu0 0.0
  %3691 = vmatprep.subr.mxu0 0.0
  %3692 = vmatpush1.msra.mxu0 0.0
  %3693 = vmatprep.subr.mxu0 0.0
  %3694 = vmatpush1.msra.mxu0 0.0
  %3695 = vmatprep.subr.mxu0 0.0
  %3696 = vmatpush1.msra.mxu0 0.0
  %3697 = vmatprep.subr.mxu0 0.0
  %3698 = vmatpush1.msra.mxu0 0.0
  %3699 = vmatprep.subr.mxu0 0.0
  %3700 = vmatpush1.msra.mxu0 0.0
  %3701 = vmatprep.subr.mxu0 0.0
  %3702 = vmatpush1.msra.mxu0 0.0
  %3703 = vmatprep.subr.mxu0 0.0
  %3704 = vmatpush1.msra.mxu0 0.0
  %3705 = vmatprep.subr.mxu0 0.0
  %3706 = vmatpush1.msra.mxu0 0.0
  %3707 = vmatprep.subr.mxu0 0.0
  %3708 = vmatpush1.msra.mxu0 0.0
  %3709 = vmatprep.subr.mxu0 0.0
  %3710 = vmatpush1.msra.mxu0 0.0
  %3711 = vmatprep.subr.mxu0 0.0
  %3712 = vmatpush1.msra.mxu0 0.0
  %3713 = vmatprep.subr.mxu0 0.0
  %3714 = vmatpush1.msra.mxu0 0.0
  %3715 = vmatprep.subr.mxu0 0.0
  %3716 = vmatpush1.msra.mxu0 0.0
  %3717 = vmatprep.subr.mxu0 0.0
  %3718 = vmatpush1.msra.mxu0 0.0
  %3719 = vmatprep.mubr.f32.mxu0 0.0
  %3720 = vmatmul.mubr.f32.gmra.mrb[0].mxu0 %v3650
  %v3721 = vpop.f32.mrb[0].mxu0
  %v3722 = vadd.f32 0.0, %v3721
  %v3723 = vpop.f32.mrb[0].mxu0
  %3724 = vmatprep.mubr.f32.mxu0 0.0
  %3725 = vmatmul.mubr.f32.gmra.mrb[0].mxu0 %v3653
  %v3726 = vpop.f32.mrb[0].mxu0
  %v3727 = vadd.f32 0.0, %v3726
  %v3728 = vpop.f32.mrb[0].mxu0
  %3729 = vdwg.mxu0
  %v3731 = vsel %vm1034, %v3556, 0
  %v3734 = vsel %vm1034, %v3557, 0
  %3736 = vmatprep.subr.mxu0 0.0
  %3737 = vmatpush1.msra.mxu0 %v2661
  %3738 = vmatprep.subr.mxu0 0.0
  %3739 = vmatpush1.msra.mxu0 %v2663
  %3740 = vmatprep.subr.mxu0 0.0
  %3741 = vmatpush1.msra.mxu0 0.0
  %3742 = vmatprep.subr.mxu0 0.0
  %3743 = vmatpush1.msra.mxu0 0.0
  %3744 = vmatprep.subr.mxu0 0.0
  %3745 = vmatpush1.msra.mxu0 0.0
  %3746 = vmatprep.subr.mxu0 0.0
  %3747 = vmatpush1.msra.mxu0 0.0
  %3748 = vmatprep.subr.mxu0 0.0
  %3749 = vmatpush1.msra.mxu0 0.0
  %3750 = vmatprep.subr.mxu0 0.0
  %3751 = vmatpush1.msra.mxu0 0.0
  %3752 = vmatprep.subr.mxu0 0.0
  %3753 = vmatpush1.msra.mxu0 0.0
  %3754 = vmatprep.subr.mxu0 0.0
  %3755 = vmatpush1.msra.mxu0 0.0
  %3756 = vmatprep.subr.mxu0 0.0
  %3757 = vmatpush1.msra.mxu0 0.0
  %3758 = vmatprep.subr.mxu0 0.0
  %3759 = vmatpush1.msra.mxu0 0.0
  %3760 = vmatprep.subr.mxu0 0.0
  %3761 = vmatpush1.msra.mxu0 0.0
  %3762 = vmatprep.subr.mxu0 0.0
  %3763 = vmatpush1.msra.mxu0 0.0
  %3764 = vmatprep.subr.mxu0 0.0
  %3765 = vmatpush1.msra.mxu0 0.0
  %3766 = vmatprep.subr.mxu0 0.0
  %3767 = vmatpush1.msra.mxu0 0.0
  %3768 = vmatprep.subr.mxu0 0.0
  %3769 = vmatpush1.msra.mxu0 0.0
  %3770 = vmatprep.subr.mxu0 0.0
  %3771 = vmatpush1.msra.mxu0 0.0
  %3772 = vmatprep.subr.mxu0 0.0
  %3773 = vmatpush1.msra.mxu0 0.0
  %3774 = vmatprep.subr.mxu0 0.0
  %3775 = vmatpush1.msra.mxu0 0.0
  %3776 = vmatprep.subr.mxu0 0.0
  %3777 = vmatpush1.msra.mxu0 0.0
  %3778 = vmatprep.subr.mxu0 0.0
  %3779 = vmatpush1.msra.mxu0 0.0
  %3780 = vmatprep.subr.mxu0 0.0
  %3781 = vmatpush1.msra.mxu0 0.0
  %3782 = vmatprep.subr.mxu0 0.0
  %3783 = vmatpush1.msra.mxu0 0.0
  %3784 = vmatprep.subr.mxu0 0.0
  %3785 = vmatpush1.msra.mxu0 0.0
  %3786 = vmatprep.subr.mxu0 0.0
  %3787 = vmatpush1.msra.mxu0 0.0
  %3788 = vmatprep.subr.mxu0 0.0
  %3789 = vmatpush1.msra.mxu0 0.0
  %3790 = vmatprep.subr.mxu0 0.0
  %3791 = vmatpush1.msra.mxu0 0.0
  %3792 = vmatprep.subr.mxu0 0.0
  %3793 = vmatpush1.msra.mxu0 0.0
  %3794 = vmatprep.subr.mxu0 0.0
  %3795 = vmatpush1.msra.mxu0 0.0
  %3796 = vmatprep.subr.mxu0 0.0
  %3797 = vmatpush1.msra.mxu0 0.0
  %3798 = vmatprep.subr.mxu0 0.0
  %3799 = vmatpush1.msra.mxu0 0.0
  %3800 = vmatprep.mubr.f32.mxu0 0.0
  %3801 = vmatmul.mubr.f32.gmra.mrb[0].mxu0 %v3731
  %v3802 = vpop.f32.mrb[0].mxu0
  %v3803 = vadd.f32 0.0, %v3802
  %v3804 = vpop.f32.mrb[0].mxu0
  %3805 = vmatprep.mubr.f32.mxu0 0.0
  %3806 = vmatmul.mubr.f32.gmra.mrb[0].mxu0 %v3734
  %v3807 = vpop.f32.mrb[0].mxu0
  %v3808 = vadd.f32 0.0, %v3807
  %v3809 = vpop.f32.mrb[0].mxu0
  %3810 = vdwg.mxu0
  %v3812 = vsel %vm1034, %v3558, 0
  %v3815 = vsel %vm1034, %v3559, 0
  %3817 = vmatprep.subr.mxu0 0.0
  %3818 = vmatpush1.msra.mxu0 %v2665
  %3819 = vmatprep.subr.mxu0 0.0
  %3820 = vmatpush1.msra.mxu0 %v2667
  %3821 = vmatprep.subr.mxu0 0.0
  %3822 = vmatpush1.msra.mxu0 0.0
  %3823 = vmatprep.subr.mxu0 0.0
  %3824 = vmatpush1.msra.mxu0 0.0
  %3825 = vmatprep.subr.mxu0 0.0
  %3826 = vmatpush1.msra.mxu0 0.0
  %3827 = vmatprep.subr.mxu0 0.0
  %3828 = vmatpush1.msra.mxu0 0.0
  %3829 = vmatprep.subr.mxu0 0.0
  %3830 = vmatpush1.msra.mxu0 0.0
  %3831 = vmatprep.subr.mxu0 0.0
  %3832 = vmatpush1.msra.mxu0 0.0
  %3833 = vmatprep.subr.mxu0 0.0
  %3834 = vmatpush1.msra.mxu0 0.0
  %3835 = vmatprep.subr.mxu0 0.0
  %3836 = vmatpush1.msra.mxu0 0.0
  %3837 = vmatprep.subr.mxu0 0.0
  %3838 = vmatpush1.msra.mxu0 0.0
  %3839 = vmatprep.subr.mxu0 0.0
  %3840 = vmatpush1.msra.mxu0 0.0
  %3841 = vmatprep.subr.mxu0 0.0
  %3842 = vmatpush1.msra.mxu0 0.0
  %3843 = vmatprep.subr.mxu0 0.0
  %3844 = vmatpush1.msra.mxu0 0.0
  %3845 = vmatprep.subr.mxu0 0.0
  %3846 = vmatpush1.msra.mxu0 0.0
  %3847 = vmatprep.subr.mxu0 0.0
  %3848 = vmatpush1.msra.mxu0 0.0
  %3849 = vmatprep.subr.mxu0 0.0
  %3850 = vmatpush1.msra.mxu0 0.0
  %3851 = vmatprep.subr.mxu0 0.0
  %3852 = vmatpush1.msra.mxu0 0.0
  %3853 = vmatprep.subr.mxu0 0.0
  %3854 = vmatpush1.msra.mxu0 0.0
  %3855 = vmatprep.subr.mxu0 0.0
  %3856 = vmatpush1.msra.mxu0 0.0
  %3857 = vmatprep.subr.mxu0 0.0
  %3858 = vmatpush1.msra.mxu0 0.0
  %3859 = vmatprep.subr.mxu0 0.0
  %3860 = vmatpush1.msra.mxu0 0.0
  %3861 = vmatprep.subr.mxu0 0.0
  %3862 = vmatpush1.msra.mxu0 0.0
  %3863 = vmatprep.subr.mxu0 0.0
  %3864 = vmatpush1.msra.mxu0 0.0
  %3865 = vmatprep.subr.mxu0 0.0
  %3866 = vmatpush1.msra.mxu0 0.0
  %3867 = vmatprep.subr.mxu0 0.0
  %3868 = vmatpush1.msra.mxu0 0.0
  %3869 = vmatprep.subr.mxu0 0.0
  %3870 = vmatpush1.msra.mxu0 0.0
  %3871 = vmatprep.subr.mxu0 0.0
  %3872 = vmatpush1.msra.mxu0 0.0
  %3873 = vmatprep.subr.mxu0 0.0
  %3874 = vmatpush1.msra.mxu0 0.0
  %3875 = vmatprep.subr.mxu0 0.0
  %3876 = vmatpush1.msra.mxu0 0.0
  %3877 = vmatprep.subr.mxu0 0.0
  %3878 = vmatpush1.msra.mxu0 0.0
  %3879 = vmatprep.subr.mxu0 0.0
  %3880 = vmatpush1.msra.mxu0 0.0
  %3881 = vmatprep.mubr.f32.mxu0 0.0
  %3882 = vmatmul.mubr.f32.gmra.mrb[0].mxu0 %v3812
  %v3883 = vpop.f32.mrb[0].mxu0
  %v3884 = vadd.f32 0.0, %v3883
  %v3885 = vpop.f32.mrb[0].mxu0
  %3886 = vmatprep.mubr.f32.mxu0 0.0
  %3887 = vmatmul.mubr.f32.gmra.mrb[0].mxu0 %v3815
  %v3888 = vpop.f32.mrb[0].mxu0
  %v3889 = vadd.f32 0.0, %v3888
  %v3890 = vpop.f32.mrb[0].mxu0
  %3891 = vdwg.mxu0
  %v3893 = vsel %vm1034, %v3560, 0
  %v3896 = vsel %vm1034, %v3561, 0
  %3898 = vmatprep.subr.mxu0 0.0
  %3899 = vmatpush1.msra.mxu0 %v2673
  %3900 = vmatprep.subr.mxu0 0.0
  %3901 = vmatpush1.msra.mxu0 %v2675
  %3902 = vmatprep.subr.mxu0 0.0
  %3903 = vmatpush1.msra.mxu0 0.0
  %3904 = vmatprep.subr.mxu0 0.0
  %3905 = vmatpush1.msra.mxu0 0.0
  %3906 = vmatprep.subr.mxu0 0.0
  %3907 = vmatpush1.msra.mxu0 0.0
  %3908 = vmatprep.subr.mxu0 0.0
  %3909 = vmatpush1.msra.mxu0 0.0
  %3910 = vmatprep.subr.mxu0 0.0
  %3911 = vmatpush1.msra.mxu0 0.0
  %3912 = vmatprep.subr.mxu0 0.0
  %3913 = vmatpush1.msra.mxu0 0.0
  %3914 = vmatprep.subr.mxu0 0.0
  %3915 = vmatpush1.msra.mxu0 0.0
  %3916 = vmatprep.subr.mxu0 0.0
  %3917 = vmatpush1.msra.mxu0 0.0
  %3918 = vmatprep.subr.mxu0 0.0
  %3919 = vmatpush1.msra.mxu0 0.0
  %3920 = vmatprep.subr.mxu0 0.0
  %3921 = vmatpush1.msra.mxu0 0.0
  %3922 = vmatprep.subr.mxu0 0.0
  %3923 = vmatpush1.msra.mxu0 0.0
  %3924 = vmatprep.subr.mxu0 0.0
  %3925 = vmatpush1.msra.mxu0 0.0
  %3926 = vmatprep.subr.mxu0 0.0
  %3927 = vmatpush1.msra.mxu0 0.0
  %3928 = vmatprep.subr.mxu0 0.0
  %3929 = vmatpush1.msra.mxu0 0.0
  %3930 = vmatprep.subr.mxu0 0.0
  %3931 = vmatpush1.msra.mxu0 0.0
  %3932 = vmatprep.subr.mxu0 0.0
  %3933 = vmatpush1.msra.mxu0 0.0
  %3934 = vmatprep.subr.mxu0 0.0
  %3935 = vmatpush1.msra.mxu0 0.0
  %3936 = vmatprep.subr.mxu0 0.0
  %3937 = vmatpush1.msra.mxu0 0.0
  %3938 = vmatprep.subr.mxu0 0.0
  %3939 = vmatpush1.msra.mxu0 0.0
  %3940 = vmatprep.subr.mxu0 0.0
  %3941 = vmatpush1.msra.mxu0 0.0
  %3942 = vmatprep.subr.mxu0 0.0
  %3943 = vmatpush1.msra.mxu0 0.0
  %3944 = vmatprep.subr.mxu0 0.0
  %3945 = vmatpush1.msra.mxu0 0.0
  %3946 = vmatprep.subr.mxu0 0.0
  %3947 = vmatpush1.msra.mxu0 0.0
  %3948 = vmatprep.subr.mxu0 0.0
  %3949 = vmatpush1.msra.mxu0 0.0
  %3950 = vmatprep.subr.mxu0 0.0
  %3951 = vmatpush1.msra.mxu0 0.0
  %3952 = vmatprep.subr.mxu0 0.0
  %3953 = vmatpush1.msra.mxu0 0.0
  %3954 = vmatprep.subr.mxu0 0.0
  %3955 = vmatpush1.msra.mxu0 0.0
  %3956 = vmatprep.subr.mxu0 0.0
  %3957 = vmatpush1.msra.mxu0 0.0
  %3958 = vmatprep.subr.mxu0 0.0
  %3959 = vmatpush1.msra.mxu0 0.0
  %3960 = vmatprep.subr.mxu0 0.0
  %3961 = vmatpush1.msra.mxu0 0.0
  %3962 = vmatprep.mubr.f32.mxu0 0.0
  %3963 = vmatmul.mubr.f32.gmra.mrb[0].mxu0 %v3893
  %v3964 = vpop.f32.mrb[0].mxu0
  %v3965 = vadd.f32 0.0, %v3964
  %v3966 = vpop.f32.mrb[0].mxu0
  %3967 = vmatprep.mubr.f32.mxu0 0.0
  %3968 = vmatmul.mubr.f32.gmra.mrb[0].mxu0 %v3896
  %v3969 = vpop.f32.mrb[0].mxu0
  %v3970 = vadd.f32 0.0, %v3969
  %v3971 = vpop.f32.mrb[0].mxu0
  %3972 = vdwg.mxu0
  %v3974 = vsel %vm1034, %v3562, 0
  %v3977 = vsel %vm1034, %v3563, 0
  %3979 = vmatprep.subr.mxu0 0.0
  %3980 = vmatpush1.msra.mxu0 %v2677
  %3981 = vmatprep.subr.mxu0 0.0
  %3982 = vmatpush1.msra.mxu0 %v2679
  %3983 = vmatprep.subr.mxu0 0.0
  %3984 = vmatpush1.msra.mxu0 0.0
  %3985 = vmatprep.subr.mxu0 0.0
  %3986 = vmatpush1.msra.mxu0 0.0
  %3987 = vmatprep.subr.mxu0 0.0
  %3988 = vmatpush1.msra.mxu0 0.0
  %3989 = vmatprep.subr.mxu0 0.0
  %3990 = vmatpush1.msra.mxu0 0.0
  %3991 = vmatprep.subr.mxu0 0.0
  %3992 = vmatpush1.msra.mxu0 0.0
  %3993 = vmatprep.subr.mxu0 0.0
  %3994 = vmatpush1.msra.mxu0 0.0
  %3995 = vmatprep.subr.mxu0 0.0
  %3996 = vmatpush1.msra.mxu0 0.0
  %3997 = vmatprep.subr.mxu0 0.0
  %3998 = vmatpush1.msra.mxu0 0.0
  %3999 = vmatprep.subr.mxu0 0.0
  %4000 = vmatpush1.msra.mxu0 0.0
  %4001 = vmatprep.subr.mxu0 0.0
  %4002 = vmatpush1.msra.mxu0 0.0
  %4003 = vmatprep.subr.mxu0 0.0
  %4004 = vmatpush1.msra.mxu0 0.0
  %4005 = vmatprep.subr.mxu0 0.0
  %4006 = vmatpush1.msra.mxu0 0.0
  %4007 = vmatprep.subr.mxu0 0.0
  %4008 = vmatpush1.msra.mxu0 0.0
  %4009 = vmatprep.subr.mxu0 0.0
  %4010 = vmatpush1.msra.mxu0 0.0
  %4011 = vmatprep.subr.mxu0 0.0
  %4012 = vmatpush1.msra.mxu0 0.0
  %4013 = vmatprep.subr.mxu0 0.0
  %4014 = vmatpush1.msra.mxu0 0.0
  %4015 = vmatprep.subr.mxu0 0.0
  %4016 = vmatpush1.msra.mxu0 0.0
  %4017 = vmatprep.subr.mxu0 0.0
  %4018 = vmatpush1.msra.mxu0 0.0
  %4019 = vmatprep.subr.mxu0 0.0
  %4020 = vmatpush1.msra.mxu0 0.0
  %4021 = vmatprep.subr.mxu0 0.0
  %4022 = vmatpush1.msra.mxu0 0.0
  %4023 = vmatprep.subr.mxu0 0.0
  %4024 = vmatpush1.msra.mxu0 0.0
  %4025 = vmatprep.subr.mxu0 0.0
  %4026 = vmatpush1.msra.mxu0 0.0
  %4027 = vmatprep.subr.mxu0 0.0
  %4028 = vmatpush1.msra.mxu0 0.0
  %4029 = vmatprep.subr.mxu0 0.0
  %4030 = vmatpush1.msra.mxu0 0.0
  %4031 = vmatprep.subr.mxu0 0.0
  %4032 = vmatpush1.msra.mxu0 0.0
  %4033 = vmatprep.subr.mxu0 0.0
  %4034 = vmatpush1.msra.mxu0 0.0
  %4035 = vmatprep.subr.mxu0 0.0
  %4036 = vmatpush1.msra.mxu0 0.0
  %4037 = vmatprep.subr.mxu0 0.0
  %4038 = vmatpush1.msra.mxu0 0.0
  %4039 = vmatprep.subr.mxu0 0.0
  %4040 = vmatpush1.msra.mxu0 0.0
  %4041 = vmatprep.subr.mxu0 0.0
  %4042 = vmatpush1.msra.mxu0 0.0
  %4043 = vmatprep.mubr.f32.mxu0 0.0
  %4044 = vmatmul.mubr.f32.gmra.mrb[0].mxu0 %v3974
  %v4045 = vpop.f32.mrb[0].mxu0
  %v4046 = vadd.f32 0.0, %v4045
  %v4047 = vpop.f32.mrb[0].mxu0
  %4048 = vmatprep.mubr.f32.mxu0 0.0
  %4049 = vmatmul.mubr.f32.gmra.mrb[0].mxu0 %v3977
  %v4050 = vpop.f32.mrb[0].mxu0
  %v4051 = vadd.f32 0.0, %v4050
  %v4052 = vpop.f32.mrb[0].mxu0
  %4053 = vdwg.mxu0
  %v4055 = vsel %vm1034, %v3564, 0
  %v4058 = vsel %vm1034, %v3565, 0
  %4060 = vmatprep.subr.mxu0 0.0
  %4061 = vmatpush1.msra.mxu0 %v2685
  %4062 = vmatprep.subr.mxu0 0.0
  %4063 = vmatpush1.msra.mxu0 %v2687
  %4064 = vmatprep.subr.mxu0 0.0
  %4065 = vmatpush1.msra.mxu0 0.0
  %4066 = vmatprep.subr.mxu0 0.0
  %4067 = vmatpush1.msra.mxu0 0.0
  %4068 = vmatprep.subr.mxu0 0.0
  %4069 = vmatpush1.msra.mxu0 0.0
  %4070 = vmatprep.subr.mxu0 0.0
  %4071 = vmatpush1.msra.mxu0 0.0
  %4072 = vmatprep.subr.mxu0 0.0
  %4073 = vmatpush1.msra.mxu0 0.0
  %4074 = vmatprep.subr.mxu0 0.0
  %4075 = vmatpush1.msra.mxu0 0.0
  %4076 = vmatprep.subr.mxu0 0.0
  %4077 = vmatpush1.msra.mxu0 0.0
  %4078 = vmatprep.subr.mxu0 0.0
  %4079 = vmatpush1.msra.mxu0 0.0
  %4080 = vmatprep.subr.mxu0 0.0
  %4081 = vmatpush1.msra.mxu0 0.0
  %4082 = vmatprep.subr.mxu0 0.0
  %4083 = vmatpush1.msra.mxu0 0.0
  %4084 = vmatprep.subr.mxu0 0.0
  %4085 = vmatpush1.msra.mxu0 0.0
  %4086 = vmatprep.subr.mxu0 0.0
  %4087 = vmatpush1.msra.mxu0 0.0
  %4088 = vmatprep.subr.mxu0 0.0
  %4089 = vmatpush1.msra.mxu0 0.0
  %4090 = vmatprep.subr.mxu0 0.0
  %4091 = vmatpush1.msra.mxu0 0.0
  %4092 = vmatprep.subr.mxu0 0.0
  %4093 = vmatpush1.msra.mxu0 0.0
  %4094 = vmatprep.subr.mxu0 0.0
  %4095 = vmatpush1.msra.mxu0 0.0
  %4096 = vmatprep.subr.mxu0 0.0
  %4097 = vmatpush1.msra.mxu0 0.0
  %4098 = vmatprep.subr.mxu0 0.0
  %4099 = vmatpush1.msra.mxu0 0.0
  %4100 = vmatprep.subr.mxu0 0.0
  %4101 = vmatpush1.msra.mxu0 0.0
  %4102 = vmatprep.subr.mxu0 0.0
  %4103 = vmatpush1.msra.mxu0 0.0
  %4104 = vmatprep.subr.mxu0 0.0
  %4105 = vmatpush1.msra.mxu0 0.0
  %4106 = vmatprep.subr.mxu0 0.0
  %4107 = vmatpush1.msra.mxu0 0.0
  %4108 = vmatprep.subr.mxu0 0.0
  %4109 = vmatpush1.msra.mxu0 0.0
  %4110 = vmatprep.subr.mxu0 0.0
  %4111 = vmatpush1.msra.mxu0 0.0
  %4112 = vmatprep.subr.mxu0 0.0
  %4113 = vmatpush1.msra.mxu0 0.0
  %4114 = vmatprep.subr.mxu0 0.0
  %4115 = vmatpush1.msra.mxu0 0.0
  %4116 = vmatprep.subr.mxu0 0.0
  %4117 = vmatpush1.msra.mxu0 0.0
  %4118 = vmatprep.subr.mxu0 0.0
  %4119 = vmatpush1.msra.mxu0 0.0
  %4120 = vmatprep.subr.mxu0 0.0
  %4121 = vmatpush1.msra.mxu0 0.0
  %4122 = vmatprep.subr.mxu0 0.0
  %4123 = vmatpush1.msra.mxu0 0.0
  %4124 = vmatprep.mubr.f32.mxu0 0.0
  %4125 = vmatmul.mubr.f32.gmra.mrb[0].mxu0 %v4055
  %v4126 = vpop.f32.mrb[0].mxu0
  %v4127 = vadd.f32 0.0, %v4126
  %v4128 = vpop.f32.mrb[0].mxu0
  %4129 = vmatprep.mubr.f32.mxu0 0.0
  %4130 = vmatmul.mubr.f32.gmra.mrb[0].mxu0 %v4058
  %v4131 = vpop.f32.mrb[0].mxu0
  %v4132 = vadd.f32 0.0, %v4131
  %v4133 = vpop.f32.mrb[0].mxu0
  %4134 = vdwg.mxu0
  %v4136 = vsel %vm1034, %v3566, 0
  %v4139 = vsel %vm1034, %v3567, 0
  %4141 = vmatprep.subr.mxu0 0.0
  %4142 = vmatpush1.msra.mxu0 %v2689
  %4143 = vmatprep.subr.mxu0 0.0
  %4144 = vmatpush1.msra.mxu0 %v2691
  %4145 = vmatprep.subr.mxu0 0.0
  %4146 = vmatpush1.msra.mxu0 0.0
  %4147 = vmatprep.subr.mxu0 0.0
  %4148 = vmatpush1.msra.mxu0 0.0
  %4149 = vmatprep.subr.mxu0 0.0
  %4150 = vmatpush1.msra.mxu0 0.0
  %4151 = vmatprep.subr.mxu0 0.0
  %4152 = vmatpush1.msra.mxu0 0.0
  %4153 = vmatprep.subr.mxu0 0.0
  %4154 = vmatpush1.msra.mxu0 0.0
  %4155 = vmatprep.subr.mxu0 0.0
  %4156 = vmatpush1.msra.mxu0 0.0
  %4157 = vmatprep.subr.mxu0 0.0
  %4158 = vmatpush1.msra.mxu0 0.0
  %4159 = vmatprep.subr.mxu0 0.0
  %4160 = vmatpush1.msra.mxu0 0.0
  %4161 = vmatprep.subr.mxu0 0.0
  %4162 = vmatpush1.msra.mxu0 0.0
  %4163 = vmatprep.subr.mxu0 0.0
  %4164 = vmatpush1.msra.mxu0 0.0
  %4165 = vmatprep.subr.mxu0 0.0
  %4166 = vmatpush1.msra.mxu0 0.0
  %4167 = vmatprep.subr.mxu0 0.0
  %4168 = vmatpush1.msra.mxu0 0.0
  %4169 = vmatprep.subr.mxu0 0.0
  %4170 = vmatpush1.msra.mxu0 0.0
  %4171 = vmatprep.subr.mxu0 0.0
  %4172 = vmatpush1.msra.mxu0 0.0
  %4173 = vmatprep.subr.mxu0 0.0
  %4174 = vmatpush1.msra.mxu0 0.0
  %4175 = vmatprep.subr.mxu0 0.0
  %4176 = vmatpush1.msra.mxu0 0.0
  %4177 = vmatprep.subr.mxu0 0.0
  %4178 = vmatpush1.msra.mxu0 0.0
  %4179 = vmatprep.subr.mxu0 0.0
  %4180 = vmatpush1.msra.mxu0 0.0
  %4181 = vmatprep.subr.mxu0 0.0
  %4182 = vmatpush1.msra.mxu0 0.0
  %4183 = vmatprep.subr.mxu0 0.0
  %4184 = vmatpush1.msra.mxu0 0.0
  %4185 = vmatprep.subr.mxu0 0.0
  %4186 = vmatpush1.msra.mxu0 0.0
  %4187 = vmatprep.subr.mxu0 0.0
  %4188 = vmatpush1.msra.mxu0 0.0
  %4189 = vmatprep.subr.mxu0 0.0
  %4190 = vmatpush1.msra.mxu0 0.0
  %4191 = vmatprep.subr.mxu0 0.0
  %4192 = vmatpush1.msra.mxu0 0.0
  %4193 = vmatprep.subr.mxu0 0.0
  %4194 = vmatpush1.msra.mxu0 0.0
  %4195 = vmatprep.subr.mxu0 0.0
  %4196 = vmatpush1.msra.mxu0 0.0
  %4197 = vmatprep.subr.mxu0 0.0
  %4198 = vmatpush1.msra.mxu0 0.0
  %4199 = vmatprep.subr.mxu0 0.0
  %4200 = vmatpush1.msra.mxu0 0.0
  %4201 = vmatprep.subr.mxu0 0.0
  %4202 = vmatpush1.msra.mxu0 0.0
  %4203 = vmatprep.subr.mxu0 0.0
  %4204 = vmatpush1.msra.mxu0 0.0
  %4205 = vmatprep.mubr.f32.mxu0 0.0
  %4206 = vmatmul.mubr.f32.gmra.mrb[0].mxu0 %v4136
  %v4207 = vpop.f32.mrb[0].mxu0
  %v4208 = vadd.f32 0.0, %v4207
  %v4209 = vpop.f32.mrb[0].mxu0
  %4210 = vmatprep.mubr.f32.mxu0 0.0
  %4211 = vmatmul.mubr.f32.gmra.mrb[0].mxu0 %v4139
  %v4212 = vpop.f32.mrb[0].mxu0
  %v4213 = vadd.f32 0.0, %v4212
  %v4214 = vpop.f32.mrb[0].mxu0
  %4215 = vdwg.mxu0
  %4220 = vrot.lane.b32.xlu0 %v3803, 8
  %v4221 = vpop.permute.xlu0 %4220
  %4222 = vrot.lane.b32.xlu0 %v3808, 8
  %v4223 = vpop.permute.xlu0 %4222
  %4224 = vrot.lane.b32.xlu0 %v3884, 8
  %v4225 = vpop.permute.xlu0 %4224
  %4226 = vrot.lane.b32.xlu0 %v3889, 8
  %v4227 = vpop.permute.xlu0 %4226
  %4236 = vrot.lane.b32.xlu0 %v3965, 16
  %v4237 = vpop.permute.xlu0 %4236
  %4238 = vrot.lane.b32.xlu0 %v3970, 16
  %v4239 = vpop.permute.xlu0 %4238
  %4240 = vrot.lane.b32.xlu0 %v4046, 16
  %v4241 = vpop.permute.xlu0 %4240
  %4242 = vrot.lane.b32.xlu0 %v4051, 16
  %v4243 = vpop.permute.xlu0 %4242
  %4252 = vrot.lane.b32.xlu0 %v4127, 24
  %v4253 = vpop.permute.xlu0 %4252
  %4254 = vrot.lane.b32.xlu0 %v4132, 24
  %v4255 = vpop.permute.xlu0 %4254
  %4256 = vrot.lane.b32.xlu0 %v4208, 24
  %v4257 = vpop.permute.xlu0 %4256
  %4258 = vrot.lane.b32.xlu0 %v4213, 24
  %v4259 = vpop.permute.xlu0 %4258
  %v4264 = vsel %vm341, %v3641, %v4221
  %v4265 = vsel %vm341, %v3646, %v4223
  %v4266 = vsel %vm341, %v3722, %v4225
  %v4267 = vsel %vm341, %v3727, %v4227
  %v4268 = vsel %vm1034, %v4264, %v4237
  %v4269 = vsel %vm1034, %v4265, %v4239
  %v4270 = vsel %vm1034, %v4266, %v4241
  %v4271 = vsel %vm1034, %v4267, %v4243
  %v4272 = vsel %vm1915, %v4268, %v4253
  %v4273 = vsel %vm1915, %v4269, %v4255
  %v4274 = vsel %vm1915, %v4270, %v4257
  %v4275 = vsel %vm1915, %v4271, %v4259
  %v4276 = vlaneseq
  %v4277 = vshrl.u32 %v4276, 7
  %v4278 = vsub.s32 2, %v4277
  %v4279 = vrot.slane %v2404, %v4278
  %4280 = vrot.lane.b32.xlu0 %v2386, 32
  %v4281 = vpop.permute.xlu0 %4280
  %4282 = vrot.lane.b32.xlu0 %v2388, 32
  %v4283 = vpop.permute.xlu0 %4282
  %4284 = vrot.lane.b32.xlu0 %v2390, 32
  %v4285 = vpop.permute.xlu0 %4284
  %4286 = vrot.lane.b32.xlu0 %v2392, 32
  %v4287 = vpop.permute.xlu0 %4286
  %v4293 = vsel %vm54, %v4272, 0
  %v4296 = vsel %vm54, %v4273, 0
  %v4299 = vsel %vm54, %v4274, 0
  %v4302 = vsel %vm54, %v4275, 0
  %4304 = vmatprep.subr.mxu0 0.0
  %4305 = vmatpush1.msra.mxu0 %v4281
  %4306 = vmatprep.subr.mxu0 0.0
  %4307 = vmatpush1.msra.mxu0 %v4283
  %4308 = vmatprep.subr.mxu0 0.0
  %4309 = vmatpush1.msra.mxu0 %v4285
  %4310 = vmatprep.subr.mxu0 0.0
  %4311 = vmatpush1.msra.mxu0 %v4287
  %4312 = vmatprep.subr.mxu0 0.0
  %4313 = vmatpush1.msra.mxu0 0.0
  %4314 = vmatprep.subr.mxu0 0.0
  %4315 = vmatpush1.msra.mxu0 0.0
  %4316 = vmatprep.subr.mxu0 0.0
  %4317 = vmatpush1.msra.mxu0 0.0
  %4318 = vmatprep.subr.mxu0 0.0
  %4319 = vmatpush1.msra.mxu0 0.0
  %4320 = vmatprep.subr.mxu0 0.0
  %4321 = vmatpush1.msra.mxu0 0.0
  %4322 = vmatprep.subr.mxu0 0.0
  %4323 = vmatpush1.msra.mxu0 0.0
  %4324 = vmatprep.subr.mxu0 0.0
  %4325 = vmatpush1.msra.mxu0 0.0
  %4326 = vmatprep.subr.mxu0 0.0
  %4327 = vmatpush1.msra.mxu0 0.0
  %4328 = vmatprep.subr.mxu0 0.0
  %4329 = vmatpush1.msra.mxu0 0.0
  %4330 = vmatprep.subr.mxu0 0.0
  %4331 = vmatpush1.msra.mxu0 0.0
  %4332 = vmatprep.subr.mxu0 0.0
  %4333 = vmatpush1.msra.mxu0 0.0
  %4334 = vmatprep.subr.mxu0 0.0
  %4335 = vmatpush1.msra.mxu0 0.0
  %4336 = vmatprep.subr.mxu0 0.0
  %4337 = vmatpush1.msra.mxu0 0.0
  %4338 = vmatprep.subr.mxu0 0.0
  %4339 = vmatpush1.msra.mxu0 0.0
  %4340 = vmatprep.subr.mxu0 0.0
  %4341 = vmatpush1.msra.mxu0 0.0
  %4342 = vmatprep.subr.mxu0 0.0
  %4343 = vmatpush1.msra.mxu0 0.0
  %4344 = vmatprep.subr.mxu0 0.0
  %4345 = vmatpush1.msra.mxu0 0.0
  %4346 = vmatprep.subr.mxu0 0.0
  %4347 = vmatpush1.msra.mxu0 0.0
  %4348 = vmatprep.subr.mxu0 0.0
  %4349 = vmatpush1.msra.mxu0 0.0
  %4350 = vmatprep.subr.mxu0 0.0
  %4351 = vmatpush1.msra.mxu0 0.0
  %4352 = vmatprep.subr.mxu0 0.0
  %4353 = vmatpush1.msra.mxu0 0.0
  %4354 = vmatprep.subr.mxu0 0.0
  %4355 = vmatpush1.msra.mxu0 0.0
  %4356 = vmatprep.subr.mxu0 0.0
  %4357 = vmatpush1.msra.mxu0 0.0
  %4358 = vmatprep.subr.mxu0 0.0
  %4359 = vmatpush1.msra.mxu0 0.0
  %4360 = vmatprep.subr.mxu0 0.0
  %4361 = vmatpush1.msra.mxu0 0.0
  %4362 = vmatprep.subr.mxu0 0.0
  %4363 = vmatpush1.msra.mxu0 0.0
  %4364 = vmatprep.subr.mxu0 0.0
  %4365 = vmatpush1.msra.mxu0 0.0
  %4366 = vmatprep.subr.mxu0 0.0
  %4367 = vmatpush1.msra.mxu0 0.0
  %4368 = vmatprep.mubr.f32.mxu0 0.0
  %4369 = vmatmul.mubr.f32.gmra.mrb[0].mxu0 %v4293
  %v4370 = vpop.f32.mrb[0].mxu0
  %v4371 = vadd.f32 %v4279, %v4370
  %v4372 = vpop.f32.mrb[0].mxu0
  %4373 = vmatprep.mubr.f32.mxu0 0.0
  %4374 = vmatmul.mubr.f32.gmra.mrb[0].mxu0 %v4296
  %v4375 = vpop.f32.mrb[0].mxu0
  %v4376 = vadd.f32 %v4279, %v4375
  %v4377 = vpop.f32.mrb[0].mxu0
  %4378 = vmatprep.mubr.f32.mxu0 0.0
  %4379 = vmatmul.mubr.f32.gmra.mrb[0].mxu0 %v4299
  %v4380 = vpop.f32.mrb[0].mxu0
  %v4381 = vadd.f32 %v4279, %v4380
  %v4382 = vpop.f32.mrb[0].mxu0
  %4383 = vmatprep.mubr.f32.mxu0 0.0
  %4384 = vmatmul.mubr.f32.gmra.mrb[0].mxu0 %v4302
  %v4385 = vpop.f32.mrb[0].mxu0
  %v4386 = vadd.f32 %v4279, %v4385
  %v4387 = vpop.f32.mrb[0].mxu0
  %4388 = vdwg.mxu0
  %v4389 = vadd.f32 %v2381, %v4371
  %v4390 = vadd.f32 %v2382, %v4376
  %v4391 = vadd.f32 %v2383, %v4381
  %v4392 = vadd.f32 %v2384, %v4386
  %v4393 = vsel %vm54, %v4389, 0.0
  %4394 = vadd.xlane.f32.xlu0 %v4393
  %v4395 = vpop.xlane.xlu0 %4394
  %v4396 = vsel %vm54, %v4390, 0.0
  %4397 = vadd.xlane.f32.xlu0 %v4396
  %v4398 = vpop.xlane.xlu0 %4397
  %v4399 = vsel %vm54, %v4391, 0.0
  %4400 = vadd.xlane.f32.xlu0 %v4399
  %v4401 = vpop.xlane.xlu0 %4400
  %v4402 = vsel %vm54, %v4392, 0.0
  %4403 = vadd.xlane.f32.xlu0 %v4402
  %v4404 = vpop.xlane.xlu0 %4403
  %v4405 = vmul.f32 %v4395, %v2049
  %v4406 = vmul.f32 %v4398, %v2049
  %v4407 = vmul.f32 %v4401, %v2049
  %v4408 = vmul.f32 %v4404, %v2049
  %v4409 = vsub.f32 %v4389, %v4405
  %v4410 = vsub.f32 %v4390, %v4406
  %v4411 = vsub.f32 %v4391, %v4407
  %v4412 = vsub.f32 %v4392, %v4408
  %v4413 = vmul.f32 %v4409, %v4409
  %v4414 = vmul.f32 %v4410, %v4410
  %v4415 = vmul.f32 %v4411, %v4411
  %v4416 = vmul.f32 %v4412, %v4412
  %v4417 = vsel %vm54, %v4413, 0.0
  %4418 = vadd.xlane.f32.xlu0 %v4417
  %v4419 = vpop.xlane.xlu0 %4418
  %v4420 = vsel %vm54, %v4414, 0.0
  %4421 = vadd.xlane.f32.xlu0 %v4420
  %v4422 = vpop.xlane.xlu0 %4421
  %v4423 = vsel %vm54, %v4415, 0.0
  %4424 = vadd.xlane.f32.xlu0 %v4423
  %v4425 = vpop.xlane.xlu0 %4424
  %v4426 = vsel %vm54, %v4416, 0.0
  %4427 = vadd.xlane.f32.xlu0 %v4426
  %v4428 = vpop.xlane.xlu0 %4427
  %v4429 = vmul.f32 %v4419, %v2049
  %v4430 = vmul.f32 %v4422, %v2049
  %v4431 = vmul.f32 %v4425, %v2049
  %v4432 = vmul.f32 %v4428, %v2049
  %v4433 = vadd.f32 %v4429, 1e-05
  %v4434 = vadd.f32 %v4430, 1e-05
  %v4435 = vadd.f32 %v4431, 1e-05
  %v4436 = vadd.f32 %v4432, 1e-05
  %v4437 = vrsqrt.pop %v4433
  %v4438 = vrsqrt.pop %v4434
  %v4439 = vrsqrt.pop %v4435
  %v4440 = vrsqrt.pop %v4436
  %v4441 = vmul.f32 %v4409, %v4437
  %v4442 = vmul.f32 %v4410, %v4438
  %v4443 = vmul.f32 %v4411, %v4439
  %v4444 = vmul.f32 %v4412, %v4440
  %v4445 = vlaneseq
  %v4446 = vshrl.u32 %v4445, 7
  %v4447 = vsub.s32 5, %v4446
  %v4448 = vrot.slane %v2404, %v4447
  %v4449 = vmul.f32 %v4441, %v4448
  %v4450 = vmul.f32 %v4442, %v4448
  %v4451 = vmul.f32 %v4443, %v4448
  %v4452 = vmul.f32 %v4444, %v4448
  %v4453 = vlaneseq
  %v4454 = vshrl.u32 %v4453, 7
  %v4455 = vsub.s32 6, %v4454
  %v4456 = vrot.slane %v2404, %v4455
  %v4457 = vadd.f32 %v4449, %v4456
  %v4458 = vadd.f32 %v4450, %v4456
  %v4459 = vadd.f32 %v4451, %v4456
  %v4460 = vadd.f32 %v4452, %v4456
  %v4461 = vlaneseq
  %v4462 = vshrl.u32 %v4461, 7
  %v4463 = vsub.s32 3, %v4462
  %v4464 = vrot.slane %v2404, %v4463
  %v4466 = vsel %vm54, %v4457, 0
  %v4469 = vsel %vm54, %v4458, 0
  %v4472 = vsel %vm54, %v4459, 0
  %v4475 = vsel %vm54, %v4460, 0
  %4477 = vmatprep.subr.mxu0 0.0
  %4478 = vmatpush1.msra.mxu0 %v2387
  %4479 = vmatprep.subr.mxu0 0.0
  %4480 = vmatpush1.msra.mxu0 %v2389
  %4481 = vmatprep.subr.mxu0 0.0
  %4482 = vmatpush1.msra.mxu0 %v2391
  %4483 = vmatprep.subr.mxu0 0.0
  %4484 = vmatpush1.msra.mxu0 %v2393
  %4485 = vmatprep.subr.mxu0 0.0
  %4486 = vmatpush1.msra.mxu0 0.0
  %4487 = vmatprep.subr.mxu0 0.0
  %4488 = vmatpush1.msra.mxu0 0.0
  %4489 = vmatprep.subr.mxu0 0.0
  %4490 = vmatpush1.msra.mxu0 0.0
  %4491 = vmatprep.subr.mxu0 0.0
  %4492 = vmatpush1.msra.mxu0 0.0
  %4493 = vmatprep.subr.mxu0 0.0
  %4494 = vmatpush1.msra.mxu0 0.0
  %4495 = vmatprep.subr.mxu0 0.0
  %4496 = vmatpush1.msra.mxu0 0.0
  %4497 = vmatprep.subr.mxu0 0.0
  %4498 = vmatpush1.msra.mxu0 0.0
  %4499 = vmatprep.subr.mxu0 0.0
  %4500 = vmatpush1.msra.mxu0 0.0
  %4501 = vmatprep.subr.mxu0 0.0
  %4502 = vmatpush1.msra.mxu0 0.0
  %4503 = vmatprep.subr.mxu0 0.0
  %4504 = vmatpush1.msra.mxu0 0.0
  %4505 = vmatprep.subr.mxu0 0.0
  %4506 = vmatpush1.msra.mxu0 0.0
  %4507 = vmatprep.subr.mxu0 0.0
  %4508 = vmatpush1.msra.mxu0 0.0
  %4509 = vmatprep.subr.mxu0 0.0
  %4510 = vmatpush1.msra.mxu0 0.0
  %4511 = vmatprep.subr.mxu0 0.0
  %4512 = vmatpush1.msra.mxu0 0.0
  %4513 = vmatprep.subr.mxu0 0.0
  %4514 = vmatpush1.msra.mxu0 0.0
  %4515 = vmatprep.subr.mxu0 0.0
  %4516 = vmatpush1.msra.mxu0 0.0
  %4517 = vmatprep.subr.mxu0 0.0
  %4518 = vmatpush1.msra.mxu0 0.0
  %4519 = vmatprep.subr.mxu0 0.0
  %4520 = vmatpush1.msra.mxu0 0.0
  %4521 = vmatprep.subr.mxu0 0.0
  %4522 = vmatpush1.msra.mxu0 0.0
  %4523 = vmatprep.subr.mxu0 0.0
  %4524 = vmatpush1.msra.mxu0 0.0
  %4525 = vmatprep.subr.mxu0 0.0
  %4526 = vmatpush1.msra.mxu0 0.0
  %4527 = vmatprep.subr.mxu0 0.0
  %4528 = vmatpush1.msra.mxu0 0.0
  %4529 = vmatprep.subr.mxu0 0.0
  %4530 = vmatpush1.msra.mxu0 0.0
  %4531 = vmatprep.subr.mxu0 0.0
  %4532 = vmatpush1.msra.mxu0 0.0
  %4533 = vmatprep.subr.mxu0 0.0
  %4534 = vmatpush1.msra.mxu0 0.0
  %4535 = vmatprep.subr.mxu0 0.0
  %4536 = vmatpush1.msra.mxu0 0.0
  %4537 = vmatprep.subr.mxu0 0.0
  %4538 = vmatpush1.msra.mxu0 0.0
  %4539 = vmatprep.subr.mxu0 0.0
  %4540 = vmatpush1.msra.mxu0 0.0
  %4541 = vmatprep.mubr.f32.mxu0 0.0
  %4542 = vmatmul.mubr.f32.gmra.mrb[0].mxu0 %v4466
  %v4543 = vpop.f32.mrb[0].mxu0
  %v4544 = vadd.f32 %v4464, %v4543
  %v4545 = vpop.f32.mrb[0].mxu0
  %4546 = vmatprep.mubr.f32.mxu0 0.0
  %4547 = vmatmul.mubr.f32.gmra.mrb[0].mxu0 %v4469
  %v4548 = vpop.f32.mrb[0].mxu0
  %v4549 = vadd.f32 %v4464, %v4548
  %v4550 = vpop.f32.mrb[0].mxu0
  %4551 = vmatprep.mubr.f32.mxu0 0.0
  %4552 = vmatmul.mubr.f32.gmra.mrb[0].mxu0 %v4472
  %v4553 = vpop.f32.mrb[0].mxu0
  %v4554 = vadd.f32 %v4464, %v4553
  %v4555 = vpop.f32.mrb[0].mxu0
  %4556 = vmatprep.mubr.f32.mxu0 0.0
  %4557 = vmatmul.mubr.f32.gmra.mrb[0].mxu0 %v4475
  %v4558 = vpop.f32.mrb[0].mxu0
  %v4559 = vadd.f32 %v4464, %v4558
  %v4560 = vpop.f32.mrb[0].mxu0
  %4561 = vdwg.mxu0
  %v4562 = vmax.f32 %v4544, 0.0
  %v4563 = vmax.f32 %v4549, 0.0
  %v4564 = vmax.f32 %v4554, 0.0
  %v4565 = vmax.f32 %v4559, 0.0
  %v4566 = vlaneseq
  %v4567 = vshrl.u32 %v4566, 7
  %v4568 = vsub.s32 4, %v4567
  %v4569 = vrot.slane %v2404, %v4568
  %v4571 = vsel %vm2215, %v4562, 0
  %v4574 = vsel %vm2215, %v4563, 0
  %v4577 = vsel %vm2215, %v4564, 0
  %v4580 = vsel %vm2215, %v4565, 0
  %4582 = vmatprep.subr.mxu0 0.0
  %4583 = vmatpush1.msra.mxu0 %v2395
  %4584 = vmatprep.subr.mxu0 0.0
  %4585 = vmatpush1.msra.mxu0 %v2396
  %4586 = vmatprep.subr.mxu0 0.0
  %4587 = vmatpush1.msra.mxu0 %v2397
  %4588 = vmatprep.subr.mxu0 0.0
  %4589 = vmatpush1.msra.mxu0 %v2398
  %4590 = vmatprep.subr.mxu0 0.0
  %4591 = vmatpush1.msra.mxu0 %v2399
  %4592 = vmatprep.subr.mxu0 0.0
  %4593 = vmatpush1.msra.mxu0 %v2400
  %4594 = vmatprep.subr.mxu0 0.0
  %4595 = vmatpush1.msra.mxu0 %v2401
  %4596 = vmatprep.subr.mxu0 0.0
  %4597 = vmatpush1.msra.mxu0 %v2402
  %4598 = vmatprep.subr.mxu0 0.0
  %4599 = vmatpush1.msra.mxu0 0.0
  %4600 = vmatprep.subr.mxu0 0.0
  %4601 = vmatpush1.msra.mxu0 0.0
  %4602 = vmatprep.subr.mxu0 0.0
  %4603 = vmatpush1.msra.mxu0 0.0
  %4604 = vmatprep.subr.mxu0 0.0
  %4605 = vmatpush1.msra.mxu0 0.0
  %4606 = vmatprep.subr.mxu0 0.0
  %4607 = vmatpush1.msra.mxu0 0.0
  %4608 = vmatprep.subr.mxu0 0.0
  %4609 = vmatpush1.msra.mxu0 0.0
  %4610 = vmatprep.subr.mxu0 0.0
  %4611 = vmatpush1.msra.mxu0 0.0
  %4612 = vmatprep.subr.mxu0 0.0
  %4613 = vmatpush1.msra.mxu0 0.0
  %4614 = vmatprep.subr.mxu0 0.0
  %4615 = vmatpush1.msra.mxu0 0.0
  %4616 = vmatprep.subr.mxu0 0.0
  %4617 = vmatpush1.msra.mxu0 0.0
  %4618 = vmatprep.subr.mxu0 0.0
  %4619 = vmatpush1.msra.mxu0 0.0
  %4620 = vmatprep.subr.mxu0 0.0
  %4621 = vmatpush1.msra.mxu0 0.0
  %4622 = vmatprep.subr.mxu0 0.0
  %4623 = vmatpush1.msra.mxu0 0.0
  %4624 = vmatprep.subr.mxu0 0.0
  %4625 = vmatpush1.msra.mxu0 0.0
  %4626 = vmatprep.subr.mxu0 0.0
  %4627 = vmatpush1.msra.mxu0 0.0
  %4628 = vmatprep.subr.mxu0 0.0
  %4629 = vmatpush1.msra.mxu0 0.0
  %4630 = vmatprep.subr.mxu0 0.0
  %4631 = vmatpush1.msra.mxu0 0.0
  %4632 = vmatprep.subr.mxu0 0.0
  %4633 = vmatpush1.msra.mxu0 0.0
  %4634 = vmatprep.subr.mxu0 0.0
  %4635 = vmatpush1.msra.mxu0 0.0
  %4636 = vmatprep.subr.mxu0 0.0
  %4637 = vmatpush1.msra.mxu0 0.0
  %4638 = vmatprep.subr.mxu0 0.0
  %4639 = vmatpush1.msra.mxu0 0.0
  %4640 = vmatprep.subr.mxu0 0.0
  %4641 = vmatpush1.msra.mxu0 0.0
  %4642 = vmatprep.subr.mxu0 0.0
  %4643 = vmatpush1.msra.mxu0 0.0
  %4644 = vmatprep.subr.mxu0 0.0
  %4645 = vmatpush1.msra.mxu0 0.0
  %4646 = vmatprep.mubr.f32.mxu0 0.0
  %4647 = vmatmul.mubr.f32.gmra.mrb[0].mxu0 %v4571
  %v4648 = vpop.f32.mrb[0].mxu0
  %v4649 = vadd.f32 %v4569, %v4648
  %v4650 = vpop.f32.mrb[0].mxu0
  %4651 = vmatprep.mubr.f32.mxu0 0.0
  %4652 = vmatmul.mubr.f32.gmra.mrb[0].mxu0 %v4574
  %v4653 = vpop.f32.mrb[0].mxu0
  %v4654 = vadd.f32 %v4569, %v4653
  %v4655 = vpop.f32.mrb[0].mxu0
  %4656 = vmatprep.mubr.f32.mxu0 0.0
  %4657 = vmatmul.mubr.f32.gmra.mrb[0].mxu0 %v4577
  %v4658 = vpop.f32.mrb[0].mxu0
  %v4659 = vadd.f32 %v4569, %v4658
  %v4660 = vpop.f32.mrb[0].mxu0
  %4661 = vmatprep.mubr.f32.mxu0 0.0
  %4662 = vmatmul.mubr.f32.gmra.mrb[0].mxu0 %v4580
  %v4663 = vpop.f32.mrb[0].mxu0
  %v4664 = vadd.f32 %v4569, %v4663
  %v4665 = vpop.f32.mrb[0].mxu0
  %4666 = vdwg.mxu0
  %v4667 = vadd.f32 %v4457, %v4649
  %v4668 = vadd.f32 %v4458, %v4654
  %v4669 = vadd.f32 %v4459, %v4659
  %v4670 = vadd.f32 %v4460, %v4664
  %v4671 = vsel %vm54, %v4667, 0.0
  %4672 = vadd.xlane.f32.xlu0 %v4671
  %v4673 = vpop.xlane.xlu0 %4672
  %v4674 = vsel %vm54, %v4668, 0.0
  %4675 = vadd.xlane.f32.xlu0 %v4674
  %v4676 = vpop.xlane.xlu0 %4675
  %v4677 = vsel %vm54, %v4669, 0.0
  %4678 = vadd.xlane.f32.xlu0 %v4677
  %v4679 = vpop.xlane.xlu0 %4678
  %v4680 = vsel %vm54, %v4670, 0.0
  %4681 = vadd.xlane.f32.xlu0 %v4680
  %v4682 = vpop.xlane.xlu0 %4681
  %v4683 = vmul.f32 %v4673, %v2049
  %v4684 = vmul.f32 %v4676, %v2049
  %v4685 = vmul.f32 %v4679, %v2049
  %v4686 = vmul.f32 %v4682, %v2049
  %v4687 = vsub.f32 %v4667, %v4683
  %v4688 = vsub.f32 %v4668, %v4684
  %v4689 = vsub.f32 %v4669, %v4685
  %v4690 = vsub.f32 %v4670, %v4686
  %v4691 = vmul.f32 %v4687, %v4687
  %v4692 = vmul.f32 %v4688, %v4688
  %v4693 = vmul.f32 %v4689, %v4689
  %v4694 = vmul.f32 %v4690, %v4690
  %v4695 = vsel %vm54, %v4691, 0.0
  %4696 = vadd.xlane.f32.xlu0 %v4695
  %v4697 = vpop.xlane.xlu0 %4696
  %v4698 = vsel %vm54, %v4692, 0.0
  %4699 = vadd.xlane.f32.xlu0 %v4698
  %v4700 = vpop.xlane.xlu0 %4699
  %v4701 = vsel %vm54, %v4693, 0.0
  %4702 = vadd.xlane.f32.xlu0 %v4701
  %v4703 = vpop.xlane.xlu0 %4702
  %v4704 = vsel %vm54, %v4694, 0.0
  %4705 = vadd.xlane.f32.xlu0 %v4704
  %v4706 = vpop.xlane.xlu0 %4705
  %v4707 = vmul.f32 %v4697, %v2049
  %v4708 = vmul.f32 %v4700, %v2049
  %v4709 = vmul.f32 %v4703, %v2049
  %v4710 = vmul.f32 %v4706, %v2049
  %v4711 = vadd.f32 %v4707, 1e-05
  %v4712 = vadd.f32 %v4708, 1e-05
  %v4713 = vadd.f32 %v4709, 1e-05
  %v4714 = vadd.f32 %v4710, 1e-05
  %v4715 = vrsqrt.pop %v4711
  %v4716 = vrsqrt.pop %v4712
  %v4717 = vrsqrt.pop %v4713
  %v4718 = vrsqrt.pop %v4714
  %v4719 = vmul.f32 %v4687, %v4715
  %v4720 = vmul.f32 %v4688, %v4716
  %v4721 = vmul.f32 %v4689, %v4717
  %v4722 = vmul.f32 %v4690, %v4718
  %v4723 = vlaneseq
  %v4724 = vshrl.u32 %v4723, 7
  %v4725 = vsub.s32 7, %v4724
  %v4726 = vrot.slane %v2404, %v4725
  %v4727 = vmul.f32 %v4719, %v4726
  %v4728 = vmul.f32 %v4720, %v4726
  %v4729 = vmul.f32 %v4721, %v4726
  %v4730 = vmul.f32 %v4722, %v4726
  %v4731 = vlaneseq
  %v4732 = vshrl.u32 %v4731, 7
  %v4733 = vsub.s32 0, %v4732
  %v4734 = vrot.slane %v2405, %v4733
  %v4735 = vadd.f32 %v4727, %v4734
  %v4736 = vadd.f32 %v4728, %v4734
  %v4737 = vadd.f32 %v4729, %v4734
  %v4738 = vadd.f32 %v4730, %v4734
  %4739 = vst.msk [vmem:[%s5] sm:$0xff] %vm54, %v4735
  %4740 = vst.msk [vmem:[%s5 + $0x8] sm:$0xff] %vm54, %v4736
  %4741 = vst.msk [vmem:[%s5 + $0x10] sm:$0xff] %vm54, %v4737
  %4742 = vst.msk [vmem:[%s5 + $0x18] sm:$0xff] %vm54, %v4738
  // Predicated region
  $region22: #{transformer_encoder.1} parent=0 // pred_check
    _
  $region23: #{transformer_encoder.1} parent=0 // pred_check_branch
    %4744 = sbr.rel (0) target = $region25
  $region24: #{transformer_encoder.1} parent=0 // pred_region
    _
  $region25: #{transformer_encoder.1} parent=0 // pred_fallthru
    _
  // Predicated region
  $region26: #{transformer_encoder.1} parent=0 // pred_check
    _
  $region27: #{transformer_encoder.1} parent=0 // pred_check_branch
    %4746 = sbr.rel (0) target = $region29
  $region28: #{transformer_encoder.1} parent=0 // pred_region
    _
  $region29: #{transformer_encoder.1} parent=0 // pred_fallthru
    _

</llo_original>
